<compile_context>
chip_gen: v6e
topology: v6e:2x2x1
jax: 0.10.0
libtpu: 0.0.40
codegen_flags: <defaults>
</compile_context>

<pallas_src>
import jax
import jax.numpy as jnp
import numpy as np
from jax import lax
from jax.experimental import pallas as pl
from jax.experimental.pallas import tpu as pltpu

EPS = 1e-5          # nn.BatchNorm2d default
LANE = 128          # TPU lane width
_MIB = 1024 * 1024


def _round_up(x, m):
    return (x + m - 1) // m * m


def _pick_tile(dim_pad, pref):
    """Largest multiple of 128 that is <= pref and divides dim_pad (dim_pad % 128 == 0)."""
    t = max(LANE, (min(pref, dim_pad) // LANE) * LANE)
    while dim_pad % t:
        t -= LANE
    return t


def _ensure_two_parallel(m_pad, n_pad, tm, tn):
    """v7x shares 'parallel' grid axes across 2 TensorCores; keep the parallel
    extent >= 2 whenever the problem is big enough (no-op effect on v5e/v6e)."""
    if (m_pad // tm) * (n_pad // tn) >= 2:
        return tm, tn
    if m_pad >= 2 * LANE:
        return _pick_tile(m_pad, max(LANE, m_pad // 2)), tn
    if n_pad >= 2 * LANE:
        return tm, _pick_tile(n_pad, max(LANE, n_pad // 2))
    return tm, tn


def _compiler_params(dim_sem, est_vmem_bytes):
    # Explicit VMEM budget: 2x estimated double-buffered footprint, floor 16 MiB,
    # capped at 48 MiB so it stays under v7x's 64 MiB physical VMEM per TC.
    limit = int(min(48 * _MIB, max(16 * _MIB, 2 * est_vmem_bytes)))
    return pltpu.CompilerParams(dimension_semantics=dim_sem,
                                vmem_limit_bytes=limit)


# ----------------------------------------------------------------------------
# Tiled GEMM with fused per-channel sum / sum-of-squares (for batch-norm stats)
# ----------------------------------------------------------------------------
def _gemm_stats_kernel(a_ref, w_ref, o_ref, sum_ref, ssq_ref, acc_ref):
    k = pl.program_id(2)

    @pl.when(k == 0)
    def _init():
        acc_ref[...] = jnp.zeros_like(acc_ref)

    acc_ref[...] += jnp.dot(a_ref[...], w_ref[...],
                            preferred_element_type=jnp.float32)

    # Output + stats only once per (i, j) tile: the output block index is constant
    # across k, so intermediate stores never reached HBM anyway (review item 1).
    @pl.when(k == pl.num_programs(2) - 1)
    def _epilogue():
        acc = acc_ref[...]
        o_ref[...] = acc.astype(o_ref.dtype)
        s = jnp.sum(acc, axis=0, keepdims=True)          # (1, tn) f32
        ss = jnp.sum(acc * acc, axis=0, keepdims=True)   # (1, tn) f32
        sum_ref[...] = jnp.broadcast_to(s, sum_ref.shape)
        ssq_ref[...] = jnp.broadcast_to(ss, ssq_ref.shape)


def _gemm_fused(a, w, out_dtype=jnp.bfloat16,
                tm_pref=512, tn_pref=512, tk_pref=512):
    """out = a @ w (no bias), plus per-column sum / sum-of-squares of the product.

    a: (M, Ka) (ideally already bf16 and K-padded), w: (Kw, N) with Kw <= Ka_pad.
    Zero padding contributes 0 to both the product and the statistics.
    """
    m, ka = a.shape
    kw_, n = w.shape
    m_pad = _round_up(m, LANE)
    k_pad = _round_up(max(ka, kw_), LANE)
    n_pad = _round_up(n, LANE)

    tm = _pick_tile(m_pad, tm_pref)
    tn = _pick_tile(n_pad, tn_pref)
    tk = _pick_tile(k_pad, tk_pref)
    tm, tn = _ensure_two_parallel(m_pad, n_pad, tm, tn)
    gm, gn, gk = m_pad // tm, n_pad // tn, k_pad // tk

    a_p = a.astype(jnp.bfloat16)
    if a_p.shape != (m_pad, k_pad):            # no-op (elided) when pre-padded
        a_p = jnp.pad(a_p, ((0, m_pad - m), (0, k_pad - ka)))
    w_p = jnp.pad(w.astype(jnp.bfloat16), ((0, k_pad - kw_), (0, n_pad - n)))

    out_isz = jnp.dtype(out_dtype).itemsize
    est_vmem = (2 * tm * tk * 2 + 2 * tk * tn * 2 + 2 * tm * tn * out_isz
                + 4 * 8 * tn * 4 + tm * tn * 4)

    out, psum, pssq = pl.pallas_call(
        _gemm_stats_kernel,
        out_shape=[
            jax.ShapeDtypeStruct((m_pad, n_pad), out_dtype),
            jax.ShapeDtypeStruct((gm * 8, n_pad), jnp.float32),
            jax.ShapeDtypeStruct((gm * 8, n_pad), jnp.float32),
        ],
        grid_spec=pltpu.PrefetchScalarGridSpec(
            num_scalar_prefetch=0,
            grid=(gm, gn, gk),
            in_specs=[
                pl.BlockSpec((tm, tk), lambda i, j, k: (i, k)),
                pl.BlockSpec((tk, tn), lambda i, j, k: (k, j)),
            ],
            out_specs=[
                pl.BlockSpec((tm, tn), lambda i, j, k: (i, j)),
                pl.BlockSpec((8, tn), lambda i, j, k: (i, j)),
                pl.BlockSpec((8, tn), lambda i, j, k: (i, j)),
            ],
            scratch_shapes=[pltpu.VMEM((tm, tn), jnp.float32)],
        ),
        compiler_params=_compiler_params(("parallel", "parallel", "arbitrary"),
                                         est_vmem),
    )(a_p, w_p)

    # Per-(m-tile) partials were broadcast across 8 sublanes; reduce over tiles.
    chan_sum = psum.reshape(gm, 8, n_pad)[:, 0, :].sum(axis=0)
    chan_ssq = pssq.reshape(gm, 8, n_pad)[:, 0, :].sum(axis=0)
    return out, chan_sum, chan_ssq


# ----------------------------------------------------------------------------
# Fused BN-apply (+ residual add) + ReLU: y = relu(x*scale + shift [+ res])
# ----------------------------------------------------------------------------
def _scale_shift_relu_kernel(x_ref, s_ref, b_ref, o_ref):
    y = x_ref[...].astype(jnp.float32) * s_ref[...] + b_ref[...]
    o_ref[...] = jnp.maximum(y, 0.0).astype(o_ref.dtype)


def _scale_shift_add_relu_kernel(x_ref, s_ref, b_ref, r_ref, o_ref):
    y = (x_ref[...].astype(jnp.float32) * s_ref[...] + b_ref[...]
         + r_ref[...].astype(jnp.float32))
    o_ref[...] = jnp.maximum(y, 0.0).astype(o_ref.dtype)


def _scale_shift_relu(x, scale, shift, residual=None,
                      out_dtype=jnp.float32, tm_pref=1024):
    m_pad, n_pad = x.shape
    out_isz = jnp.dtype(out_dtype).itemsize
    res_isz = residual.dtype.itemsize if residual is not None else 0
    # Double-buffered bytes per row of tile; keep footprint ~<= 12 MiB so the tile
    # also fits v5e's 16 MiB scoped-VMEM default.
    bytes_per_row = 2 * n_pad * (x.dtype.itemsize + res_isz + out_isz)
    cap_rows = max(LANE, (12 * _MIB // max(bytes_per_row, 1)) // LANE * LANE)
    tm = _pick_tile(m_pad, min(tm_pref, cap_rows))
    if m_pad // tm < 2 and m_pad >= 2 * LANE:       # >=2 parallel tiles for v7x
        tm = _pick_tile(m_pad, max(LANE, m_pad // 2))

    row_spec = pl.BlockSpec((tm, n_pad), lambda i: (i, 0))
    vec_spec = pl.BlockSpec((1, n_pad), lambda i: (0, 0))
    if residual is None:
        kernel = _scale_shift_relu_kernel
        operands = (x, scale, shift)
        in_specs = [row_spec, vec_spec, vec_spec]
    else:
        kernel = _scale_shift_add_relu_kernel
        operands = (x, scale, shift, residual)
        in_specs = [row_spec, vec_spec, vec_spec, row_spec]

    est_vmem = tm * bytes_per_row + 4 * n_pad * 4
    return pl.pallas_call(
        kernel,
        out_shape=jax.ShapeDtypeStruct((m_pad, n_pad), out_dtype),
        grid_spec=pltpu.PrefetchScalarGridSpec(
            num_scalar_prefetch=0,
            grid=(m_pad // tm,),
            in_specs=in_specs,
            out_specs=row_spec,
        ),
        compiler_params=_compiler_params(("parallel",), est_vmem),
    )(*operands)


def _bn_scale_shift(chan_sum, chan_ssq, m_true, gamma, beta):
    """Training-mode (biased) batch-norm folded into y = x*scale + shift.

    Single-pass sum/sumsq variance in f32; zero-padded rows/channels contribute 0,
    so dividing by the true count keeps the statistics exact.
    """
    mean = chan_sum / jnp.float32(m_true)
    var = jnp.maximum(chan_ssq / jnp.float32(m_true) - mean * mean, 0.0)
    scale = gamma * lax.rsqrt(var + EPS)      # (1, C_pad)
    shift = beta - mean * scale               # (1, C_pad)
    return scale, shift


# ----------------------------------------------------------------------------
# Conv glue (im2col in plain JAX; the GEMM is the Pallas hot path)
# ----------------------------------------------------------------------------
def _im2col_3x3(x_nhwc, stride):
    """bf16 im2col with the K zero-tail fused into the same concat, so the output
    is already lane/K-padded and _gemm_fused does not make a second padded copy.

    TODO(synk): fold the 9 taps into the GEMM grid (tap axis + shifted/element
    index maps) to avoid materializing the 9x slab in HBM at all.
    """
    n, h, w, c = x_nhwc.shape
    oh = (h + 2 - 3) // stride + 1
    ow = (w + 2 - 3) // stride + 1
    xp = jnp.pad(x_nhwc, ((0, 0), (1, 1), (1, 1), (0, 0)))
    cols = []
    for kh in range(3):
        for kw in range(3):
            cols.append(xp[:, kh:kh + (oh - 1) * stride + 1:stride,
                            kw:kw + (ow - 1) * stride + 1:stride, :])
    k = 9 * c
    k_pad = _round_up(k, LANE)
    if k_pad > k:
        cols.append(jnp.zeros((n, oh, ow, k_pad - k), x_nhwc.dtype))
    a = jnp.concatenate(cols, axis=-1).reshape(n * oh * ow, k_pad)
    return a, (oh, ow)


# ----------------------------------------------------------------------------
# _block_residual forward (downsample is None by construction)
# ----------------------------------------------------------------------------
def block_residual_forward(x_nchw, params, stride=1):
    # Cast to bf16 ONCE (review item 3): all activation slabs downstream are bf16;
    # statistics / normalization math stays f32.
    x = jnp.transpose(x_nchw, (0, 2, 3, 1)).astype(jnp.bfloat16)      # NHWC bf16
    n, h, w, cin = x.shape
    cout = params["conv1_w"].shape[0]
    cpad = _round_up(cout, LANE)

    gamma = jnp.pad(params["bn_w"].astype(jnp.float32), (0, cpad - cout)).reshape(1, cpad)
    beta = jnp.pad(params["bn_b"].astype(jnp.float32), (0, cpad - cout)).reshape(1, cpad)

    # ---- out = relu(bn(conv1(x))) ------------------------------------------
    # conv1 bias omitted: a per-channel constant right before training-mode BN
    # cancels exactly (the batch mean shifts by the same constant).
    a1, (oh, ow) = _im2col_3x3(x, stride)
    w1 = jnp.transpose(params["conv1_w"], (2, 3, 1, 0)).reshape(9 * cin, cout)
    m1 = n * oh * ow
    y1, s1, ss1 = _gemm_fused(a1, w1, out_dtype=jnp.bfloat16)
    scale1, shift1 = _bn_scale_shift(s1, ss1, m1, gamma, beta)
    h1 = _scale_shift_relu(y1, scale1, shift1, out_dtype=jnp.bfloat16)

    # ---- out = bn(conv2(out))  (conv2 bias cancels the same way) ------------
    h1_nhwc = h1[:m1].reshape(n, oh, ow, cpad)                        # lane-dense bf16
    a2, _ = _im2col_3x3(h1_nhwc, 1)
    w2 = jnp.transpose(params["conv2_w"], (2, 3, 1, 0)).reshape(9, cout, cout)
    w2 = jnp.pad(w2, ((0, 0), (0, cpad - cout), (0, 0))).reshape(9 * cpad, cout)
    y2, s2, ss2 = _gemm_fused(a2, w2, out_dtype=jnp.bfloat16)
    scale2, shift2 = _bn_scale_shift(s2, ss2, m1, gamma, beta)

    # ---- residual path -------------------------------------------------------
    # mirrors `if out.shape[-1] != residual.shape[-1]` (width, in NCHW layout)
    if ow != w:
        # TODO(synk): fold the stride-2 subsample into the GEMM A BlockSpec
        # instead of materializing x[:, ::2, ::2, :].
        xs = x[:, ::2, ::2, :]
        a_r = xs.reshape(n * oh * ow, cin)
        w_r = params["conv1x1_w"].reshape(cout, cin).T
        res, _, _ = _gemm_fused(a_r, w_r, out_dtype=jnp.bfloat16)
        # The conv1x1 bias is added AFTER bn(conv2), so it does NOT cancel;
        # fold it into the fused shift (one FMA per element either way).
        b_r = jnp.pad(params["conv1x1_b"].astype(jnp.float32), (0, cpad - cout))
        shift2 = shift2 + b_r.reshape(1, cpad)
    else:
        assert cin == cout, "identity residual needs in_channels == out_channels"
        res = jnp.pad(x.reshape(n * h * w, cin),
                      ((0, y2.shape[0] - n * h * w), (0, cpad - cin)))

    # ---- out = relu(bn(conv2_out) + residual) --------------------------------
    # Final output kept f32 + NCHW to match the PyTorch module's interface.
    out2d = _scale_shift_relu(y2, scale2, shift2, residual=res,
                              out_dtype=jnp.float32)
    out = out2d[:m1, :cout].reshape(n, oh, ow, cout)
    return jnp.transpose(out, (0, 3, 1, 2))                           # NCHW


# ----------------------------------------------------------------------------
# Pure-JAX f32 reference (mirrors the PyTorch module, biases included)
# ----------------------------------------------------------------------------
def _bn_ref(x_nchw, g, b):
    mean = jnp.mean(x_nchw, axis=(0, 2, 3), keepdims=True)
    var = jnp.mean((x_nchw - mean) ** 2, axis=(0, 2, 3), keepdims=True)
    xn = (x_nchw - mean) * lax.rsqrt(var + EPS)
    return xn * g[None, :, None, None] + b[None, :, None, None]


def reference_forward(x, params, stride=1):
    dn = ("NCHW", "OIHW", "NCHW")
    out = lax.conv_general_dilated(x, params["conv1_w"], (stride, stride),
                                   [(1, 1), (1, 1)], dimension_numbers=dn)
    out = out + params["conv1_b"][None, :, None, None]
    out = jnp.maximum(_bn_ref(out, params["bn_w"], params["bn_b"]), 0.0)
    out = lax.conv_general_dilated(out, params["conv2_w"], (1, 1),
                                   [(1, 1), (1, 1)], dimension_numbers=dn)
    out = out + params["conv2_b"][None, :, None, None]
    out = _bn_ref(out, params["bn_w"], params["bn_b"])
    residual = x
    if out.shape[-1] != residual.shape[-1]:
        residual = lax.conv_general_dilated(x, params["conv1x1_w"], (2, 2),
                                            [(0, 0), (0, 0)], dimension_numbers=dn)
        residual = residual + params["conv1x1_b"][None, :, None, None]
    return jnp.maximum(out + residual, 0.0)


# ----------------------------------------------------------------------------
# Deterministic parameter init (shapes from _block_residual.__init__)
# ----------------------------------------------------------------------------
def make_params(key, in_channels, out_channels):
    ks = jax.random.split(key, 8)
    f = lambda k, shape, s=0.1: (s * jax.random.normal(k, shape)).astype(jnp.float32)
    return {
        "conv1_w": f(ks[0], (out_channels, in_channels, 3, 3)),
        "conv1_b": f(ks[1], (out_channels,)),
        "conv2_w": f(ks[2], (out_channels, out_channels, 3, 3)),
        "conv2_b": f(ks[3], (out_channels,)),
        "conv1x1_w": f(ks[4], (out_channels, in_channels, 1, 1)),
        "conv1x1_b": f(ks[5], (out_channels,)),
        "bn_w": 1.0 + f(ks[6], (out_channels,)),
        "bn_b": f(ks[7], (out_channels,)),
    }


if __name__ == "__main__":
    key = jax.random.PRNGKey(0)
    kx, kp1, kp2 = jax.random.split(key, 3)
    x = jax.random.normal(kx, (2, 4, 16, 16), dtype=jnp.float32)

    fwd = jax.jit(block_residual_forward, static_argnames=("stride",))

    # Tolerances are looser than an all-f32 run because the Pallas path uses
    # bf16 MXU operands and bf16 intermediate slabs (typical max abs err ~2e-2
    # vs. the all-f32 reference); statistics/normalization math stays f32.
    RTOL, ATOL = 5e-2, 7.5e-2

    # Case A: stride=1, same channels -> identity residual path.
    params_a = make_params(kp1, in_channels=4, out_channels=4)
    out_a = jax.block_until_ready(fwd(x, params_a, stride=1))
    ref_a = reference_forward(x, params_a, stride=1)
    np.testing.assert_allclose(np.asarray(out_a), np.asarray(ref_a),
                               rtol=RTOL, atol=ATOL)

    # Case B: stride=2, channel expansion -> conv1x1 residual path.
    params_b = make_params(kp2, in_channels=4, out_channels=8)
    out_b = jax.block_until_ready(fwd(x, params_b, stride=2))
    ref_b = reference_forward(x, params_b, stride=2)
    np.testing.assert_allclose(np.asarray(out_b), np.asarray(ref_b),
                               rtol=RTOL, atol=ATOL)

    # TODO(synk): the optional `downsample` submodule is None by construction
    # (no module provided), so that branch is intentionally not implemented.
    print("KERNEL_OK")
</pallas_src>

<mosaic_0001>
module attributes {stable_mosaic.version = 11 : i64} {
  func.func @_gemm_stats_kernel(%arg0: i32, %arg1: i32, %arg2: i32, %arg3: memref<256x128xbf16, #tpu.memory_space<vmem>>, %arg4: memref<128x128xbf16, #tpu.memory_space<vmem>>, %arg5: memref<256x128xbf16, #tpu.memory_space<vmem>>, %arg6: memref<8x128xf32, #tpu.memory_space<vmem>>, %arg7: memref<8x128xf32, #tpu.memory_space<vmem>>, %arg8: memref<256x128xf32, #tpu.memory_space<vmem>>) attributes {dimension_semantics = [#tpu.dimension_semantics<parallel>, #tpu.dimension_semantics<parallel>, #tpu.dimension_semantics<arbitrary>], iteration_bounds = array<i64: 2, 1, 1>, scalar_prefetch = 0 : i64, scratch_operands = 1 : i64, tpu.core_type = #tpu.core_type<tc>, window_params = [{transform_indices = @transform_0, window_bounds = array<i64: 256, 128>}, {transform_indices = @transform_1, window_bounds = array<i64: 128, 128>}, {transform_indices = @transform_2, window_bounds = array<i64: 256, 128>}, {transform_indices = @transform_3, window_bounds = array<i64: 8, 128>}, {transform_indices = @transform_4, window_bounds = array<i64: 8, 128>}]} {
    %c0_i32 = arith.constant 0 : i32
    %0 = arith.cmpi eq, %arg2, %c0_i32 : i32
    %1 = arith.extui %0 : i1 to i32
    %c0_i32_0 = arith.constant 0 : i32
    %2 = arith.cmpi ne, %1, %c0_i32_0 : i32
    scf.if %2 {
      %cst_10 = arith.constant 0.000000e+00 : f32
      %12 = vector.broadcast %cst_10 : f32 to vector<256x128xf32>
      %c0_11 = arith.constant 0 : index
      %c0_12 = arith.constant 0 : index
      %13 = vector.load %arg8[%c0_11, %c0_12] : memref<256x128xf32, #tpu.memory_space<vmem>>, vector<256x128xf32>
      tpu.vector_store %arg8[%c0_11, %c0_12], %12 {strides = array<i32>} : memref<256x128xf32, #tpu.memory_space<vmem>>, vector<256x128xf32>,
    } else {
    }
    %c0 = arith.constant 0 : index
    %c0_1 = arith.constant 0 : index
    %3 = vector.load %arg8[%c0, %c0_1] : memref<256x128xf32, #tpu.memory_space<vmem>>, vector<256x128xf32>
    %c0_2 = arith.constant 0 : index
    %c0_3 = arith.constant 0 : index
    %4 = vector.load %arg3[%c0_2, %c0_3] : memref<256x128xbf16, #tpu.memory_space<vmem>>, vector<256x128xbf16>
    %c0_4 = arith.constant 0 : index
    %c0_5 = arith.constant 0 : index
    %5 = vector.load %arg4[%c0_4, %c0_5] : memref<128x128xbf16, #tpu.memory_space<vmem>>, vector<128x128xbf16>
    %cst = arith.constant dense<0.000000e+00> : vector<256x128xf32>
    %6 = tpu.matmul %4, %5, %cst {dimension_numbers = #tpu.dot_dimension_numbers<[1], [0], [0], [1], [0, 0, 1, 1], [], []>} : vector<256x128xbf16>, vector<128x128xbf16>, vector<256x128xf32> -> vector<256x128xf32>
    %7 = arith.addf %3, %6 : vector<256x128xf32>
    %c0_6 = arith.constant 0 : index
    %c0_7 = arith.constant 0 : index
    %8 = vector.load %arg8[%c0_6, %c0_7] : memref<256x128xf32, #tpu.memory_space<vmem>>, vector<256x128xf32>
    tpu.vector_store %arg8[%c0_6, %c0_7], %7 {strides = array<i32>} : memref<256x128xf32, #tpu.memory_space<vmem>>, vector<256x128xf32>,
    %c0_i32_8 = arith.constant 0 : i32
    %9 = arith.cmpi eq, %arg2, %c0_i32_8 : i32
    %10 = arith.extui %9 : i1 to i32
    %c0_i32_9 = arith.constant 0 : i32
    %11 = arith.cmpi ne, %10, %c0_i32_9 : i32
    scf.if %11 {
      %c0_10 = arith.constant 0 : index
      %c0_11 = arith.constant 0 : index
      %12 = vector.load %arg8[%c0_10, %c0_11] : memref<256x128xf32, #tpu.memory_space<vmem>>, vector<256x128xf32>
      %13 = arith.truncf %12 : vector<256x128xf32> to vector<256x128xbf16>
      %c0_12 = arith.constant 0 : index
      %c0_13 = arith.constant 0 : index
      %14 = vector.load %arg5[%c0_12, %c0_13] : memref<256x128xbf16, #tpu.memory_space<vmem>>, vector<256x128xbf16>
      tpu.vector_store %arg5[%c0_12, %c0_13], %13 {strides = array<i32>} : memref<256x128xbf16, #tpu.memory_space<vmem>>, vector<256x128xbf16>,
      %cst_14 = arith.constant dense<0.000000e+00> : vector<128xf32>
      %15 = vector.multi_reduction <add>, %12, %cst_14 [0] : vector<256x128xf32> to vector<128xf32>
      %16 = vector.shape_cast %15 : vector<128xf32> to vector<1x128xf32>
      %17 = arith.mulf %12, %12 : vector<256x128xf32>
      %cst_15 = arith.constant dense<0.000000e+00> : vector<128xf32>
      %18 = vector.multi_reduction <add>, %17, %cst_15 [0] : vector<256x128xf32> to vector<128xf32>
      %19 = vector.shape_cast %18 : vector<128xf32> to vector<1x128xf32>
      %20 = vector.shape_cast %16 : vector<1x128xf32> to vector<1x128xf32>
      %21 = vector.broadcast %20 : vector<1x128xf32> to vector<8x128xf32>
      %c0_16 = arith.constant 0 : index
      %c0_17 = arith.constant 0 : index
      %22 = vector.load %arg6[%c0_16, %c0_17] : memref<8x128xf32, #tpu.memory_space<vmem>>, vector<8x128xf32>
      tpu.vector_store %arg6[%c0_16, %c0_17], %21 {strides = array<i32>} : memref<8x128xf32, #tpu.memory_space<vmem>>, vector<8x128xf32>,
      %23 = vector.shape_cast %19 : vector<1x128xf32> to vector<1x128xf32>
      %24 = vector.broadcast %23 : vector<1x128xf32> to vector<8x128xf32>
      %c0_18 = arith.constant 0 : index
      %c0_19 = arith.constant 0 : index
      %25 = vector.load %arg7[%c0_18, %c0_19] : memref<8x128xf32, #tpu.memory_space<vmem>>, vector<8x128xf32>
      tpu.vector_store %arg7[%c0_18, %c0_19], %24 {strides = array<i32>} : memref<8x128xf32, #tpu.memory_space<vmem>>, vector<8x128xf32>,
    } else {
    }
    return
  }
  func.func @transform_0(%arg0: i32, %arg1: i32, %arg2: i32) -> (i32, i32) {
    %c0_i32 = arith.constant 0 : i32
    return %arg0, %arg2 : i32, i32
  }
  func.func @transform_1(%arg0: i32, %arg1: i32, %arg2: i32) -> (i32, i32) {
    %c0_i32 = arith.constant 0 : i32
    return %arg2, %arg1 : i32, i32
  }
  func.func @transform_2(%arg0: i32, %arg1: i32, %arg2: i32) -> (i32, i32) {
    %c0_i32 = arith.constant 0 : i32
    return %arg0, %arg1 : i32, i32
  }
  func.func @transform_3(%arg0: i32, %arg1: i32, %arg2: i32) -> (i32, i32) {
    %c0_i32 = arith.constant 0 : i32
    return %arg0, %arg1 : i32, i32
  }
  func.func @transform_4(%arg0: i32, %arg1: i32, %arg2: i32) -> (i32, i32) {
    %c0_i32 = arith.constant 0 : i32
    return %arg0, %arg1 : i32, i32
  }
}

module attributes {stable_mosaic.version = 11 : i64} {
  func.func @_scale_shift_relu_kernel(%arg0: i32, %arg1: memref<256x128xbf16, #tpu.memory_space<vmem>>, %arg2: memref<1x128xf32, #tpu.memory_space<vmem>>, %arg3: memref<1x128xf32, #tpu.memory_space<vmem>>, %arg4: memref<256x128xbf16, #tpu.memory_space<vmem>>) attributes {dimension_semantics = [#tpu.dimension_semantics<parallel>], iteration_bounds = array<i64: 2>, scalar_prefetch = 0 : i64, scratch_operands = 0 : i64, tpu.core_type = #tpu.core_type<tc>, window_params = [{transform_indices = @transform_0, window_bounds = array<i64: 256, 128>}, {pipeline_mode = #tpu.pipeline_mode<synchronous>, transform_indices = @transform_1, window_bounds = array<i64: 1, 128>}, {pipeline_mode = #tpu.pipeline_mode<synchronous>, transform_indices = @transform_2, window_bounds = array<i64: 1, 128>}, {transform_indices = @transform_3, window_bounds = array<i64: 256, 128>}]} {
    %c0 = arith.constant 0 : index
    %c0_0 = arith.constant 0 : index
    %0 = vector.load %arg1[%c0, %c0_0] : memref<256x128xbf16, #tpu.memory_space<vmem>>, vector<256x128xbf16>
    %1 = arith.extf %0 : vector<256x128xbf16> to vector<256x128xf32>
    %c0_1 = arith.constant 0 : index
    %c0_2 = arith.constant 0 : index
    %2 = vector.load %arg2[%c0_1, %c0_2] : memref<1x128xf32, #tpu.memory_space<vmem>>, vector<1x128xf32>
    %3 = vector.broadcast %2 : vector<1x128xf32> to vector<256x128xf32>
    %4 = arith.mulf %1, %3 : vector<256x128xf32>
    %c0_3 = arith.constant 0 : index
    %c0_4 = arith.constant 0 : index
    %5 = vector.load %arg3[%c0_3, %c0_4] : memref<1x128xf32, #tpu.memory_space<vmem>>, vector<1x128xf32>
    %6 = vector.broadcast %5 : vector<1x128xf32> to vector<256x128xf32>
    %7 = arith.addf %4, %6 : vector<256x128xf32>
    %cst = arith.constant 0.000000e+00 : f32
    %8 = vector.broadcast %cst : f32 to vector<256x128xf32>
    %9 = arith.maximumf %7, %8 : vector<256x128xf32>
    %10 = arith.truncf %9 : vector<256x128xf32> to vector<256x128xbf16>
    %c0_5 = arith.constant 0 : index
    %c0_6 = arith.constant 0 : index
    %11 = vector.load %arg4[%c0_5, %c0_6] : memref<256x128xbf16, #tpu.memory_space<vmem>>, vector<256x128xbf16>
    tpu.vector_store %arg4[%c0_5, %c0_6], %10 {strides = array<i32>} : memref<256x128xbf16, #tpu.memory_space<vmem>>, vector<256x128xbf16>,
    return
  }
  func.func @transform_0(%arg0: i32) -> (i32, i32) {
    %c0_i32 = arith.constant 0 : i32
    %c0_i32_0 = arith.constant 0 : i32
    return %arg0, %c0_i32 : i32, i32
  }
  func.func @transform_1(%arg0: i32) -> (i32, i32) {
    %c0_i32 = arith.constant 0 : i32
    %c0_i32_0 = arith.constant 0 : i32
    %c0_i32_1 = arith.constant 0 : i32
    return %c0_i32, %c0_i32_0 : i32, i32
  }
  func.func @transform_2(%arg0: i32) -> (i32, i32) {
    %c0_i32 = arith.constant 0 : i32
    %c0_i32_0 = arith.constant 0 : i32
    %c0_i32_1 = arith.constant 0 : i32
    return %c0_i32, %c0_i32_0 : i32, i32
  }
  func.func @transform_3(%arg0: i32) -> (i32, i32) {
    %c0_i32 = arith.constant 0 : i32
    %c0_i32_0 = arith.constant 0 : i32
    return %arg0, %c0_i32 : i32, i32
  }
}

module attributes {stable_mosaic.version = 11 : i64} {
  func.func @_scale_shift_add_relu_kernel(%arg0: i32, %arg1: memref<256x128xbf16, #tpu.memory_space<vmem>>, %arg2: memref<1x128xf32, #tpu.memory_space<vmem>>, %arg3: memref<1x128xf32, #tpu.memory_space<vmem>>, %arg4: memref<256x128xbf16, #tpu.memory_space<vmem>>, %arg5: memref<256x128xf32, #tpu.memory_space<vmem>>) attributes {dimension_semantics = [#tpu.dimension_semantics<parallel>], iteration_bounds = array<i64: 2>, scalar_prefetch = 0 : i64, scratch_operands = 0 : i64, tpu.core_type = #tpu.core_type<tc>, window_params = [{transform_indices = @transform_0, window_bounds = array<i64: 256, 128>}, {pipeline_mode = #tpu.pipeline_mode<synchronous>, transform_indices = @transform_1, window_bounds = array<i64: 1, 128>}, {pipeline_mode = #tpu.pipeline_mode<synchronous>, transform_indices = @transform_2, window_bounds = array<i64: 1, 128>}, {transform_indices = @transform_3, window_bounds = array<i64: 256, 128>}, {transform_indices = @transform_4, window_bounds = array<i64: 256, 128>}]} {
    %c0 = arith.constant 0 : index
    %c0_0 = arith.constant 0 : index
    %0 = vector.load %arg1[%c0, %c0_0] : memref<256x128xbf16, #tpu.memory_space<vmem>>, vector<256x128xbf16>
    %1 = arith.extf %0 : vector<256x128xbf16> to vector<256x128xf32>
    %c0_1 = arith.constant 0 : index
    %c0_2 = arith.constant 0 : index
    %2 = vector.load %arg2[%c0_1, %c0_2] : memref<1x128xf32, #tpu.memory_space<vmem>>, vector<1x128xf32>
    %3 = vector.broadcast %2 : vector<1x128xf32> to vector<256x128xf32>
    %4 = arith.mulf %1, %3 : vector<256x128xf32>
    %c0_3 = arith.constant 0 : index
    %c0_4 = arith.constant 0 : index
    %5 = vector.load %arg3[%c0_3, %c0_4] : memref<1x128xf32, #tpu.memory_space<vmem>>, vector<1x128xf32>
    %6 = vector.broadcast %5 : vector<1x128xf32> to vector<256x128xf32>
    %7 = arith.addf %4, %6 : vector<256x128xf32>
    %c0_5 = arith.constant 0 : index
    %c0_6 = arith.constant 0 : index
    %8 = vector.load %arg4[%c0_5, %c0_6] : memref<256x128xbf16, #tpu.memory_space<vmem>>, vector<256x128xbf16>
    %9 = arith.extf %8 : vector<256x128xbf16> to vector<256x128xf32>
    %10 = arith.addf %7, %9 : vector<256x128xf32>
    %cst = arith.constant 0.000000e+00 : f32
    %11 = vector.broadcast %cst : f32 to vector<256x128xf32>
    %12 = arith.maximumf %10, %11 : vector<256x128xf32>
    %c0_7 = arith.constant 0 : index
    %c0_8 = arith.constant 0 : index
    %13 = vector.load %arg5[%c0_7, %c0_8] : memref<256x128xf32, #tpu.memory_space<vmem>>, vector<256x128xf32>
    tpu.vector_store %arg5[%c0_7, %c0_8], %12 {strides = array<i32>} : memref<256x128xf32, #tpu.memory_space<vmem>>, vector<256x128xf32>,
    return
  }
  func.func @transform_0(%arg0: i32) -> (i32, i32) {
    %c0_i32 = arith.constant 0 : i32
    %c0_i32_0 = arith.constant 0 : i32
    return %arg0, %c0_i32 : i32, i32
  }
  func.func @transform_1(%arg0: i32) -> (i32, i32) {
    %c0_i32 = arith.constant 0 : i32
    %c0_i32_0 = arith.constant 0 : i32
    %c0_i32_1 = arith.constant 0 : i32
    return %c0_i32, %c0_i32_0 : i32, i32
  }
  func.func @transform_2(%arg0: i32) -> (i32, i32) {
    %c0_i32 = arith.constant 0 : i32
    %c0_i32_0 = arith.constant 0 : i32
    %c0_i32_1 = arith.constant 0 : i32
    return %c0_i32, %c0_i32_0 : i32, i32
  }
  func.func @transform_3(%arg0: i32) -> (i32, i32) {
    %c0_i32 = arith.constant 0 : i32
    %c0_i32_0 = arith.constant 0 : i32
    return %arg0, %c0_i32 : i32, i32
  }
  func.func @transform_4(%arg0: i32) -> (i32, i32) {
    %c0_i32 = arith.constant 0 : i32
    %c0_i32_0 = arith.constant 0 : i32
    return %arg0, %c0_i32 : i32, i32
  }
}

module attributes {stable_mosaic.version = 11 : i64} {
  func.func @_gemm_stats_kernel(%arg0: i32, %arg1: i32, %arg2: i32, %arg3: memref<256x384xbf16, #tpu.memory_space<vmem>>, %arg4: memref<384x128xbf16, #tpu.memory_space<vmem>>, %arg5: memref<256x128xbf16, #tpu.memory_space<vmem>>, %arg6: memref<8x128xf32, #tpu.memory_space<vmem>>, %arg7: memref<8x128xf32, #tpu.memory_space<vmem>>, %arg8: memref<256x128xf32, #tpu.memory_space<vmem>>) attributes {dimension_semantics = [#tpu.dimension_semantics<parallel>, #tpu.dimension_semantics<parallel>, #tpu.dimension_semantics<arbitrary>], iteration_bounds = array<i64: 2, 1, 3>, scalar_prefetch = 0 : i64, scratch_operands = 1 : i64, tpu.core_type = #tpu.core_type<tc>, window_params = [{transform_indices = @transform_0, window_bounds = array<i64: 256, 384>}, {transform_indices = @transform_1, window_bounds = array<i64: 384, 128>}, {transform_indices = @transform_2, window_bounds = array<i64: 256, 128>}, {transform_indices = @transform_3, window_bounds = array<i64: 8, 128>}, {transform_indices = @transform_4, window_bounds = array<i64: 8, 128>}]} {
    %c0_i32 = arith.constant 0 : i32
    %0 = arith.cmpi eq, %arg2, %c0_i32 : i32
    %1 = arith.extui %0 : i1 to i32
    %c0_i32_0 = arith.constant 0 : i32
    %2 = arith.cmpi ne, %1, %c0_i32_0 : i32
    scf.if %2 {
      %cst_9 = arith.constant 0.000000e+00 : f32
      %12 = vector.broadcast %cst_9 : f32 to vector<256x128xf32>
      %c0_10 = arith.constant 0 : index
      %c0_11 = arith.constant 0 : index
      %13 = vector.load %arg8[%c0_10, %c0_11] : memref<256x128xf32, #tpu.memory_space<vmem>>, vector<256x128xf32>
      tpu.vector_store %arg8[%c0_10, %c0_11], %12 {strides = array<i32>} : memref<256x128xf32, #tpu.memory_space<vmem>>, vector<256x128xf32>,
    } else {
    }
    %c0 = arith.constant 0 : index
    %c0_1 = arith.constant 0 : index
    %3 = vector.load %arg8[%c0, %c0_1] : memref<256x128xf32, #tpu.memory_space<vmem>>, vector<256x128xf32>
    %c0_2 = arith.constant 0 : index
    %c0_3 = arith.constant 0 : index
    %4 = vector.load %arg3[%c0_2, %c0_3] : memref<256x384xbf16, #tpu.memory_space<vmem>>, vector<256x384xbf16>
    %c0_4 = arith.constant 0 : index
    %c0_5 = arith.constant 0 : index
    %5 = vector.load %arg4[%c0_4, %c0_5] : memref<384x128xbf16, #tpu.memory_space<vmem>>, vector<384x128xbf16>
    %cst = arith.constant dense<0.000000e+00> : vector<256x128xf32>
    %6 = tpu.matmul %4, %5, %cst {dimension_numbers = #tpu.dot_dimension_numbers<[1], [0], [0], [1], [0, 0, 1, 1], [], []>} : vector<256x384xbf16>, vector<384x128xbf16>, vector<256x128xf32> -> vector<256x128xf32>
    %7 = arith.addf %3, %6 : vector<256x128xf32>
    %c0_6 = arith.constant 0 : index
    %c0_7 = arith.constant 0 : index
    %8 = vector.load %arg8[%c0_6, %c0_7] : memref<256x128xf32, #tpu.memory_space<vmem>>, vector<256x128xf32>
    tpu.vector_store %arg8[%c0_6, %c0_7], %7 {strides = array<i32>} : memref<256x128xf32, #tpu.memory_space<vmem>>, vector<256x128xf32>,
    %c2_i32 = arith.constant 2 : i32
    %9 = arith.cmpi eq, %arg2, %c2_i32 : i32
    %10 = arith.extui %9 : i1 to i32
    %c0_i32_8 = arith.constant 0 : i32
    %11 = arith.cmpi ne, %10, %c0_i32_8 : i32
    scf.if %11 {
      %c0_9 = arith.constant 0 : index
      %c0_10 = arith.constant 0 : index
      %12 = vector.load %arg8[%c0_9, %c0_10] : memref<256x128xf32, #tpu.memory_space<vmem>>, vector<256x128xf32>
      %13 = arith.truncf %12 : vector<256x128xf32> to vector<256x128xbf16>
      %c0_11 = arith.constant 0 : index
      %c0_12 = arith.constant 0 : index
      %14 = vector.load %arg5[%c0_11, %c0_12] : memref<256x128xbf16, #tpu.memory_space<vmem>>, vector<256x128xbf16>
      tpu.vector_store %arg5[%c0_11, %c0_12], %13 {strides = array<i32>} : memref<256x128xbf16, #tpu.memory_space<vmem>>, vector<256x128xbf16>,
      %cst_13 = arith.constant dense<0.000000e+00> : vector<128xf32>
      %15 = vector.multi_reduction <add>, %12, %cst_13 [0] : vector<256x128xf32> to vector<128xf32>
      %16 = vector.shape_cast %15 : vector<128xf32> to vector<1x128xf32>
      %17 = arith.mulf %12, %12 : vector<256x128xf32>
      %cst_14 = arith.constant dense<0.000000e+00> : vector<128xf32>
      %18 = vector.multi_reduction <add>, %17, %cst_14 [0] : vector<256x128xf32> to vector<128xf32>
      %19 = vector.shape_cast %18 : vector<128xf32> to vector<1x128xf32>
      %20 = vector.shape_cast %16 : vector<1x128xf32> to vector<1x128xf32>
      %21 = vector.broadcast %20 : vector<1x128xf32> to vector<8x128xf32>
      %c0_15 = arith.constant 0 : index
      %c0_16 = arith.constant 0 : index
      %22 = vector.load %arg6[%c0_15, %c0_16] : memref<8x128xf32, #tpu.memory_space<vmem>>, vector<8x128xf32>
      tpu.vector_store %arg6[%c0_15, %c0_16], %21 {strides = array<i32>} : memref<8x128xf32, #tpu.memory_space<vmem>>, vector<8x128xf32>,
      %23 = vector.shape_cast %19 : vector<1x128xf32> to vector<1x128xf32>
      %24 = vector.broadcast %23 : vector<1x128xf32> to vector<8x128xf32>
      %c0_17 = arith.constant 0 : index
      %c0_18 = arith.constant 0 : index
      %25 = vector.load %arg7[%c0_17, %c0_18] : memref<8x128xf32, #tpu.memory_space<vmem>>, vector<8x128xf32>
      tpu.vector_store %arg7[%c0_17, %c0_18], %24 {strides = array<i32>} : memref<8x128xf32, #tpu.memory_space<vmem>>, vector<8x128xf32>,
    } else {
    }
    return
  }
  func.func @transform_0(%arg0: i32, %arg1: i32, %arg2: i32) -> (i32, i32) {
    %c0_i32 = arith.constant 0 : i32
    return %arg0, %arg2 : i32, i32
  }
  func.func @transform_1(%arg0: i32, %arg1: i32, %arg2: i32) -> (i32, i32) {
    %c0_i32 = arith.constant 0 : i32
    return %arg2, %arg1 : i32, i32
  }
  func.func @transform_2(%arg0: i32, %arg1: i32, %arg2: i32) -> (i32, i32) {
    %c0_i32 = arith.constant 0 : i32
    return %arg0, %arg1 : i32, i32
  }
  func.func @transform_3(%arg0: i32, %arg1: i32, %arg2: i32) -> (i32, i32) {
    %c0_i32 = arith.constant 0 : i32
    return %arg0, %arg1 : i32, i32
  }
  func.func @transform_4(%arg0: i32, %arg1: i32, %arg2: i32) -> (i32, i32) {
    %c0_i32 = arith.constant 0 : i32
    return %arg0, %arg1 : i32, i32
  }
}

</mosaic_0001>

<llo_original>
// kernel: block_residual_forward.5
$region0: #{block_residual_forward.5}
  #allocation0 [shape = 'u32[]', space=smem, size = 0x4, offset = 0x4, fixed_abs, tag = 'smem constant byte address 0x4 - core index']
  #allocation1 [shape = 'u32[144,128]{1,0:T(1,128)}', space=vmem, size = 0x12000, scoped, tag = 'internal scratch']
  %s0 = inlined_call_operand.vmem [shape: bf16[512,128], index: 0, kind: input, shape index: {}]
  %s1 = inlined_call_operand.vmem [shape: f32[1,128], index: 1, kind: input, shape index: {}]
  %s2 = inlined_call_operand.vmem [shape: f32[1,128], index: 2, kind: input, shape index: {}]
  %s3 = inlined_call_operand.vmem [shape: bf16[512,128], index: 3, kind: output, shape index: {}]
  %s4 = sld [smem:[#allocation0]]
  $region45: #{block_residual_forward.5} parent=0
    _
  %s6 = ssub.s32 1, %s4
  %s7 = scalar_select 0, %s6, %s4
  loop: start=0, step=1, limit=4
  $region2: #{block_residual_forward.5} parent=0 // loop_pre_header
    _
  $region3: #{block_residual_forward.5} parent=0 // loop_header
    %s9 = sphi 0, %s13
    %p10 = scmp.ge.s32.totalorder %s9, 4
    %s19 = sphi 0, %s21
    %s22 = sphi 0, %s19
    %s23 = sphi 0, %s22
    %s39 = sphi 0, %s23
    %s43 = sphi 0, %s43
    %s45 = sphi 0, %s43
    %s46 = sphi 0, %s45
    %s60 = sphi 0, %s46
    %s64 = sphi 0, %s64
    %s66 = sphi 0, %s64
    %s67 = sphi 0, %s66
    %s81 = sphi 0, %s67
    %s87 = sphi 0, %s89
    %s90 = sphi 0, %s87
    %s91 = sphi 0, %s90
    %s107 = sphi 0, %s91
  $region4: #{block_residual_forward.5} parent=0 // loop_header_branch
    %12 = sbr.rel (%p10) target = $region8
  $region5: #{block_residual_forward.5} parent=0 // loop_body
    %s14 = ssub.s32 %s9, 1
    %s15 = ssub.s32 %s9, 2
    %s16 = sadd.s32 %s9, 1
    %s17 = ssub.s32 %s9, %s16
    %p18 = scmp.eq.s32.totalorder %s17, 0
    %s20 = sadd.s32 %s19, 1
    %s21 = scalar_select %p18, %s19, %s20
    %p24 = pneg %p18
    %p25 = scmp.eq.s32.totalorder %s9, 1
    %p26 = por %p24, %p25
    %p27 = scmp.ne.s32.totalorder %s19, %s22
    %p28 = scmp.eq.s32.totalorder %s9, 0
    %p29 = por %p27, %p28
    %p30 = scmp.ne.s32.totalorder %s19, %s22
    %p31 = scmp.eq.s32.totalorder %s14, 1
    %p32 = por %p30, %p31
    %p33 = scmp.ne.s32.totalorder %s22, %s23
    %p34 = scmp.eq.s32.totalorder %s14, 0
    %p35 = por %p33, %p34
    %p36 = scmp.ne.s32.totalorder %s22, %s23
    %p37 = scmp.eq.s32.totalorder %s15, 1
    %p38 = por %p36, %p37
    %p40 = scmp.ne.s32.totalorder %s23, %s39
    %p41 = scmp.eq.s32.totalorder %s15, 0
    %p42 = por %p40, %p41
    %s44 = sadd.s32 %s43, 1
    %p47 = scmp.eq.s32.totalorder %s9, 1
    %p48 = scmp.ne.s32.totalorder %s43, %s45
    %p49 = scmp.eq.s32.totalorder %s9, 0
    %p50 = por %p48, %p49
    %p51 = scmp.ne.s32.totalorder %s43, %s45
    %p52 = scmp.eq.s32.totalorder %s14, 1
    %p53 = por %p51, %p52
    %p54 = scmp.ne.s32.totalorder %s45, %s46
    %p55 = scmp.eq.s32.totalorder %s14, 0
    %p56 = por %p54, %p55
    %p57 = scmp.ne.s32.totalorder %s45, %s46
    %p58 = scmp.eq.s32.totalorder %s15, 1
    %p59 = por %p57, %p58
    %p61 = scmp.ne.s32.totalorder %s46, %s60
    %p62 = scmp.eq.s32.totalorder %s15, 0
    %p63 = por %p61, %p62
    %s65 = sadd.s32 %s64, 1
    %p68 = scmp.eq.s32.totalorder %s9, 1
    %p69 = scmp.ne.s32.totalorder %s64, %s66
    %p70 = scmp.eq.s32.totalorder %s9, 0
    %p71 = por %p69, %p70
    %p72 = scmp.ne.s32.totalorder %s64, %s66
    %p73 = scmp.eq.s32.totalorder %s14, 1
    %p74 = por %p72, %p73
    %p75 = scmp.ne.s32.totalorder %s66, %s67
    %p76 = scmp.eq.s32.totalorder %s14, 0
    %p77 = por %p75, %p76
    %p78 = scmp.ne.s32.totalorder %s66, %s67
    %p79 = scmp.eq.s32.totalorder %s15, 1
    %p80 = por %p78, %p79
    %p82 = scmp.ne.s32.totalorder %s67, %s81
    %p83 = scmp.eq.s32.totalorder %s15, 0
    %p84 = por %p82, %p83
    %s85 = ssub.s32 %s9, %s16
    %p86 = scmp.eq.s32.totalorder %s85, 0
    %s88 = sadd.s32 %s87, 1
    %s89 = scalar_select %p86, %s87, %s88
    %p92 = pneg %p86
    %p93 = scmp.eq.s32.totalorder %s9, 1
    %p94 = por %p92, %p93
    %p95 = scmp.ne.s32.totalorder %s87, %s90
    %p96 = scmp.eq.s32.totalorder %s9, 0
    %p97 = por %p95, %p96
    %p98 = scmp.ne.s32.totalorder %s87, %s90
    %p99 = scmp.eq.s32.totalorder %s14, 1
    %p100 = por %p98, %p99
    %p101 = scmp.ne.s32.totalorder %s90, %s91
    %p102 = scmp.eq.s32.totalorder %s14, 0
    %p103 = por %p101, %p102
    %p104 = scmp.ne.s32.totalorder %s90, %s91
    %p105 = scmp.eq.s32.totalorder %s15, 1
    %p106 = por %p104, %p105
    %p108 = scmp.ne.s32.totalorder %s91, %s107
    %p109 = scmp.eq.s32.totalorder %s15, 0
    %p110 = por %p108, %p109
    %p111 = scmp.le.s32.totalorder 1, %s9
    %p112 = scmp.lt.s32.totalorder %s9, 3
    %p113 = pnand %p111, %p112
    %p114 = pneg %p113
    // Predicated region
    $region9: #{block_residual_forward.5} parent=5 // pred_check
      _
    $region10: #{block_residual_forward.5} parent=5 // pred_check_branch
      %116 = sbr.rel (%p113) target = $region12
    $region11: #{block_residual_forward.5} parent=5 // pred_region
      %s117 = ssub.s32 %s9, 1
      // Predicated region
      $region13: #{block_residual_forward.5} parent=11 // pred_check
        %p118 = pneg %p56
      $region14: #{block_residual_forward.5} parent=11 // pred_check_branch
        %120 = sbr.rel (%p118) target = $region16
      $region15: #{block_residual_forward.5} parent=11 // pred_region
        _
      $region16: #{block_residual_forward.5} parent=11 // pred_fallthru
        _
      // Predicated region
      $region17: #{block_residual_forward.5} parent=11 // pred_check
        %p121 = pneg %p77
      $region18: #{block_residual_forward.5} parent=11 // pred_check_branch
        %123 = sbr.rel (%p121) target = $region20
      $region19: #{block_residual_forward.5} parent=11 // pred_region
        _
      $region20: #{block_residual_forward.5} parent=11 // pred_fallthru
        _
    $region12: #{block_residual_forward.5} parent=5 // pred_fallthru
      _
    %p124 = scmp.lt.s32.totalorder %s9, 2
    // Predicated region
    $region21: #{block_residual_forward.5} parent=5 // pred_check
      %p125 = pneg %p124
    $region22: #{block_residual_forward.5} parent=5 // pred_check_branch
      %127 = sbr.rel (%p125) target = $region24
    $region23: #{block_residual_forward.5} parent=5 // pred_region
      // Predicated region
      $region25: #{block_residual_forward.5} parent=23 // pred_check
        %p128 = pneg %p29
      $region26: #{block_residual_forward.5} parent=23 // pred_check_branch
        %130 = sbr.rel (%p128) target = $region28
      $region27: #{block_residual_forward.5} parent=23 // pred_region
        %s131 = smul.u32 32, %s9
        %p132 = scmp.lt.s32.totalorder %s131, 63
        %s133 = scalar_select %p132, %s131, 63
        %s134 = smul.addr %s133, 4
        %s135 = scalar_lea.vmem %s0, %s134
        %s136 = smul.u32 32, %s9
      $region28: #{block_residual_forward.5} parent=23 // pred_fallthru
        _
    $region24: #{block_residual_forward.5} parent=5 // pred_fallthru
      _
    %p137 = scmp.le.s32.totalorder 1, %s9
    %p138 = scmp.lt.s32.totalorder %s9, 3
    %p139 = pnand %p137, %p138
    %p140 = pneg %p139
    // Predicated region
    $region29: #{block_residual_forward.5} parent=5 // pred_check
      _
    $region30: #{block_residual_forward.5} parent=5 // pred_check_branch
      %142 = sbr.rel (%p139) target = $region32
    $region31: #{block_residual_forward.5} parent=5 // pred_region
      %s143 = ssub.s32 %s9, 1
      %s144 = smul.u32 32, %s14
      %p145 = scmp.lt.s32.totalorder %s144, 63
      %s146 = scalar_select %p145, %s144, 63
      %s147 = smul.addr %s146, 4
      %s148 = scalar_lea.vmem %s0, %s147
      %p149 = pneg %p35
      %p150 = pneg %p32
      %p151 = pneg %p56
      %p152 = pneg %p53
      %p153 = pneg %p77
      %p154 = pneg %p74
      %p155 = pneg %p103
      %p156 = pneg %p100
      %s157 = smul.u32 32, %s14
      %p158 = scmp.lt.s32.totalorder %s157, 63
      %s159 = scalar_select %p158, %s157, 63
      %s160 = smul.addr %s159, 4
      %s161 = scalar_lea.vmem %s3, %s160
      %s162 = smul.u32 32, %s14
      %p163 = scmp.lt.s32.totalorder %s162, 63
      %s164 = scalar_select %p163, %s162, 63
      %s165 = smul.addr %s164, 4
      %s166 = scalar_lea.vmem %s0, %s165
      %s167 = smul.u32 32, %s14
      %s168 = smul.u32 32, %s14
      %p169 = scmp.lt.s32.totalorder %s168, 63
      %s170 = scalar_select %p169, %s168, 63
      %s171 = smul.addr %s170, 4
      %s172 = scalar_lea.vmem %s3, %s171
      %s173 = smul.u32 32, %s14
      %v174 = vld [vmem:[%s166] sm:$0xf]
      %v175 = vld [vmem:[%s166 + $0x4] sm:$0xf]
      %v176 = vld [vmem:[%s166 + $0x8] sm:$0xf]
      %v177 = vld [vmem:[%s166 + $0xc] sm:$0xf]
      %v178 = vld [vmem:[%s166 + $0x10] sm:$0xf]
      %v179 = vld [vmem:[%s166 + $0x14] sm:$0xf]
      %v180 = vld [vmem:[%s166 + $0x18] sm:$0xf]
      %v181 = vld [vmem:[%s166 + $0x1c] sm:$0xf]
      %v182 = vld [vmem:[%s166 + $0x20] sm:$0xf]
      %v183 = vld [vmem:[%s166 + $0x24] sm:$0xf]
      %v184 = vld [vmem:[%s166 + $0x28] sm:$0xf]
      %v185 = vld [vmem:[%s166 + $0x2c] sm:$0xf]
      %v186 = vld [vmem:[%s166 + $0x30] sm:$0xf]
      %v187 = vld [vmem:[%s166 + $0x34] sm:$0xf]
      %v188 = vld [vmem:[%s166 + $0x38] sm:$0xf]
      %v189 = vld [vmem:[%s166 + $0x3c] sm:$0xf]
      %v190 = vld [vmem:[%s166 + $0x40] sm:$0xf]
      %v191 = vld [vmem:[%s166 + $0x44] sm:$0xf]
      %v192 = vld [vmem:[%s166 + $0x48] sm:$0xf]
      %v193 = vld [vmem:[%s166 + $0x4c] sm:$0xf]
      %v194 = vld [vmem:[%s166 + $0x50] sm:$0xf]
      %v195 = vld [vmem:[%s166 + $0x54] sm:$0xf]
      %v196 = vld [vmem:[%s166 + $0x58] sm:$0xf]
      %v197 = vld [vmem:[%s166 + $0x5c] sm:$0xf]
      %v198 = vld [vmem:[%s166 + $0x60] sm:$0xf]
      %v199 = vld [vmem:[%s166 + $0x64] sm:$0xf]
      %v200 = vld [vmem:[%s166 + $0x68] sm:$0xf]
      %v201 = vld [vmem:[%s166 + $0x6c] sm:$0xf]
      %v202 = vld [vmem:[%s166 + $0x70] sm:$0xf]
      %v203 = vld [vmem:[%s166 + $0x74] sm:$0xf]
      %v204 = vld [vmem:[%s166 + $0x78] sm:$0xf]
      %v205 = vld [vmem:[%s166 + $0x7c] sm:$0xf]
      %v206 = vunpack.c.l.bf16 %v174
      %v207 = vunpack.c.l.bf16 %v175
      %v208 = vunpack.c.l.bf16 %v176
      %v209 = vunpack.c.l.bf16 %v177
      %v210 = vunpack.c.l.bf16 %v178
      %v211 = vunpack.c.l.bf16 %v179
      %v212 = vunpack.c.l.bf16 %v180
      %v213 = vunpack.c.l.bf16 %v181
      %v214 = vunpack.c.l.bf16 %v182
      %v215 = vunpack.c.l.bf16 %v183
      %v216 = vunpack.c.l.bf16 %v184
      %v217 = vunpack.c.l.bf16 %v185
      %v218 = vunpack.c.l.bf16 %v186
      %v219 = vunpack.c.l.bf16 %v187
      %v220 = vunpack.c.l.bf16 %v188
      %v221 = vunpack.c.l.bf16 %v189
      %v222 = vunpack.c.l.bf16 %v190
      %v223 = vunpack.c.l.bf16 %v191
      %v224 = vunpack.c.l.bf16 %v192
      %v225 = vunpack.c.l.bf16 %v193
      %v226 = vunpack.c.l.bf16 %v194
      %v227 = vunpack.c.l.bf16 %v195
      %v228 = vunpack.c.l.bf16 %v196
      %v229 = vunpack.c.l.bf16 %v197
      %v230 = vunpack.c.l.bf16 %v198
      %v231 = vunpack.c.l.bf16 %v199
      %v232 = vunpack.c.l.bf16 %v200
      %v233 = vunpack.c.l.bf16 %v201
      %v234 = vunpack.c.l.bf16 %v202
      %v235 = vunpack.c.l.bf16 %v203
      %v236 = vunpack.c.l.bf16 %v204
      %v237 = vunpack.c.l.bf16 %v205
      %v238 = vld [vmem:[%s1] sm:$0x1]
      %v240 = vlaneseq
      %v241 = vshrl.u32 %v240, 7
      %v242 = vsub.s32 0, %v241
      %v243 = vrot.slane %v238, %v242
      %v245 = vmul.f32 %v206, %v243
      %v246 = vmul.f32 %v207, %v243
      %v247 = vmul.f32 %v208, %v243
      %v248 = vmul.f32 %v209, %v243
      %v249 = vmul.f32 %v210, %v243
      %v250 = vmul.f32 %v211, %v243
      %v251 = vmul.f32 %v212, %v243
      %v252 = vmul.f32 %v213, %v243
      %v253 = vmul.f32 %v214, %v243
      %v254 = vmul.f32 %v215, %v243
      %v255 = vmul.f32 %v216, %v243
      %v256 = vmul.f32 %v217, %v243
      %v257 = vmul.f32 %v218, %v243
      %v258 = vmul.f32 %v219, %v243
      %v259 = vmul.f32 %v220, %v243
      %v260 = vmul.f32 %v221, %v243
      %v261 = vmul.f32 %v222, %v243
      %v262 = vmul.f32 %v223, %v243
      %v263 = vmul.f32 %v224, %v243
      %v264 = vmul.f32 %v225, %v243
      %v265 = vmul.f32 %v226, %v243
      %v266 = vmul.f32 %v227, %v243
      %v267 = vmul.f32 %v228, %v243
      %v268 = vmul.f32 %v229, %v243
      %v269 = vmul.f32 %v230, %v243
      %v270 = vmul.f32 %v231, %v243
      %v271 = vmul.f32 %v232, %v243
      %v272 = vmul.f32 %v233, %v243
      %v273 = vmul.f32 %v234, %v243
      %v274 = vmul.f32 %v235, %v243
      %v275 = vmul.f32 %v236, %v243
      %v276 = vmul.f32 %v237, %v243
      %v277 = vld [vmem:[%s2] sm:$0x1]
      %v279 = vlaneseq
      %v280 = vshrl.u32 %v279, 7
      %v281 = vsub.s32 0, %v280
      %v282 = vrot.slane %v277, %v281
      %v284 = vadd.f32 %v245, %v282
      %v285 = vadd.f32 %v246, %v282
      %v286 = vadd.f32 %v247, %v282
      %v287 = vadd.f32 %v248, %v282
      %v288 = vadd.f32 %v249, %v282
      %v289 = vadd.f32 %v250, %v282
      %v290 = vadd.f32 %v251, %v282
      %v291 = vadd.f32 %v252, %v282
      %v292 = vadd.f32 %v253, %v282
      %v293 = vadd.f32 %v254, %v282
      %v294 = vadd.f32 %v255, %v282
      %v295 = vadd.f32 %v256, %v282
      %v296 = vadd.f32 %v257, %v282
      %v297 = vadd.f32 %v258, %v282
      %v298 = vadd.f32 %v259, %v282
      %v299 = vadd.f32 %v260, %v282
      %v300 = vadd.f32 %v261, %v282
      %v301 = vadd.f32 %v262, %v282
      %v302 = vadd.f32 %v263, %v282
      %v303 = vadd.f32 %v264, %v282
      %v304 = vadd.f32 %v265, %v282
      %v305 = vadd.f32 %v266, %v282
      %v306 = vadd.f32 %v267, %v282
      %v307 = vadd.f32 %v268, %v282
      %v308 = vadd.f32 %v269, %v282
      %v309 = vadd.f32 %v270, %v282
      %v310 = vadd.f32 %v271, %v282
      %v311 = vadd.f32 %v272, %v282
      %v312 = vadd.f32 %v273, %v282
      %v313 = vadd.f32 %v274, %v282
      %v314 = vadd.f32 %v275, %v282
      %v315 = vadd.f32 %v276, %v282
      %v316 = vmax.f32 %v284, 0.0
      %v317 = vmax.f32 %v285, 0.0
      %v318 = vmax.f32 %v286, 0.0
      %v319 = vmax.f32 %v287, 0.0
      %v320 = vmax.f32 %v288, 0.0
      %v321 = vmax.f32 %v289, 0.0
      %v322 = vmax.f32 %v290, 0.0
      %v323 = vmax.f32 %v291, 0.0
      %v324 = vmax.f32 %v292, 0.0
      %v325 = vmax.f32 %v293, 0.0
      %v326 = vmax.f32 %v294, 0.0
      %v327 = vmax.f32 %v295, 0.0
      %v328 = vmax.f32 %v296, 0.0
      %v329 = vmax.f32 %v297, 0.0
      %v330 = vmax.f32 %v298, 0.0
      %v331 = vmax.f32 %v299, 0.0
      %v332 = vmax.f32 %v300, 0.0
      %v333 = vmax.f32 %v301, 0.0
      %v334 = vmax.f32 %v302, 0.0
      %v335 = vmax.f32 %v303, 0.0
      %v336 = vmax.f32 %v304, 0.0
      %v337 = vmax.f32 %v305, 0.0
      %v338 = vmax.f32 %v306, 0.0
      %v339 = vmax.f32 %v307, 0.0
      %v340 = vmax.f32 %v308, 0.0
      %v341 = vmax.f32 %v309, 0.0
      %v342 = vmax.f32 %v310, 0.0
      %v343 = vmax.f32 %v311, 0.0
      %v344 = vmax.f32 %v312, 0.0
      %v345 = vmax.f32 %v313, 0.0
      %v346 = vmax.f32 %v314, 0.0
      %v347 = vmax.f32 %v315, 0.0
      %v348 = vpack.c.bf16 %v317, %v316
      %v349 = vpack.c.bf16 %v319, %v318
      %v350 = vpack.c.bf16 %v321, %v320
      %v351 = vpack.c.bf16 %v323, %v322
      %v352 = vpack.c.bf16 %v325, %v324
      %v353 = vpack.c.bf16 %v327, %v326
      %v354 = vpack.c.bf16 %v329, %v328
      %v355 = vpack.c.bf16 %v331, %v330
      %v356 = vpack.c.bf16 %v333, %v332
      %v357 = vpack.c.bf16 %v335, %v334
      %v358 = vpack.c.bf16 %v337, %v336
      %v359 = vpack.c.bf16 %v339, %v338
      %v360 = vpack.c.bf16 %v341, %v340
      %v361 = vpack.c.bf16 %v343, %v342
      %v362 = vpack.c.bf16 %v345, %v344
      %v363 = vpack.c.bf16 %v347, %v346
      %v380 = vunpack.c.l.b16 %v348
      %v381 = vunpack.c.h.b16 %v348
      %v382 = vunpack.c.l.b16 %v349
      %v383 = vunpack.c.h.b16 %v349
      %v384 = vunpack.c.l.b16 %v350
      %v385 = vunpack.c.h.b16 %v350
      %v386 = vunpack.c.l.b16 %v351
      %v387 = vunpack.c.h.b16 %v351
      %v388 = vunpack.c.l.b16 %v352
      %v389 = vunpack.c.h.b16 %v352
      %v390 = vunpack.c.l.b16 %v353
      %v391 = vunpack.c.h.b16 %v353
      %v392 = vunpack.c.l.b16 %v354
      %v393 = vunpack.c.h.b16 %v354
      %v394 = vunpack.c.l.b16 %v355
      %v395 = vunpack.c.h.b16 %v355
      %v396 = vunpack.c.l.b16 %v356
      %v397 = vunpack.c.h.b16 %v356
      %v398 = vunpack.c.l.b16 %v357
      %v399 = vunpack.c.h.b16 %v357
      %v400 = vunpack.c.l.b16 %v358
      %v401 = vunpack.c.h.b16 %v358
      %v402 = vunpack.c.l.b16 %v359
      %v403 = vunpack.c.h.b16 %v359
      %v404 = vunpack.c.l.b16 %v360
      %v405 = vunpack.c.h.b16 %v360
      %v406 = vunpack.c.l.b16 %v361
      %v407 = vunpack.c.h.b16 %v361
      %v408 = vunpack.c.l.b16 %v362
      %v409 = vunpack.c.h.b16 %v362
      %v410 = vunpack.c.l.b16 %v363
      %v411 = vunpack.c.h.b16 %v363
      %v412 = vpack.c.b16 %v380, %v380
      %v413 = vpack.c.b16 %v381, %v381
      %v414 = vpack.c.b16 %v382, %v382
      %v415 = vpack.c.b16 %v383, %v383
      %v416 = vpack.c.b16 %v384, %v384
      %v417 = vpack.c.b16 %v385, %v385
      %v418 = vpack.c.b16 %v386, %v386
      %v419 = vpack.c.b16 %v387, %v387
      %v420 = vpack.c.b16 %v388, %v388
      %v421 = vpack.c.b16 %v389, %v389
      %v422 = vpack.c.b16 %v390, %v390
      %v423 = vpack.c.b16 %v391, %v391
      %v424 = vpack.c.b16 %v392, %v392
      %v425 = vpack.c.b16 %v393, %v393
      %v426 = vpack.c.b16 %v394, %v394
      %v427 = vpack.c.b16 %v395, %v395
      %v428 = vpack.c.b16 %v396, %v396
      %v429 = vpack.c.b16 %v397, %v397
      %v430 = vpack.c.b16 %v398, %v398
      %v431 = vpack.c.b16 %v399, %v399
      %v432 = vpack.c.b16 %v400, %v400
      %v433 = vpack.c.b16 %v401, %v401
      %v434 = vpack.c.b16 %v402, %v402
      %v435 = vpack.c.b16 %v403, %v403
      %v436 = vpack.c.b16 %v404, %v404
      %v437 = vpack.c.b16 %v405, %v405
      %v438 = vpack.c.b16 %v406, %v406
      %v439 = vpack.c.b16 %v407, %v407
      %v440 = vpack.c.b16 %v408, %v408
      %v441 = vpack.c.b16 %v409, %v409
      %v442 = vpack.c.b16 %v410, %v410
      %v443 = vpack.c.b16 %v411, %v411
      %476 = vst [vmem:[%s172] sm:$0xf] %v412
      %477 = vst [vmem:[%s172 + $0x4] sm:$0xf] %v413
      %478 = vst [vmem:[%s172 + $0x8] sm:$0xf] %v414
      %479 = vst [vmem:[%s172 + $0xc] sm:$0xf] %v415
      %480 = vst [vmem:[%s172 + $0x10] sm:$0xf] %v416
      %481 = vst [vmem:[%s172 + $0x14] sm:$0xf] %v417
      %482 = vst [vmem:[%s172 + $0x18] sm:$0xf] %v418
      %483 = vst [vmem:[%s172 + $0x1c] sm:$0xf] %v419
      %484 = vst [vmem:[%s172 + $0x20] sm:$0xf] %v420
      %485 = vst [vmem:[%s172 + $0x24] sm:$0xf] %v421
      %486 = vst [vmem:[%s172 + $0x28] sm:$0xf] %v422
      %487 = vst [vmem:[%s172 + $0x2c] sm:$0xf] %v423
      %488 = vst [vmem:[%s172 + $0x30] sm:$0xf] %v424
      %489 = vst [vmem:[%s172 + $0x34] sm:$0xf] %v425
      %490 = vst [vmem:[%s172 + $0x38] sm:$0xf] %v426
      %491 = vst [vmem:[%s172 + $0x3c] sm:$0xf] %v427
      %492 = vst [vmem:[%s172 + $0x40] sm:$0xf] %v428
      %493 = vst [vmem:[%s172 + $0x44] sm:$0xf] %v429
      %494 = vst [vmem:[%s172 + $0x48] sm:$0xf] %v430
      %495 = vst [vmem:[%s172 + $0x4c] sm:$0xf] %v431
      %496 = vst [vmem:[%s172 + $0x50] sm:$0xf] %v432
      %497 = vst [vmem:[%s172 + $0x54] sm:$0xf] %v433
      %498 = vst [vmem:[%s172 + $0x58] sm:$0xf] %v434
      %499 = vst [vmem:[%s172 + $0x5c] sm:$0xf] %v435
      %500 = vst [vmem:[%s172 + $0x60] sm:$0xf] %v436
      %501 = vst [vmem:[%s172 + $0x64] sm:$0xf] %v437
      %502 = vst [vmem:[%s172 + $0x68] sm:$0xf] %v438
      %503 = vst [vmem:[%s172 + $0x6c] sm:$0xf] %v439
      %504 = vst [vmem:[%s172 + $0x70] sm:$0xf] %v440
      %505 = vst [vmem:[%s172 + $0x74] sm:$0xf] %v441
      %506 = vst [vmem:[%s172 + $0x78] sm:$0xf] %v442
      %507 = vst [vmem:[%s172 + $0x7c] sm:$0xf] %v443
      %s508 = smul.u32 32, %s14
      %p509 = scmp.lt.s32.totalorder %s508, 63
      %s510 = scalar_select %p509, %s508, 63
      %s511 = smul.addr %s510, 4
      %s512 = scalar_lea.vmem %s3, %s511
      // Predicated region
      $region33: #{block_residual_forward.5} parent=31 // pred_check
        %p513 = pneg %p100
      $region34: #{block_residual_forward.5} parent=31 // pred_check_branch
        %515 = sbr.rel (%p513) target = $region36
      $region35: #{block_residual_forward.5} parent=31 // pred_region
        %s516 = smul.u32 32, %s14
      $region36: #{block_residual_forward.5} parent=31 // pred_fallthru
        _
    $region32: #{block_residual_forward.5} parent=5 // pred_fallthru
      _
    %p517 = scmp.le.s32.totalorder 2, %s9
    // Predicated region
    $region37: #{block_residual_forward.5} parent=5 // pred_check
      %p518 = pneg %p517
    $region38: #{block_residual_forward.5} parent=5 // pred_check_branch
      %520 = sbr.rel (%p518) target = $region40
    $region39: #{block_residual_forward.5} parent=5 // pred_region
      %s521 = ssub.s32 %s9, 2
      // Predicated region
      $region41: #{block_residual_forward.5} parent=39 // pred_check
        %p522 = pneg %p106
      $region42: #{block_residual_forward.5} parent=39 // pred_check_branch
        %524 = sbr.rel (%p522) target = $region44
      $region43: #{block_residual_forward.5} parent=39 // pred_region
        %s525 = smul.u32 32, %s15
        %p526 = scmp.lt.s32.totalorder %s525, 63
        %s527 = scalar_select %p526, %s525, 63
        %s528 = smul.addr %s527, 4
        %s529 = scalar_lea.vmem %s3, %s528
      $region44: #{block_residual_forward.5} parent=39 // pred_fallthru
        _
    $region40: #{block_residual_forward.5} parent=5 // pred_fallthru
      _
  $region6: #{block_residual_forward.5} parent=0 // loop_footer
    %s13 = sadd.s32 1, %s9
  $region7: #{block_residual_forward.5} parent=0 // loop_footer_branch
    %8 = sbr.rel target = $region3
  $region8: #{block_residual_forward.5} parent=0 // loop_exit
    _

// kernel: block_residual_forward.4
$region0: #{block_residual_forward.4}
  #allocation0 [shape = 'u32[]', space=smem, size = 0x4, offset = 0x4, fixed_abs, tag = 'smem constant byte address 0x4 - core index']
  #allocation1 [shape = 'u32[144,128]{1,0:T(1,128)}', space=vmem, size = 0x12000, scoped, tag = 'internal scratch']
  #allocation2 [shape = 'f32[256,128]{1,0:T(8,128)}', space=vmem, size = 0x20000, scoped, tag = 'scratch operand']
  %s0 = inlined_call_operand.vmem [shape: bf16[512,128], index: 0, kind: input, shape index: {}]
  %s1 = inlined_call_operand.vmem [shape: bf16[128,128], index: 1, kind: input, shape index: {}]
  %s2 = inlined_call_operand.vmem [shape: bf16[512,128], index: 2, kind: output, shape index: {0}]
  %s3 = inlined_call_operand.vmem [shape: f32[16,128], index: 3, kind: output, shape index: {1}]
  %s4 = inlined_call_operand.vmem [shape: f32[16,128], index: 4, kind: output, shape index: {2}]
  %5 = xla_tuple %s2, %s3, %s4
  %s6 = sld [smem:[#allocation0]]
  $region65: #{block_residual_forward.4} parent=0
    _
  %s8 = ssub.s32 1, %s6
  %s9 = scalar_select 0, %s8, %s6
  loop: start=0, step=1, limit=4
  $region2: #{block_residual_forward.4} parent=0 // loop_pre_header
    _
  $region3: #{block_residual_forward.4} parent=0 // loop_header
    %s11 = sphi 0, %s15
    %p12 = scmp.ge.s32.totalorder %s11, 4
    %s18 = sphi 0, %s37
    %s19 = sphi 0, %s33
    %s20 = sphi 0, %s29
    %s21 = sphi 0, %s18
    %s22 = sphi 0, %s19
    %s23 = sphi 0, %s20
    %s24 = sphi 0, %s21
    %s25 = sphi 0, %s22
    %s26 = sphi 0, %s23
    %s42 = sphi 0, %s44
    %s45 = sphi 0, %s42
    %s46 = sphi 0, %s45
    %s62 = sphi 0, %s46
    %s70 = sphi 0, %s72
    %s73 = sphi 0, %s70
    %s74 = sphi 0, %s73
    %s90 = sphi 0, %s74
    %s98 = sphi 0, %s100
    %s101 = sphi 0, %s98
    %s102 = sphi 0, %s101
    %s118 = sphi 0, %s102
    %s126 = sphi 0, %s128
    %s129 = sphi 0, %s126
    %s130 = sphi 0, %s129
    %s146 = sphi 0, %s130
    %s154 = sphi 0, %s156
    %s157 = sphi 0, %s154
    %s158 = sphi 0, %s157
    %s174 = sphi 0, %s158
  $region4: #{block_residual_forward.4} parent=0 // loop_header_branch
    %14 = sbr.rel (%p12) target = $region8
  $region5: #{block_residual_forward.4} parent=0 // loop_body
    %s16 = ssub.s32 %s11, 1
    %s17 = ssub.s32 %s11, 2
    %s27 = sadd.s32 1, %s20
    %p28 = scmp.ge.s32.totalorder %s27, 1
    %s29 = scalar_select %p28, 0, %s27
    %s30 = sadd.s32 1, %s19
    %s31 = scalar_select %p28, %s30, %s19
    %p32 = scmp.ge.s32.totalorder %s31, 1
    %s33 = scalar_select %p32, 0, %s31
    %s34 = sadd.s32 1, %s18
    %s35 = scalar_select %p32, %s34, %s18
    %p36 = scmp.ge.s32.totalorder %s35, 2
    %s37 = scalar_select %p36, 0, %s35
    %s38 = ssub.s32 %s18, %s37
    %s39 = ssub.s32 %s20, %s29
    %s40 = sor.u32 %s38, %s39
    %p41 = scmp.eq.s32.totalorder %s40, 0
    %s43 = sadd.s32 %s42, 1
    %s44 = scalar_select %p41, %s42, %s43
    %p47 = pneg %p41
    %p48 = scmp.eq.s32.totalorder %s11, 1
    %p49 = por %p47, %p48
    %p50 = scmp.ne.s32.totalorder %s42, %s45
    %p51 = scmp.eq.s32.totalorder %s11, 0
    %p52 = por %p50, %p51
    %p53 = scmp.ne.s32.totalorder %s42, %s45
    %p54 = scmp.eq.s32.totalorder %s16, 1
    %p55 = por %p53, %p54
    %p56 = scmp.ne.s32.totalorder %s45, %s46
    %p57 = scmp.eq.s32.totalorder %s16, 0
    %p58 = por %p56, %p57
    %p59 = scmp.ne.s32.totalorder %s45, %s46
    %p60 = scmp.eq.s32.totalorder %s17, 1
    %p61 = por %p59, %p60
    %p63 = scmp.ne.s32.totalorder %s46, %s62
    %p64 = scmp.eq.s32.totalorder %s17, 0
    %p65 = por %p63, %p64
    %s66 = ssub.s32 %s20, %s29
    %s67 = ssub.s32 %s19, %s33
    %s68 = sor.u32 %s66, %s67
    %p69 = scmp.eq.s32.totalorder %s68, 0
    %s71 = sadd.s32 %s70, 1
    %s72 = scalar_select %p69, %s70, %s71
    %p75 = pneg %p69
    %p76 = scmp.eq.s32.totalorder %s11, 1
    %p77 = por %p75, %p76
    %p78 = scmp.ne.s32.totalorder %s70, %s73
    %p79 = scmp.eq.s32.totalorder %s11, 0
    %p80 = por %p78, %p79
    %p81 = scmp.ne.s32.totalorder %s70, %s73
    %p82 = scmp.eq.s32.totalorder %s16, 1
    %p83 = por %p81, %p82
    %p84 = scmp.ne.s32.totalorder %s73, %s74
    %p85 = scmp.eq.s32.totalorder %s16, 0
    %p86 = por %p84, %p85
    %p87 = scmp.ne.s32.totalorder %s73, %s74
    %p88 = scmp.eq.s32.totalorder %s17, 1
    %p89 = por %p87, %p88
    %p91 = scmp.ne.s32.totalorder %s74, %s90
    %p92 = scmp.eq.s32.totalorder %s17, 0
    %p93 = por %p91, %p92
    %s94 = ssub.s32 %s18, %s37
    %s95 = ssub.s32 %s19, %s33
    %s96 = sor.u32 %s94, %s95
    %p97 = scmp.eq.s32.totalorder %s96, 0
    %s99 = sadd.s32 %s98, 1
    %s100 = scalar_select %p97, %s98, %s99
    %p103 = pneg %p97
    %p104 = scmp.eq.s32.totalorder %s11, 1
    %p105 = por %p103, %p104
    %p106 = scmp.ne.s32.totalorder %s98, %s101
    %p107 = scmp.eq.s32.totalorder %s11, 0
    %p108 = por %p106, %p107
    %p109 = scmp.ne.s32.totalorder %s98, %s101
    %p110 = scmp.eq.s32.totalorder %s16, 1
    %p111 = por %p109, %p110
    %p112 = scmp.ne.s32.totalorder %s101, %s102
    %p113 = scmp.eq.s32.totalorder %s16, 0
    %p114 = por %p112, %p113
    %p115 = scmp.ne.s32.totalorder %s101, %s102
    %p116 = scmp.eq.s32.totalorder %s17, 1
    %p117 = por %p115, %p116
    %p119 = scmp.ne.s32.totalorder %s102, %s118
    %p120 = scmp.eq.s32.totalorder %s17, 0
    %p121 = por %p119, %p120
    %s122 = ssub.s32 %s18, %s37
    %s123 = ssub.s32 %s19, %s33
    %s124 = sor.u32 %s122, %s123
    %p125 = scmp.eq.s32.totalorder %s124, 0
    %s127 = sadd.s32 %s126, 1
    %s128 = scalar_select %p125, %s126, %s127
    %p131 = pneg %p125
    %p132 = scmp.eq.s32.totalorder %s11, 1
    %p133 = por %p131, %p132
    %p134 = scmp.ne.s32.totalorder %s126, %s129
    %p135 = scmp.eq.s32.totalorder %s11, 0
    %p136 = por %p134, %p135
    %p137 = scmp.ne.s32.totalorder %s126, %s129
    %p138 = scmp.eq.s32.totalorder %s16, 1
    %p139 = por %p137, %p138
    %p140 = scmp.ne.s32.totalorder %s129, %s130
    %p141 = scmp.eq.s32.totalorder %s16, 0
    %p142 = por %p140, %p141
    %p143 = scmp.ne.s32.totalorder %s129, %s130
    %p144 = scmp.eq.s32.totalorder %s17, 1
    %p145 = por %p143, %p144
    %p147 = scmp.ne.s32.totalorder %s130, %s146
    %p148 = scmp.eq.s32.totalorder %s17, 0
    %p149 = por %p147, %p148
    %s150 = ssub.s32 %s18, %s37
    %s151 = ssub.s32 %s19, %s33
    %s152 = sor.u32 %s150, %s151
    %p153 = scmp.eq.s32.totalorder %s152, 0
    %s155 = sadd.s32 %s154, 1
    %s156 = scalar_select %p153, %s154, %s155
    %p159 = pneg %p153
    %p160 = scmp.eq.s32.totalorder %s11, 1
    %p161 = por %p159, %p160
    %p162 = scmp.ne.s32.totalorder %s154, %s157
    %p163 = scmp.eq.s32.totalorder %s11, 0
    %p164 = por %p162, %p163
    %p165 = scmp.ne.s32.totalorder %s154, %s157
    %p166 = scmp.eq.s32.totalorder %s16, 1
    %p167 = por %p165, %p166
    %p168 = scmp.ne.s32.totalorder %s157, %s158
    %p169 = scmp.eq.s32.totalorder %s16, 0
    %p170 = por %p168, %p169
    %p171 = scmp.ne.s32.totalorder %s157, %s158
    %p172 = scmp.eq.s32.totalorder %s17, 1
    %p173 = por %p171, %p172
    %p175 = scmp.ne.s32.totalorder %s158, %s174
    %p176 = scmp.eq.s32.totalorder %s17, 0
    %p177 = por %p175, %p176
    %p178 = scmp.le.s32.totalorder 1, %s11
    %p179 = scmp.lt.s32.totalorder %s11, 3
    %p180 = pnand %p178, %p179
    %p181 = pneg %p180
    // Predicated region
    $region9: #{block_residual_forward.4} parent=5 // pred_check
      _
    $region10: #{block_residual_forward.4} parent=5 // pred_check_branch
      %183 = sbr.rel (%p180) target = $region12
    $region11: #{block_residual_forward.4} parent=5 // pred_region
      %s184 = ssub.s32 %s11, 1
      // Predicated region
      $region13: #{block_residual_forward.4} parent=11 // pred_check
        %p185 = pneg %p86
      $region14: #{block_residual_forward.4} parent=11 // pred_check_branch
        %187 = sbr.rel (%p185) target = $region16
      $region15: #{block_residual_forward.4} parent=11 // pred_region
        %s188 = smul.u32 16, %s23
        %p189 = scmp.lt.s32.totalorder %s188, 15
        %s190 = scalar_select %p189, %s188, 15
        %p191 = scmp.lt.s32.totalorder %s22, 0
        %s192 = scalar_select %p191, %s22, 0
        %s193 = sadd.s32 %s192, %s190
        %s194 = smul.addr %s193, 4
        %s195 = scalar_lea.vmem %s1, %s194
        %s196 = smul.u32 16, %s23
      $region16: #{block_residual_forward.4} parent=11 // pred_fallthru
        _
    $region12: #{block_residual_forward.4} parent=5 // pred_fallthru
      _
    %p197 = scmp.lt.s32.totalorder %s11, 2
    // Predicated region
    $region17: #{block_residual_forward.4} parent=5 // pred_check
      %p198 = pneg %p197
    $region18: #{block_residual_forward.4} parent=5 // pred_check_branch
      %200 = sbr.rel (%p198) target = $region20
    $region19: #{block_residual_forward.4} parent=5 // pred_region
      // Predicated region
      $region21: #{block_residual_forward.4} parent=19 // pred_check
        %p201 = pneg %p52
      $region22: #{block_residual_forward.4} parent=19 // pred_check_branch
        %203 = sbr.rel (%p201) target = $region24
      $region23: #{block_residual_forward.4} parent=19 // pred_region
        %s204 = smul.u32 32, %s18
        %p205 = scmp.lt.s32.totalorder %s204, 63
        %s206 = scalar_select %p205, %s204, 63
        %p207 = scmp.lt.s32.totalorder %s20, 0
        %s208 = scalar_select %p207, %s20, 0
        %s209 = sadd.s32 %s208, %s206
        %s210 = smul.addr %s209, 4
        %s211 = scalar_lea.vmem %s0, %s210
        %s212 = smul.u32 32, %s18
      $region24: #{block_residual_forward.4} parent=19 // pred_fallthru
        _
    $region20: #{block_residual_forward.4} parent=5 // pred_fallthru
      _
    %p213 = scmp.le.s32.totalorder 1, %s11
    %p214 = scmp.lt.s32.totalorder %s11, 3
    %p215 = pnand %p213, %p214
    %p216 = pneg %p215
    // Predicated region
    $region25: #{block_residual_forward.4} parent=5 // pred_check
      _
    $region26: #{block_residual_forward.4} parent=5 // pred_check_branch
      %218 = sbr.rel (%p215) target = $region28
    $region27: #{block_residual_forward.4} parent=5 // pred_region
      %s219 = ssub.s32 %s11, 1
      %s220 = smul.u32 32, %s21
      %p221 = scmp.lt.s32.totalorder %s220, 63
      %s222 = scalar_select %p221, %s220, 63
      %p223 = scmp.lt.s32.totalorder %s23, 0
      %s224 = scalar_select %p223, %s23, 0
      %s225 = sadd.s32 %s224, %s222
      %s226 = smul.addr %s225, 4
      %s227 = scalar_lea.vmem %s0, %s226
      %p228 = pneg %p58
      %p229 = pneg %p55
      %s230 = smul.u32 16, %s23
      %p231 = scmp.lt.s32.totalorder %s230, 15
      %s232 = scalar_select %p231, %s230, 15
      %p233 = scmp.lt.s32.totalorder %s22, 0
      %s234 = scalar_select %p233, %s22, 0
      %s235 = sadd.s32 %s234, %s232
      %s236 = smul.addr %s235, 4
      %s237 = scalar_lea.vmem %s1, %s236
      %p238 = pneg %p86
      %p239 = pneg %p83
      %p240 = pneg %p114
      %p241 = pneg %p111
      %s242 = smul.u32 32, %s21
      %p243 = scmp.lt.s32.totalorder %s242, 63
      %s244 = scalar_select %p243, %s242, 63
      %p245 = scmp.lt.s32.totalorder %s22, 0
      %s246 = scalar_select %p245, %s22, 0
      %s247 = sadd.s32 %s246, %s244
      %s248 = smul.addr %s247, 4
      %s249 = scalar_lea.vmem %s2, %s248
      %p250 = pneg %p142
      %p251 = pneg %p139
      %p252 = scmp.lt.s32.totalorder %s21, 1
      %s253 = scalar_select %p252, %s21, 1
      %p254 = scmp.lt.s32.totalorder %s22, 0
      %s255 = scalar_select %p254, %s22, 0
      %s256 = sadd.s32 %s255, %s253
      %s257 = smul.addr %s256, 8
      %s258 = scalar_lea.vmem %s3, %s257
      %p259 = pneg %p170
      %p260 = pneg %p167
      %p261 = scmp.lt.s32.totalorder %s21, 1
      %s262 = scalar_select %p261, %s21, 1
      %p263 = scmp.lt.s32.totalorder %s22, 0
      %s264 = scalar_select %p263, %s22, 0
      %s265 = sadd.s32 %s264, %s262
      %s266 = smul.addr %s265, 8
      %s267 = scalar_lea.vmem %s4, %s266
      %s268 = smul.u32 32, %s21
      %p269 = scmp.lt.s32.totalorder %s268, 63
      %s270 = scalar_select %p269, %s268, 63
      %p271 = scmp.lt.s32.totalorder %s23, 0
      %s272 = scalar_select %p271, %s23, 0
      %s273 = sadd.s32 %s272, %s270
      %s274 = smul.addr %s273, 4
      %s275 = scalar_lea.vmem %s0, %s274
      %s276 = smul.u32 32, %s21
      %s277 = smul.u32 16, %s23
      %p278 = scmp.lt.s32.totalorder %s277, 15
      %s279 = scalar_select %p278, %s277, 15
      %p280 = scmp.lt.s32.totalorder %s22, 0
      %s281 = scalar_select %p280, %s22, 0
      %s282 = sadd.s32 %s281, %s279
      %s283 = smul.addr %s282, 4
      %s284 = scalar_lea.vmem %s1, %s283
      %s285 = smul.u32 16, %s23
      %s286 = smul.u32 32, %s21
      %p287 = scmp.lt.s32.totalorder %s286, 63
      %s288 = scalar_select %p287, %s286, 63
      %p289 = scmp.lt.s32.totalorder %s22, 0
      %s290 = scalar_select %p289, %s22, 0
      %s291 = sadd.s32 %s290, %s288
      %s292 = smul.addr %s291, 4
      %s293 = scalar_lea.vmem %s2, %s292
      %s294 = smul.u32 32, %s21
      %p295 = scmp.lt.s32.totalorder %s21, 1
      %s296 = scalar_select %p295, %s21, 1
      %p297 = scmp.lt.s32.totalorder %s22, 0
      %s298 = scalar_select %p297, %s22, 0
      %s299 = sadd.s32 %s298, %s296
      %s300 = smul.addr %s299, 8
      %s301 = scalar_lea.vmem %s3, %s300
      %p302 = scmp.lt.s32.totalorder %s21, 1
      %s303 = scalar_select %p302, %s21, 1
      %p304 = scmp.lt.s32.totalorder %s22, 0
      %s305 = scalar_select %p304, %s22, 0
      %s306 = sadd.s32 %s305, %s303
      %s307 = smul.addr %s306, 8
      %s308 = scalar_lea.vmem %s4, %s307
      %p310 = scmp.eq.s32.totalorder %s23, 0
      // Predicated region
      $region29: #{block_residual_forward.4} parent=27 // pred_check
        %p311 = pneg %p310
      $region30: #{block_residual_forward.4} parent=27 // pred_check_branch
        %313 = sbr.rel (%p311) target = $region32
      $region31: #{block_residual_forward.4} parent=27 // pred_region
        %314 = vst [vmem:[#allocation2] sm:$0xff] 0.0
        %315 = vst [vmem:[#allocation2 + $0x8] sm:$0xff] 0.0
        %316 = vst [vmem:[#allocation2 + $0x10] sm:$0xff] 0.0
        %317 = vst [vmem:[#allocation2 + $0x18] sm:$0xff] 0.0
        %318 = vst [vmem:[#allocation2 + $0x20] sm:$0xff] 0.0
        %319 = vst [vmem:[#allocation2 + $0x28] sm:$0xff] 0.0
        %320 = vst [vmem:[#allocation2 + $0x30] sm:$0xff] 0.0
        %321 = vst [vmem:[#allocation2 + $0x38] sm:$0xff] 0.0
        %322 = vst [vmem:[#allocation2 + $0x40] sm:$0xff] 0.0
        %323 = vst [vmem:[#allocation2 + $0x48] sm:$0xff] 0.0
        %324 = vst [vmem:[#allocation2 + $0x50] sm:$0xff] 0.0
        %325 = vst [vmem:[#allocation2 + $0x58] sm:$0xff] 0.0
        %326 = vst [vmem:[#allocation2 + $0x60] sm:$0xff] 0.0
        %327 = vst [vmem:[#allocation2 + $0x68] sm:$0xff] 0.0
        %328 = vst [vmem:[#allocation2 + $0x70] sm:$0xff] 0.0
        %329 = vst [vmem:[#allocation2 + $0x78] sm:$0xff] 0.0
        %330 = vst [vmem:[#allocation2 + $0x80] sm:$0xff] 0.0
        %331 = vst [vmem:[#allocation2 + $0x88] sm:$0xff] 0.0
        %332 = vst [vmem:[#allocation2 + $0x90] sm:$0xff] 0.0
        %333 = vst [vmem:[#allocation2 + $0x98] sm:$0xff] 0.0
        %334 = vst [vmem:[#allocation2 + $0xa0] sm:$0xff] 0.0
        %335 = vst [vmem:[#allocation2 + $0xa8] sm:$0xff] 0.0
        %336 = vst [vmem:[#allocation2 + $0xb0] sm:$0xff] 0.0
        %337 = vst [vmem:[#allocation2 + $0xb8] sm:$0xff] 0.0
        %338 = vst [vmem:[#allocation2 + $0xc0] sm:$0xff] 0.0
        %339 = vst [vmem:[#allocation2 + $0xc8] sm:$0xff] 0.0
        %340 = vst [vmem:[#allocation2 + $0xd0] sm:$0xff] 0.0
        %341 = vst [vmem:[#allocation2 + $0xd8] sm:$0xff] 0.0
        %342 = vst [vmem:[#allocation2 + $0xe0] sm:$0xff] 0.0
        %343 = vst [vmem:[#allocation2 + $0xe8] sm:$0xff] 0.0
        %344 = vst [vmem:[#allocation2 + $0xf0] sm:$0xff] 0.0
        %345 = vst [vmem:[#allocation2 + $0xf8] sm:$0xff] 0.0
      $region32: #{block_residual_forward.4} parent=27 // pred_fallthru
        _
      %v346 = vld [vmem:[#allocation2] sm:$0xff]
      %v347 = vld [vmem:[#allocation2 + $0x8] sm:$0xff]
      %v348 = vld [vmem:[#allocation2 + $0x10] sm:$0xff]
      %v349 = vld [vmem:[#allocation2 + $0x18] sm:$0xff]
      %v350 = vld [vmem:[#allocation2 + $0x20] sm:$0xff]
      %v351 = vld [vmem:[#allocation2 + $0x28] sm:$0xff]
      %v352 = vld [vmem:[#allocation2 + $0x30] sm:$0xff]
      %v353 = vld [vmem:[#allocation2 + $0x38] sm:$0xff]
      %v354 = vld [vmem:[#allocation2 + $0x40] sm:$0xff]
      %v355 = vld [vmem:[#allocation2 + $0x48] sm:$0xff]
      %v356 = vld [vmem:[#allocation2 + $0x50] sm:$0xff]
      %v357 = vld [vmem:[#allocation2 + $0x58] sm:$0xff]
      %v358 = vld [vmem:[#allocation2 + $0x60] sm:$0xff]
      %v359 = vld [vmem:[#allocation2 + $0x68] sm:$0xff]
      %v360 = vld [vmem:[#allocation2 + $0x70] sm:$0xff]
      %v361 = vld [vmem:[#allocation2 + $0x78] sm:$0xff]
      %v362 = vld [vmem:[#allocation2 + $0x80] sm:$0xff]
      %v363 = vld [vmem:[#allocation2 + $0x88] sm:$0xff]
      %v364 = vld [vmem:[#allocation2 + $0x90] sm:$0xff]
      %v365 = vld [vmem:[#allocation2 + $0x98] sm:$0xff]
      %v366 = vld [vmem:[#allocation2 + $0xa0] sm:$0xff]
      %v367 = vld [vmem:[#allocation2 + $0xa8] sm:$0xff]
      %v368 = vld [vmem:[#allocation2 + $0xb0] sm:$0xff]
      %v369 = vld [vmem:[#allocation2 + $0xb8] sm:$0xff]
      %v370 = vld [vmem:[#allocation2 + $0xc0] sm:$0xff]
      %v371 = vld [vmem:[#allocation2 + $0xc8] sm:$0xff]
      %v372 = vld [vmem:[#allocation2 + $0xd0] sm:$0xff]
      %v373 = vld [vmem:[#allocation2 + $0xd8] sm:$0xff]
      %v374 = vld [vmem:[#allocation2 + $0xe0] sm:$0xff]
      %v375 = vld [vmem:[#allocation2 + $0xe8] sm:$0xff]
      %v376 = vld [vmem:[#allocation2 + $0xf0] sm:$0xff]
      %v377 = vld [vmem:[#allocation2 + $0xf8] sm:$0xff]
      %v378 = vld [vmem:[%s275] sm:$0xf]
      %v379 = vld [vmem:[%s275 + $0x4] sm:$0xf]
      %v380 = vld [vmem:[%s275 + $0x8] sm:$0xf]
      %v381 = vld [vmem:[%s275 + $0xc] sm:$0xf]
      %v382 = vld [vmem:[%s275 + $0x10] sm:$0xf]
      %v383 = vld [vmem:[%s275 + $0x14] sm:$0xf]
      %v384 = vld [vmem:[%s275 + $0x18] sm:$0xf]
      %v385 = vld [vmem:[%s275 + $0x1c] sm:$0xf]
      %v386 = vld [vmem:[%s275 + $0x20] sm:$0xf]
      %v387 = vld [vmem:[%s275 + $0x24] sm:$0xf]
      %v388 = vld [vmem:[%s275 + $0x28] sm:$0xf]
      %v389 = vld [vmem:[%s275 + $0x2c] sm:$0xf]
      %v390 = vld [vmem:[%s275 + $0x30] sm:$0xf]
      %v391 = vld [vmem:[%s275 + $0x34] sm:$0xf]
      %v392 = vld [vmem:[%s275 + $0x38] sm:$0xf]
      %v393 = vld [vmem:[%s275 + $0x3c] sm:$0xf]
      %v394 = vld [vmem:[%s275 + $0x40] sm:$0xf]
      %v395 = vld [vmem:[%s275 + $0x44] sm:$0xf]
      %v396 = vld [vmem:[%s275 + $0x48] sm:$0xf]
      %v397 = vld [vmem:[%s275 + $0x4c] sm:$0xf]
      %v398 = vld [vmem:[%s275 + $0x50] sm:$0xf]
      %v399 = vld [vmem:[%s275 + $0x54] sm:$0xf]
      %v400 = vld [vmem:[%s275 + $0x58] sm:$0xf]
      %v401 = vld [vmem:[%s275 + $0x5c] sm:$0xf]
      %v402 = vld [vmem:[%s275 + $0x60] sm:$0xf]
      %v403 = vld [vmem:[%s275 + $0x64] sm:$0xf]
      %v404 = vld [vmem:[%s275 + $0x68] sm:$0xf]
      %v405 = vld [vmem:[%s275 + $0x6c] sm:$0xf]
      %v406 = vld [vmem:[%s275 + $0x70] sm:$0xf]
      %v407 = vld [vmem:[%s275 + $0x74] sm:$0xf]
      %v408 = vld [vmem:[%s275 + $0x78] sm:$0xf]
      %v409 = vld [vmem:[%s275 + $0x7c] sm:$0xf]
      %v410 = vld [vmem:[%s284] sm:$0xf]
      %v411 = vld [vmem:[%s284 + $0x4] sm:$0xf]
      %v412 = vld [vmem:[%s284 + $0x8] sm:$0xf]
      %v413 = vld [vmem:[%s284 + $0xc] sm:$0xf]
      %v414 = vld [vmem:[%s284 + $0x10] sm:$0xf]
      %v415 = vld [vmem:[%s284 + $0x14] sm:$0xf]
      %v416 = vld [vmem:[%s284 + $0x18] sm:$0xf]
      %v417 = vld [vmem:[%s284 + $0x1c] sm:$0xf]
      %v418 = vld [vmem:[%s284 + $0x20] sm:$0xf]
      %v419 = vld [vmem:[%s284 + $0x24] sm:$0xf]
      %v420 = vld [vmem:[%s284 + $0x28] sm:$0xf]
      %v421 = vld [vmem:[%s284 + $0x2c] sm:$0xf]
      %v422 = vld [vmem:[%s284 + $0x30] sm:$0xf]
      %v423 = vld [vmem:[%s284 + $0x34] sm:$0xf]
      %v424 = vld [vmem:[%s284 + $0x38] sm:$0xf]
      %v425 = vld [vmem:[%s284 + $0x3c] sm:$0xf]
      %v458 = vunpack.c.l.b16 %v378
      %v459 = vunpack.c.l.b16 %v379
      %v460 = vunpack.c.l.b16 %v380
      %v461 = vunpack.c.l.b16 %v381
      %v462 = vunpack.c.l.b16 %v382
      %v463 = vunpack.c.l.b16 %v383
      %v464 = vunpack.c.l.b16 %v384
      %v465 = vunpack.c.l.b16 %v385
      %v466 = vunpack.c.l.b16 %v386
      %v467 = vunpack.c.l.b16 %v387
      %v468 = vunpack.c.l.b16 %v388
      %v469 = vunpack.c.l.b16 %v389
      %v470 = vunpack.c.l.b16 %v390
      %v471 = vunpack.c.l.b16 %v391
      %v472 = vunpack.c.l.b16 %v392
      %v473 = vunpack.c.l.b16 %v393
      %v474 = vunpack.c.l.b16 %v394
      %v475 = vunpack.c.l.b16 %v395
      %v476 = vunpack.c.l.b16 %v396
      %v477 = vunpack.c.l.b16 %v397
      %v478 = vunpack.c.l.b16 %v398
      %v479 = vunpack.c.l.b16 %v399
      %v480 = vunpack.c.l.b16 %v400
      %v481 = vunpack.c.l.b16 %v401
      %v482 = vunpack.c.l.b16 %v402
      %v483 = vunpack.c.l.b16 %v403
      %v484 = vunpack.c.l.b16 %v404
      %v485 = vunpack.c.l.b16 %v405
      %v486 = vunpack.c.l.b16 %v406
      %v487 = vunpack.c.l.b16 %v407
      %v488 = vunpack.c.l.b16 %v408
      %v489 = vunpack.c.l.b16 %v409
      %v490 = vpack.c.b16 %v459, %v458
      %v491 = vpack.c.b16 %v461, %v460
      %v492 = vpack.c.b16 %v463, %v462
      %v493 = vpack.c.b16 %v465, %v464
      %v494 = vpack.c.b16 %v467, %v466
      %v495 = vpack.c.b16 %v469, %v468
      %v496 = vpack.c.b16 %v471, %v470
      %v497 = vpack.c.b16 %v473, %v472
      %v498 = vpack.c.b16 %v475, %v474
      %v499 = vpack.c.b16 %v477, %v476
      %v500 = vpack.c.b16 %v479, %v478
      %v501 = vpack.c.b16 %v481, %v480
      %v502 = vpack.c.b16 %v483, %v482
      %v503 = vpack.c.b16 %v485, %v484
      %v504 = vpack.c.b16 %v487, %v486
      %v505 = vpack.c.b16 %v489, %v488
      %v538 = vunpack.c.l.b16 %v410
      %v539 = vunpack.c.l.b16 %v411
      %v540 = vunpack.c.l.b16 %v412
      %v541 = vunpack.c.l.b16 %v413
      %v542 = vunpack.c.l.b16 %v414
      %v543 = vunpack.c.l.b16 %v415
      %v544 = vunpack.c.l.b16 %v416
      %v545 = vunpack.c.l.b16 %v417
      %v546 = vunpack.c.l.b16 %v418
      %v547 = vunpack.c.l.b16 %v419
      %v548 = vunpack.c.l.b16 %v420
      %v549 = vunpack.c.l.b16 %v421
      %v550 = vunpack.c.l.b16 %v422
      %v551 = vunpack.c.l.b16 %v423
      %v552 = vunpack.c.l.b16 %v424
      %v553 = vunpack.c.l.b16 %v425
      %v554 = vpack.c.b16 %v539, %v538
      %v555 = vpack.c.b16 %v541, %v540
      %v556 = vpack.c.b16 %v543, %v542
      %v557 = vpack.c.b16 %v545, %v544
      %v558 = vpack.c.b16 %v547, %v546
      %v559 = vpack.c.b16 %v549, %v548
      %v560 = vpack.c.b16 %v551, %v550
      %v561 = vpack.c.b16 %v553, %v552
      %570 = vmatprep.subr.bf16.mxu0 0
      %571 = vmatpush1.bf16.msra.mxu0 %v561
      %572 = vmatprep.subr.bf16.mxu0 0
      %573 = vmatpush1.bf16.msra.mxu0 %v560
      %574 = vmatprep.subr.bf16.mxu0 0
      %575 = vmatpush1.bf16.msra.mxu0 %v559
      %576 = vmatprep.subr.bf16.mxu0 0
      %577 = vmatpush1.bf16.msra.mxu0 %v558
      %578 = vmatprep.subr.bf16.mxu0 0
      %579 = vmatpush1.bf16.msra.mxu0 %v557
      %580 = vmatprep.subr.bf16.mxu0 0
      %581 = vmatpush1.bf16.msra.mxu0 %v556
      %582 = vmatprep.subr.bf16.mxu0 0
      %583 = vmatpush1.bf16.msra.mxu0 %v555
      %584 = vmatprep.subr.bf16.mxu0 0
      %585 = vmatpush1.bf16.msra.mxu0 %v554
      %586 = vmatprep.subr.bf16.mxu0 0
      %587 = vmatpush2.bf16.msra.mxu0 0
      %588 = vmatprep.subr.bf16.mxu0 0
      %589 = vmatpush2.bf16.msra.mxu0 0
      %590 = vmatprep.subr.bf16.mxu0 0
      %591 = vmatpush2.bf16.msra.mxu0 0
      %592 = vmatprep.subr.bf16.mxu0 0
      %593 = vmatpush2.bf16.msra.mxu0 0
      %594 = vmatprep.subr.bf16.mxu0 0
      %595 = vmatpush2.bf16.msra.mxu0 0
      %596 = vmatprep.subr.bf16.mxu0 0
      %597 = vmatpush2.bf16.msra.mxu0 0
      %598 = vmatprep.subr.bf16.mxu0 0
      %599 = vmatpush2.bf16.msra.mxu0 0
      %600 = vmatprep.subr.bf16.mxu0 0
      %601 = vmatpush2.bf16.msra.mxu0 0
      %602 = vmatprep.mubr.bf16.mxu0 0
      %603 = vmatmul.mubr.bf16.gmra.mxu0 %v490
      %v604 = vpop.f32.mrf.mxu0
      %v605 = vadd.f32 0.0, %v604
      %v606 = vpop.f32.mrf.mxu0
      %v607 = vpop.f32.mrf.mxu0
      %v608 = vadd.f32 0.0, %v607
      %v609 = vpop.f32.mrf.mxu0
      %610 = vmatprep.mubr.bf16.mxu0 0
      %611 = vmatmul.mubr.bf16.gmra.mxu0 %v491
      %v612 = vpop.f32.mrf.mxu0
      %v613 = vadd.f32 0.0, %v612
      %v614 = vpop.f32.mrf.mxu0
      %v615 = vpop.f32.mrf.mxu0
      %v616 = vadd.f32 0.0, %v615
      %v617 = vpop.f32.mrf.mxu0
      %618 = vmatprep.mubr.bf16.mxu0 0
      %619 = vmatmul.mubr.bf16.gmra.mxu0 %v492
      %v620 = vpop.f32.mrf.mxu0
      %v621 = vadd.f32 0.0, %v620
      %v622 = vpop.f32.mrf.mxu0
      %v623 = vpop.f32.mrf.mxu0
      %v624 = vadd.f32 0.0, %v623
      %v625 = vpop.f32.mrf.mxu0
      %626 = vmatprep.mubr.bf16.mxu0 0
      %627 = vmatmul.mubr.bf16.gmra.mxu0 %v493
      %v628 = vpop.f32.mrf.mxu0
      %v629 = vadd.f32 0.0, %v628
      %v630 = vpop.f32.mrf.mxu0
      %v631 = vpop.f32.mrf.mxu0
      %v632 = vadd.f32 0.0, %v631
      %v633 = vpop.f32.mrf.mxu0
      %634 = vmatprep.mubr.bf16.mxu0 0
      %635 = vmatmul.mubr.bf16.gmra.mxu0 %v494
      %v636 = vpop.f32.mrf.mxu0
      %v637 = vadd.f32 0.0, %v636
      %v638 = vpop.f32.mrf.mxu0
      %v639 = vpop.f32.mrf.mxu0
      %v640 = vadd.f32 0.0, %v639
      %v641 = vpop.f32.mrf.mxu0
      %642 = vmatprep.mubr.bf16.mxu0 0
      %643 = vmatmul.mubr.bf16.gmra.mxu0 %v495
      %v644 = vpop.f32.mrf.mxu0
      %v645 = vadd.f32 0.0, %v644
      %v646 = vpop.f32.mrf.mxu0
      %v647 = vpop.f32.mrf.mxu0
      %v648 = vadd.f32 0.0, %v647
      %v649 = vpop.f32.mrf.mxu0
      %650 = vmatprep.mubr.bf16.mxu0 0
      %651 = vmatmul.mubr.bf16.gmra.mxu0 %v496
      %v652 = vpop.f32.mrf.mxu0
      %v653 = vadd.f32 0.0, %v652
      %v654 = vpop.f32.mrf.mxu0
      %v655 = vpop.f32.mrf.mxu0
      %v656 = vadd.f32 0.0, %v655
      %v657 = vpop.f32.mrf.mxu0
      %658 = vmatprep.mubr.bf16.mxu0 0
      %659 = vmatmul.mubr.bf16.gmra.mxu0 %v497
      %v660 = vpop.f32.mrf.mxu0
      %v661 = vadd.f32 0.0, %v660
      %v662 = vpop.f32.mrf.mxu0
      %v663 = vpop.f32.mrf.mxu0
      %v664 = vadd.f32 0.0, %v663
      %v665 = vpop.f32.mrf.mxu0
      %666 = vmatprep.mubr.bf16.mxu0 0
      %667 = vmatmul.mubr.bf16.gmra.mxu0 %v498
      %v668 = vpop.f32.mrf.mxu0
      %v669 = vadd.f32 0.0, %v668
      %v670 = vpop.f32.mrf.mxu0
      %v671 = vpop.f32.mrf.mxu0
      %v672 = vadd.f32 0.0, %v671
      %v673 = vpop.f32.mrf.mxu0
      %674 = vmatprep.mubr.bf16.mxu0 0
      %675 = vmatmul.mubr.bf16.gmra.mxu0 %v499
      %v676 = vpop.f32.mrf.mxu0
      %v677 = vadd.f32 0.0, %v676
      %v678 = vpop.f32.mrf.mxu0
      %v679 = vpop.f32.mrf.mxu0
      %v680 = vadd.f32 0.0, %v679
      %v681 = vpop.f32.mrf.mxu0
      %682 = vmatprep.mubr.bf16.mxu0 0
      %683 = vmatmul.mubr.bf16.gmra.mxu0 %v500
      %v684 = vpop.f32.mrf.mxu0
      %v685 = vadd.f32 0.0, %v684
      %v686 = vpop.f32.mrf.mxu0
      %v687 = vpop.f32.mrf.mxu0
      %v688 = vadd.f32 0.0, %v687
      %v689 = vpop.f32.mrf.mxu0
      %690 = vmatprep.mubr.bf16.mxu0 0
      %691 = vmatmul.mubr.bf16.gmra.mxu0 %v501
      %v692 = vpop.f32.mrf.mxu0
      %v693 = vadd.f32 0.0, %v692
      %v694 = vpop.f32.mrf.mxu0
      %v695 = vpop.f32.mrf.mxu0
      %v696 = vadd.f32 0.0, %v695
      %v697 = vpop.f32.mrf.mxu0
      %698 = vmatprep.mubr.bf16.mxu0 0
      %699 = vmatmul.mubr.bf16.gmra.mxu0 %v502
      %v700 = vpop.f32.mrf.mxu0
      %v701 = vadd.f32 0.0, %v700
      %v702 = vpop.f32.mrf.mxu0
      %v703 = vpop.f32.mrf.mxu0
      %v704 = vadd.f32 0.0, %v703
      %v705 = vpop.f32.mrf.mxu0
      %706 = vmatprep.mubr.bf16.mxu0 0
      %707 = vmatmul.mubr.bf16.gmra.mxu0 %v503
      %v708 = vpop.f32.mrf.mxu0
      %v709 = vadd.f32 0.0, %v708
      %v710 = vpop.f32.mrf.mxu0
      %v711 = vpop.f32.mrf.mxu0
      %v712 = vadd.f32 0.0, %v711
      %v713 = vpop.f32.mrf.mxu0
      %714 = vmatprep.mubr.bf16.mxu0 0
      %715 = vmatmul.mubr.bf16.gmra.mxu0 %v504
      %v716 = vpop.f32.mrf.mxu0
      %v717 = vadd.f32 0.0, %v716
      %v718 = vpop.f32.mrf.mxu0
      %v719 = vpop.f32.mrf.mxu0
      %v720 = vadd.f32 0.0, %v719
      %v721 = vpop.f32.mrf.mxu0
      %722 = vmatprep.mubr.bf16.mxu0 0
      %723 = vmatmul.mubr.bf16.gmra.mxu0 %v505
      %v724 = vpop.f32.mrf.mxu0
      %v725 = vadd.f32 0.0, %v724
      %v726 = vpop.f32.mrf.mxu0
      %v727 = vpop.f32.mrf.mxu0
      %v728 = vadd.f32 0.0, %v727
      %v729 = vpop.f32.mrf.mxu0
      %730 = vdwg.mxu0
      %v731 = vadd.f32 %v346, %v605
      %v732 = vadd.f32 %v347, %v608
      %v733 = vadd.f32 %v348, %v613
      %v734 = vadd.f32 %v349, %v616
      %v735 = vadd.f32 %v350, %v621
      %v736 = vadd.f32 %v351, %v624
      %v737 = vadd.f32 %v352, %v629
      %v738 = vadd.f32 %v353, %v632
      %v739 = vadd.f32 %v354, %v637
      %v740 = vadd.f32 %v355, %v640
      %v741 = vadd.f32 %v356, %v645
      %v742 = vadd.f32 %v357, %v648
      %v743 = vadd.f32 %v358, %v653
      %v744 = vadd.f32 %v359, %v656
      %v745 = vadd.f32 %v360, %v661
      %v746 = vadd.f32 %v361, %v664
      %v747 = vadd.f32 %v362, %v669
      %v748 = vadd.f32 %v363, %v672
      %v749 = vadd.f32 %v364, %v677
      %v750 = vadd.f32 %v365, %v680
      %v751 = vadd.f32 %v366, %v685
      %v752 = vadd.f32 %v367, %v688
      %v753 = vadd.f32 %v368, %v693
      %v754 = vadd.f32 %v369, %v696
      %v755 = vadd.f32 %v370, %v701
      %v756 = vadd.f32 %v371, %v704
      %v757 = vadd.f32 %v372, %v709
      %v758 = vadd.f32 %v373, %v712
      %v759 = vadd.f32 %v374, %v717
      %v760 = vadd.f32 %v375, %v720
      %v761 = vadd.f32 %v376, %v725
      %v762 = vadd.f32 %v377, %v728
      %763 = vst [vmem:[#allocation2] sm:$0xff] %v731
      %764 = vst [vmem:[#allocation2 + $0x8] sm:$0xff] %v732
      %765 = vst [vmem:[#allocation2 + $0x10] sm:$0xff] %v733
      %766 = vst [vmem:[#allocation2 + $0x18] sm:$0xff] %v734
      %767 = vst [vmem:[#allocation2 + $0x20] sm:$0xff] %v735
      %768 = vst [vmem:[#allocation2 + $0x28] sm:$0xff] %v736
      %769 = vst [vmem:[#allocation2 + $0x30] sm:$0xff] %v737
      %770 = vst [vmem:[#allocation2 + $0x38] sm:$0xff] %v738
      %771 = vst [vmem:[#allocation2 + $0x40] sm:$0xff] %v739
      %772 = vst [vmem:[#allocation2 + $0x48] sm:$0xff] %v740
      %773 = vst [vmem:[#allocation2 + $0x50] sm:$0xff] %v741
      %774 = vst [vmem:[#allocation2 + $0x58] sm:$0xff] %v742
      %775 = vst [vmem:[#allocation2 + $0x60] sm:$0xff] %v743
      %776 = vst [vmem:[#allocation2 + $0x68] sm:$0xff] %v744
      %777 = vst [vmem:[#allocation2 + $0x70] sm:$0xff] %v745
      %778 = vst [vmem:[#allocation2 + $0x78] sm:$0xff] %v746
      %779 = vst [vmem:[#allocation2 + $0x80] sm:$0xff] %v747
      %780 = vst [vmem:[#allocation2 + $0x88] sm:$0xff] %v748
      %781 = vst [vmem:[#allocation2 + $0x90] sm:$0xff] %v749
      %782 = vst [vmem:[#allocation2 + $0x98] sm:$0xff] %v750
      %783 = vst [vmem:[#allocation2 + $0xa0] sm:$0xff] %v751
      %784 = vst [vmem:[#allocation2 + $0xa8] sm:$0xff] %v752
      %785 = vst [vmem:[#allocation2 + $0xb0] sm:$0xff] %v753
      %786 = vst [vmem:[#allocation2 + $0xb8] sm:$0xff] %v754
      %787 = vst [vmem:[#allocation2 + $0xc0] sm:$0xff] %v755
      %788 = vst [vmem:[#allocation2 + $0xc8] sm:$0xff] %v756
      %789 = vst [vmem:[#allocation2 + $0xd0] sm:$0xff] %v757
      %790 = vst [vmem:[#allocation2 + $0xd8] sm:$0xff] %v758
      %791 = vst [vmem:[#allocation2 + $0xe0] sm:$0xff] %v759
      %792 = vst [vmem:[#allocation2 + $0xe8] sm:$0xff] %v760
      %793 = vst [vmem:[#allocation2 + $0xf0] sm:$0xff] %v761
      %794 = vst [vmem:[#allocation2 + $0xf8] sm:$0xff] %v762
      // Predicated region
      $region33: #{block_residual_forward.4} parent=27 // pred_check
        %p795 = pneg %p310
      $region34: #{block_residual_forward.4} parent=27 // pred_check_branch
        %797 = sbr.rel (%p795) target = $region36
      $region35: #{block_residual_forward.4} parent=27 // pred_region
        %v798 = vld [vmem:[#allocation2] sm:$0xff]
        %v799 = vld [vmem:[#allocation2 + $0x8] sm:$0xff]
        %v800 = vld [vmem:[#allocation2 + $0x10] sm:$0xff]
        %v801 = vld [vmem:[#allocation2 + $0x18] sm:$0xff]
        %v802 = vld [vmem:[#allocation2 + $0x20] sm:$0xff]
        %v803 = vld [vmem:[#allocation2 + $0x28] sm:$0xff]
        %v804 = vld [vmem:[#allocation2 + $0x30] sm:$0xff]
        %v805 = vld [vmem:[#allocation2 + $0x38] sm:$0xff]
        %v806 = vld [vmem:[#allocation2 + $0x40] sm:$0xff]
        %v807 = vld [vmem:[#allocation2 + $0x48] sm:$0xff]
        %v808 = vld [vmem:[#allocation2 + $0x50] sm:$0xff]
        %v809 = vld [vmem:[#allocation2 + $0x58] sm:$0xff]
        %v810 = vld [vmem:[#allocation2 + $0x60] sm:$0xff]
        %v811 = vld [vmem:[#allocation2 + $0x68] sm:$0xff]
        %v812 = vld [vmem:[#allocation2 + $0x70] sm:$0xff]
        %v813 = vld [vmem:[#allocation2 + $0x78] sm:$0xff]
        %v814 = vld [vmem:[#allocation2 + $0x80] sm:$0xff]
        %v815 = vld [vmem:[#allocation2 + $0x88] sm:$0xff]
        %v816 = vld [vmem:[#allocation2 + $0x90] sm:$0xff]
        %v817 = vld [vmem:[#allocation2 + $0x98] sm:$0xff]
        %v818 = vld [vmem:[#allocation2 + $0xa0] sm:$0xff]
        %v819 = vld [vmem:[#allocation2 + $0xa8] sm:$0xff]
        %v820 = vld [vmem:[#allocation2 + $0xb0] sm:$0xff]
        %v821 = vld [vmem:[#allocation2 + $0xb8] sm:$0xff]
        %v822 = vld [vmem:[#allocation2 + $0xc0] sm:$0xff]
        %v823 = vld [vmem:[#allocation2 + $0xc8] sm:$0xff]
        %v824 = vld [vmem:[#allocation2 + $0xd0] sm:$0xff]
        %v825 = vld [vmem:[#allocation2 + $0xd8] sm:$0xff]
        %v826 = vld [vmem:[#allocation2 + $0xe0] sm:$0xff]
        %v827 = vld [vmem:[#allocation2 + $0xe8] sm:$0xff]
        %v828 = vld [vmem:[#allocation2 + $0xf0] sm:$0xff]
        %v829 = vld [vmem:[#allocation2 + $0xf8] sm:$0xff]
        %v830 = vpack.c.bf16 %v799, %v798
        %v831 = vpack.c.bf16 %v801, %v800
        %v832 = vpack.c.bf16 %v803, %v802
        %v833 = vpack.c.bf16 %v805, %v804
        %v834 = vpack.c.bf16 %v807, %v806
        %v835 = vpack.c.bf16 %v809, %v808
        %v836 = vpack.c.bf16 %v811, %v810
        %v837 = vpack.c.bf16 %v813, %v812
        %v838 = vpack.c.bf16 %v815, %v814
        %v839 = vpack.c.bf16 %v817, %v816
        %v840 = vpack.c.bf16 %v819, %v818
        %v841 = vpack.c.bf16 %v821, %v820
        %v842 = vpack.c.bf16 %v823, %v822
        %v843 = vpack.c.bf16 %v825, %v824
        %v844 = vpack.c.bf16 %v827, %v826
        %v845 = vpack.c.bf16 %v829, %v828
        %v862 = vunpack.c.l.b16 %v830
        %v863 = vunpack.c.h.b16 %v830
        %v864 = vunpack.c.l.b16 %v831
        %v865 = vunpack.c.h.b16 %v831
        %v866 = vunpack.c.l.b16 %v832
        %v867 = vunpack.c.h.b16 %v832
        %v868 = vunpack.c.l.b16 %v833
        %v869 = vunpack.c.h.b16 %v833
        %v870 = vunpack.c.l.b16 %v834
        %v871 = vunpack.c.h.b16 %v834
        %v872 = vunpack.c.l.b16 %v835
        %v873 = vunpack.c.h.b16 %v835
        %v874 = vunpack.c.l.b16 %v836
        %v875 = vunpack.c.h.b16 %v836
        %v876 = vunpack.c.l.b16 %v837
        %v877 = vunpack.c.h.b16 %v837
        %v878 = vunpack.c.l.b16 %v838
        %v879 = vunpack.c.h.b16 %v838
        %v880 = vunpack.c.l.b16 %v839
        %v881 = vunpack.c.h.b16 %v839
        %v882 = vunpack.c.l.b16 %v840
        %v883 = vunpack.c.h.b16 %v840
        %v884 = vunpack.c.l.b16 %v841
        %v885 = vunpack.c.h.b16 %v841
        %v886 = vunpack.c.l.b16 %v842
        %v887 = vunpack.c.h.b16 %v842
        %v888 = vunpack.c.l.b16 %v843
        %v889 = vunpack.c.h.b16 %v843
        %v890 = vunpack.c.l.b16 %v844
        %v891 = vunpack.c.h.b16 %v844
        %v892 = vunpack.c.l.b16 %v845
        %v893 = vunpack.c.h.b16 %v845
        %v894 = vpack.c.b16 %v862, %v862
        %v895 = vpack.c.b16 %v863, %v863
        %v896 = vpack.c.b16 %v864, %v864
        %v897 = vpack.c.b16 %v865, %v865
        %v898 = vpack.c.b16 %v866, %v866
        %v899 = vpack.c.b16 %v867, %v867
        %v900 = vpack.c.b16 %v868, %v868
        %v901 = vpack.c.b16 %v869, %v869
        %v902 = vpack.c.b16 %v870, %v870
        %v903 = vpack.c.b16 %v871, %v871
        %v904 = vpack.c.b16 %v872, %v872
        %v905 = vpack.c.b16 %v873, %v873
        %v906 = vpack.c.b16 %v874, %v874
        %v907 = vpack.c.b16 %v875, %v875
        %v908 = vpack.c.b16 %v876, %v876
        %v909 = vpack.c.b16 %v877, %v877
        %v910 = vpack.c.b16 %v878, %v878
        %v911 = vpack.c.b16 %v879, %v879
        %v912 = vpack.c.b16 %v880, %v880
        %v913 = vpack.c.b16 %v881, %v881
        %v914 = vpack.c.b16 %v882, %v882
        %v915 = vpack.c.b16 %v883, %v883
        %v916 = vpack.c.b16 %v884, %v884
        %v917 = vpack.c.b16 %v885, %v885
        %v918 = vpack.c.b16 %v886, %v886
        %v919 = vpack.c.b16 %v887, %v887
        %v920 = vpack.c.b16 %v888, %v888
        %v921 = vpack.c.b16 %v889, %v889
        %v922 = vpack.c.b16 %v890, %v890
        %v923 = vpack.c.b16 %v891, %v891
        %v924 = vpack.c.b16 %v892, %v892
        %v925 = vpack.c.b16 %v893, %v893
        %958 = vst [vmem:[%s293] sm:$0xf] %v894
        %959 = vst [vmem:[%s293 + $0x4] sm:$0xf] %v895
        %960 = vst [vmem:[%s293 + $0x8] sm:$0xf] %v896
        %961 = vst [vmem:[%s293 + $0xc] sm:$0xf] %v897
        %962 = vst [vmem:[%s293 + $0x10] sm:$0xf] %v898
        %963 = vst [vmem:[%s293 + $0x14] sm:$0xf] %v899
        %964 = vst [vmem:[%s293 + $0x18] sm:$0xf] %v900
        %965 = vst [vmem:[%s293 + $0x1c] sm:$0xf] %v901
        %966 = vst [vmem:[%s293 + $0x20] sm:$0xf] %v902
        %967 = vst [vmem:[%s293 + $0x24] sm:$0xf] %v903
        %968 = vst [vmem:[%s293 + $0x28] sm:$0xf] %v904
        %969 = vst [vmem:[%s293 + $0x2c] sm:$0xf] %v905
        %970 = vst [vmem:[%s293 + $0x30] sm:$0xf] %v906
        %971 = vst [vmem:[%s293 + $0x34] sm:$0xf] %v907
        %972 = vst [vmem:[%s293 + $0x38] sm:$0xf] %v908
        %973 = vst [vmem:[%s293 + $0x3c] sm:$0xf] %v909
        %974 = vst [vmem:[%s293 + $0x40] sm:$0xf] %v910
        %975 = vst [vmem:[%s293 + $0x44] sm:$0xf] %v911
        %976 = vst [vmem:[%s293 + $0x48] sm:$0xf] %v912
        %977 = vst [vmem:[%s293 + $0x4c] sm:$0xf] %v913
        %978 = vst [vmem:[%s293 + $0x50] sm:$0xf] %v914
        %979 = vst [vmem:[%s293 + $0x54] sm:$0xf] %v915
        %980 = vst [vmem:[%s293 + $0x58] sm:$0xf] %v916
        %981 = vst [vmem:[%s293 + $0x5c] sm:$0xf] %v917
        %982 = vst [vmem:[%s293 + $0x60] sm:$0xf] %v918
        %983 = vst [vmem:[%s293 + $0x64] sm:$0xf] %v919
        %984 = vst [vmem:[%s293 + $0x68] sm:$0xf] %v920
        %985 = vst [vmem:[%s293 + $0x6c] sm:$0xf] %v921
        %986 = vst [vmem:[%s293 + $0x70] sm:$0xf] %v922
        %987 = vst [vmem:[%s293 + $0x74] sm:$0xf] %v923
        %988 = vst [vmem:[%s293 + $0x78] sm:$0xf] %v924
        %989 = vst [vmem:[%s293 + $0x7c] sm:$0xf] %v925
        %v990 = vadd.f32 %v798, %v799
        %v991 = vadd.f32 %v990, %v800
        %v992 = vadd.f32 %v991, %v801
        %v993 = vadd.f32 %v992, %v802
        %v994 = vadd.f32 %v993, %v803
        %v995 = vadd.f32 %v994, %v804
        %v996 = vadd.f32 %v995, %v805
        %v997 = vadd.f32 %v996, %v806
        %v998 = vadd.f32 %v997, %v807
        %v999 = vadd.f32 %v998, %v808
        %v1000 = vadd.f32 %v999, %v809
        %v1001 = vadd.f32 %v1000, %v810
        %v1002 = vadd.f32 %v1001, %v811
        %v1003 = vadd.f32 %v1002, %v812
        %v1004 = vadd.f32 %v1003, %v813
        %v1005 = vadd.f32 %v1004, %v814
        %v1006 = vadd.f32 %v1005, %v815
        %v1007 = vadd.f32 %v1006, %v816
        %v1008 = vadd.f32 %v1007, %v817
        %v1009 = vadd.f32 %v1008, %v818
        %v1010 = vadd.f32 %v1009, %v819
        %v1011 = vadd.f32 %v1010, %v820
        %v1012 = vadd.f32 %v1011, %v821
        %v1013 = vadd.f32 %v1012, %v822
        %v1014 = vadd.f32 %v1013, %v823
        %v1015 = vadd.f32 %v1014, %v824
        %v1016 = vadd.f32 %v1015, %v825
        %v1017 = vadd.f32 %v1016, %v826
        %v1018 = vadd.f32 %v1017, %v827
        %v1019 = vadd.f32 %v1018, %v828
        %v1020 = vadd.f32 %v1019, %v829
        %v1021 = vrot.slane %v1020, 4
        %v1022 = vadd.f32 %v1020, %v1021
        %v1023 = vrot.slane %v1022, 2
        %v1024 = vadd.f32 %v1022, %v1023
        %v1025 = vrot.slane %v1024, 1
        %v1026 = vadd.f32 %v1024, %v1025
        %v1027 = vmul.f32 %v798, %v798
        %v1028 = vmul.f32 %v799, %v799
        %v1029 = vmul.f32 %v800, %v800
        %v1030 = vmul.f32 %v801, %v801
        %v1031 = vmul.f32 %v802, %v802
        %v1032 = vmul.f32 %v803, %v803
        %v1033 = vmul.f32 %v804, %v804
        %v1034 = vmul.f32 %v805, %v805
        %v1035 = vmul.f32 %v806, %v806
        %v1036 = vmul.f32 %v807, %v807
        %v1037 = vmul.f32 %v808, %v808
        %v1038 = vmul.f32 %v809, %v809
        %v1039 = vmul.f32 %v810, %v810
        %v1040 = vmul.f32 %v811, %v811
        %v1041 = vmul.f32 %v812, %v812
        %v1042 = vmul.f32 %v813, %v813
        %v1043 = vmul.f32 %v814, %v814
        %v1044 = vmul.f32 %v815, %v815
        %v1045 = vmul.f32 %v816, %v816
        %v1046 = vmul.f32 %v817, %v817
        %v1047 = vmul.f32 %v818, %v818
        %v1048 = vmul.f32 %v819, %v819
        %v1049 = vmul.f32 %v820, %v820
        %v1050 = vmul.f32 %v821, %v821
        %v1051 = vmul.f32 %v822, %v822
        %v1052 = vmul.f32 %v823, %v823
        %v1053 = vmul.f32 %v824, %v824
        %v1054 = vmul.f32 %v825, %v825
        %v1055 = vmul.f32 %v826, %v826
        %v1056 = vmul.f32 %v827, %v827
        %v1057 = vmul.f32 %v828, %v828
        %v1058 = vmul.f32 %v829, %v829
        %v1059 = vadd.f32 %v1027, %v1028
        %v1060 = vadd.f32 %v1059, %v1029
        %v1061 = vadd.f32 %v1060, %v1030
        %v1062 = vadd.f32 %v1061, %v1031
        %v1063 = vadd.f32 %v1062, %v1032
        %v1064 = vadd.f32 %v1063, %v1033
        %v1065 = vadd.f32 %v1064, %v1034
        %v1066 = vadd.f32 %v1065, %v1035
        %v1067 = vadd.f32 %v1066, %v1036
        %v1068 = vadd.f32 %v1067, %v1037
        %v1069 = vadd.f32 %v1068, %v1038
        %v1070 = vadd.f32 %v1069, %v1039
        %v1071 = vadd.f32 %v1070, %v1040
        %v1072 = vadd.f32 %v1071, %v1041
        %v1073 = vadd.f32 %v1072, %v1042
        %v1074 = vadd.f32 %v1073, %v1043
        %v1075 = vadd.f32 %v1074, %v1044
        %v1076 = vadd.f32 %v1075, %v1045
        %v1077 = vadd.f32 %v1076, %v1046
        %v1078 = vadd.f32 %v1077, %v1047
        %v1079 = vadd.f32 %v1078, %v1048
        %v1080 = vadd.f32 %v1079, %v1049
        %v1081 = vadd.f32 %v1080, %v1050
        %v1082 = vadd.f32 %v1081, %v1051
        %v1083 = vadd.f32 %v1082, %v1052
        %v1084 = vadd.f32 %v1083, %v1053
        %v1085 = vadd.f32 %v1084, %v1054
        %v1086 = vadd.f32 %v1085, %v1055
        %v1087 = vadd.f32 %v1086, %v1056
        %v1088 = vadd.f32 %v1087, %v1057
        %v1089 = vadd.f32 %v1088, %v1058
        %v1090 = vrot.slane %v1089, 4
        %v1091 = vadd.f32 %v1089, %v1090
        %v1092 = vrot.slane %v1091, 2
        %v1093 = vadd.f32 %v1091, %v1092
        %v1094 = vrot.slane %v1093, 1
        %v1095 = vadd.f32 %v1093, %v1094
        %1096 = vst [vmem:[%s301] sm:$0xff] %v1026
        %1097 = vst [vmem:[%s308] sm:$0xff] %v1095
      $region36: #{block_residual_forward.4} parent=27 // pred_fallthru
        _
      %s1098 = smul.u32 32, %s21
      %p1099 = scmp.lt.s32.totalorder %s1098, 63
      %s1100 = scalar_select %p1099, %s1098, 63
      %p1101 = scmp.lt.s32.totalorder %s22, 0
      %s1102 = scalar_select %p1101, %s22, 0
      %s1103 = sadd.s32 %s1102, %s1100
      %s1104 = smul.addr %s1103, 4
      %s1105 = scalar_lea.vmem %s2, %s1104
      %p1106 = scmp.lt.s32.totalorder %s21, 1
      %s1107 = scalar_select %p1106, %s21, 1
      %p1108 = scmp.lt.s32.totalorder %s22, 0
      %s1109 = scalar_select %p1108, %s22, 0
      %s1110 = sadd.s32 %s1109, %s1107
      %s1111 = smul.addr %s1110, 8
      %s1112 = scalar_lea.vmem %s3, %s1111
      %p1113 = scmp.lt.s32.totalorder %s21, 1
      %s1114 = scalar_select %p1113, %s21, 1
      %p1115 = scmp.lt.s32.totalorder %s22, 0
      %s1116 = scalar_select %p1115, %s22, 0
      %s1117 = sadd.s32 %s1116, %s1114
      %s1118 = smul.addr %s1117, 8
      %s1119 = scalar_lea.vmem %s4, %s1118
      // Predicated region
      $region37: #{block_residual_forward.4} parent=27 // pred_check
        %p1120 = pneg %p111
      $region38: #{block_residual_forward.4} parent=27 // pred_check_branch
        %1122 = sbr.rel (%p1120) target = $region40
      $region39: #{block_residual_forward.4} parent=27 // pred_region
        %s1123 = smul.u32 32, %s21
      $region40: #{block_residual_forward.4} parent=27 // pred_fallthru
        _
      // Predicated region
      $region41: #{block_residual_forward.4} parent=27 // pred_check
        %p1124 = pneg %p139
      $region42: #{block_residual_forward.4} parent=27 // pred_check_branch
        %1126 = sbr.rel (%p1124) target = $region44
      $region43: #{block_residual_forward.4} parent=27 // pred_region
        _
      $region44: #{block_residual_forward.4} parent=27 // pred_fallthru
        _
      // Predicated region
      $region45: #{block_residual_forward.4} parent=27 // pred_check
        %p1127 = pneg %p167
      $region46: #{block_residual_forward.4} parent=27 // pred_check_branch
        %1129 = sbr.rel (%p1127) target = $region48
      $region47: #{block_residual_forward.4} parent=27 // pred_region
        _
      $region48: #{block_residual_forward.4} parent=27 // pred_fallthru
        _
    $region28: #{block_residual_forward.4} parent=5 // pred_fallthru
      _
    %p1130 = scmp.le.s32.totalorder 2, %s11
    // Predicated region
    $region49: #{block_residual_forward.4} parent=5 // pred_check
      %p1131 = pneg %p1130
    $region50: #{block_residual_forward.4} parent=5 // pred_check_branch
      %1133 = sbr.rel (%p1131) target = $region52
    $region51: #{block_residual_forward.4} parent=5 // pred_region
      %s1134 = ssub.s32 %s11, 2
      // Predicated region
      $region53: #{block_residual_forward.4} parent=51 // pred_check
        %p1135 = pneg %p117
      $region54: #{block_residual_forward.4} parent=51 // pred_check_branch
        %1137 = sbr.rel (%p1135) target = $region56
      $region55: #{block_residual_forward.4} parent=51 // pred_region
        %s1138 = smul.u32 32, %s24
        %p1139 = scmp.lt.s32.totalorder %s1138, 63
        %s1140 = scalar_select %p1139, %s1138, 63
        %p1141 = scmp.lt.s32.totalorder %s25, 0
        %s1142 = scalar_select %p1141, %s25, 0
        %s1143 = sadd.s32 %s1142, %s1140
        %s1144 = smul.addr %s1143, 4
        %s1145 = scalar_lea.vmem %s2, %s1144
      $region56: #{block_residual_forward.4} parent=51 // pred_fallthru
        _
      // Predicated region
      $region57: #{block_residual_forward.4} parent=51 // pred_check
        %p1146 = pneg %p145
      $region58: #{block_residual_forward.4} parent=51 // pred_check_branch
        %1148 = sbr.rel (%p1146) target = $region60
      $region59: #{block_residual_forward.4} parent=51 // pred_region
        %p1149 = scmp.lt.s32.totalorder %s24, 1
        %s1150 = scalar_select %p1149, %s24, 1
        %p1151 = scmp.lt.s32.totalorder %s25, 0
        %s1152 = scalar_select %p1151, %s25, 0
        %s1153 = sadd.s32 %s1152, %s1150
        %s1154 = smul.addr %s1153, 8
        %s1155 = scalar_lea.vmem %s3, %s1154
      $region60: #{block_residual_forward.4} parent=51 // pred_fallthru
        _
      // Predicated region
      $region61: #{block_residual_forward.4} parent=51 // pred_check
        %p1156 = pneg %p173
      $region62: #{block_residual_forward.4} parent=51 // pred_check_branch
        %1158 = sbr.rel (%p1156) target = $region64
      $region63: #{block_residual_forward.4} parent=51 // pred_region
        %p1159 = scmp.lt.s32.totalorder %s24, 1
        %s1160 = scalar_select %p1159, %s24, 1
        %p1161 = scmp.lt.s32.totalorder %s25, 0
        %s1162 = scalar_select %p1161, %s25, 0
        %s1163 = sadd.s32 %s1162, %s1160
        %s1164 = smul.addr %s1163, 8
        %s1165 = scalar_lea.vmem %s4, %s1164
      $region64: #{block_residual_forward.4} parent=51 // pred_fallthru
        _
    $region52: #{block_residual_forward.4} parent=5 // pred_fallthru
      _
  $region6: #{block_residual_forward.4} parent=0 // loop_footer
    %s15 = sadd.s32 1, %s11
  $region7: #{block_residual_forward.4} parent=0 // loop_footer_branch
    %10 = sbr.rel target = $region3
  $region8: #{block_residual_forward.4} parent=0 // loop_exit
    _

// kernel: block_residual_forward.7
$region0: #{block_residual_forward.7}
  #allocation0 [shape = 'u32[]', space=smem, size = 0x4, offset = 0x4, fixed_abs, tag = 'smem constant byte address 0x4 - core index']
  #allocation1 [shape = 'u32[144,128]{1,0:T(1,128)}', space=vmem, size = 0x12000, scoped, tag = 'internal scratch']
  %s0 = inlined_call_operand.vmem [shape: bf16[512,128], index: 0, kind: input, shape index: {}]
  %s1 = inlined_call_operand.vmem [shape: f32[1,128], index: 1, kind: input, shape index: {}]
  %s2 = inlined_call_operand.vmem [shape: f32[1,128], index: 2, kind: input, shape index: {}]
  %s3 = inlined_call_operand.vmem [shape: bf16[512,128], index: 3, kind: input, shape index: {}]
  %s4 = inlined_call_operand.vmem [shape: f32[512,128], index: 4, kind: output, shape index: {}]
  %s5 = sld [smem:[#allocation0]]
  $region49: #{block_residual_forward.7} parent=0
    _
  %s7 = ssub.s32 1, %s5
  %s8 = scalar_select 0, %s7, %s5
  loop: start=0, step=1, limit=4
  $region2: #{block_residual_forward.7} parent=0 // loop_pre_header
    _
  $region3: #{block_residual_forward.7} parent=0 // loop_header
    %s10 = sphi 0, %s14
    %p11 = scmp.ge.s32.totalorder %s10, 4
    %s20 = sphi 0, %s22
    %s23 = sphi 0, %s20
    %s24 = sphi 0, %s23
    %s40 = sphi 0, %s24
    %s44 = sphi 0, %s44
    %s46 = sphi 0, %s44
    %s47 = sphi 0, %s46
    %s61 = sphi 0, %s47
    %s65 = sphi 0, %s65
    %s67 = sphi 0, %s65
    %s68 = sphi 0, %s67
    %s82 = sphi 0, %s68
    %s88 = sphi 0, %s90
    %s91 = sphi 0, %s88
    %s92 = sphi 0, %s91
    %s108 = sphi 0, %s92
    %s114 = sphi 0, %s116
    %s117 = sphi 0, %s114
    %s118 = sphi 0, %s117
    %s134 = sphi 0, %s118
  $region4: #{block_residual_forward.7} parent=0 // loop_header_branch
    %13 = sbr.rel (%p11) target = $region8
  $region5: #{block_residual_forward.7} parent=0 // loop_body
    %s15 = ssub.s32 %s10, 1
    %s16 = ssub.s32 %s10, 2
    %s17 = sadd.s32 %s10, 1
    %s18 = ssub.s32 %s10, %s17
    %p19 = scmp.eq.s32.totalorder %s18, 0
    %s21 = sadd.s32 %s20, 1
    %s22 = scalar_select %p19, %s20, %s21
    %p25 = pneg %p19
    %p26 = scmp.eq.s32.totalorder %s10, 1
    %p27 = por %p25, %p26
    %p28 = scmp.ne.s32.totalorder %s20, %s23
    %p29 = scmp.eq.s32.totalorder %s10, 0
    %p30 = por %p28, %p29
    %p31 = scmp.ne.s32.totalorder %s20, %s23
    %p32 = scmp.eq.s32.totalorder %s15, 1
    %p33 = por %p31, %p32
    %p34 = scmp.ne.s32.totalorder %s23, %s24
    %p35 = scmp.eq.s32.totalorder %s15, 0
    %p36 = por %p34, %p35
    %p37 = scmp.ne.s32.totalorder %s23, %s24
    %p38 = scmp.eq.s32.totalorder %s16, 1
    %p39 = por %p37, %p38
    %p41 = scmp.ne.s32.totalorder %s24, %s40
    %p42 = scmp.eq.s32.totalorder %s16, 0
    %p43 = por %p41, %p42
    %s45 = sadd.s32 %s44, 1
    %p48 = scmp.eq.s32.totalorder %s10, 1
    %p49 = scmp.ne.s32.totalorder %s44, %s46
    %p50 = scmp.eq.s32.totalorder %s10, 0
    %p51 = por %p49, %p50
    %p52 = scmp.ne.s32.totalorder %s44, %s46
    %p53 = scmp.eq.s32.totalorder %s15, 1
    %p54 = por %p52, %p53
    %p55 = scmp.ne.s32.totalorder %s46, %s47
    %p56 = scmp.eq.s32.totalorder %s15, 0
    %p57 = por %p55, %p56
    %p58 = scmp.ne.s32.totalorder %s46, %s47
    %p59 = scmp.eq.s32.totalorder %s16, 1
    %p60 = por %p58, %p59
    %p62 = scmp.ne.s32.totalorder %s47, %s61
    %p63 = scmp.eq.s32.totalorder %s16, 0
    %p64 = por %p62, %p63
    %s66 = sadd.s32 %s65, 1
    %p69 = scmp.eq.s32.totalorder %s10, 1
    %p70 = scmp.ne.s32.totalorder %s65, %s67
    %p71 = scmp.eq.s32.totalorder %s10, 0
    %p72 = por %p70, %p71
    %p73 = scmp.ne.s32.totalorder %s65, %s67
    %p74 = scmp.eq.s32.totalorder %s15, 1
    %p75 = por %p73, %p74
    %p76 = scmp.ne.s32.totalorder %s67, %s68
    %p77 = scmp.eq.s32.totalorder %s15, 0
    %p78 = por %p76, %p77
    %p79 = scmp.ne.s32.totalorder %s67, %s68
    %p80 = scmp.eq.s32.totalorder %s16, 1
    %p81 = por %p79, %p80
    %p83 = scmp.ne.s32.totalorder %s68, %s82
    %p84 = scmp.eq.s32.totalorder %s16, 0
    %p85 = por %p83, %p84
    %s86 = ssub.s32 %s10, %s17
    %p87 = scmp.eq.s32.totalorder %s86, 0
    %s89 = sadd.s32 %s88, 1
    %s90 = scalar_select %p87, %s88, %s89
    %p93 = pneg %p87
    %p94 = scmp.eq.s32.totalorder %s10, 1
    %p95 = por %p93, %p94
    %p96 = scmp.ne.s32.totalorder %s88, %s91
    %p97 = scmp.eq.s32.totalorder %s10, 0
    %p98 = por %p96, %p97
    %p99 = scmp.ne.s32.totalorder %s88, %s91
    %p100 = scmp.eq.s32.totalorder %s15, 1
    %p101 = por %p99, %p100
    %p102 = scmp.ne.s32.totalorder %s91, %s92
    %p103 = scmp.eq.s32.totalorder %s15, 0
    %p104 = por %p102, %p103
    %p105 = scmp.ne.s32.totalorder %s91, %s92
    %p106 = scmp.eq.s32.totalorder %s16, 1
    %p107 = por %p105, %p106
    %p109 = scmp.ne.s32.totalorder %s92, %s108
    %p110 = scmp.eq.s32.totalorder %s16, 0
    %p111 = por %p109, %p110
    %s112 = ssub.s32 %s10, %s17
    %p113 = scmp.eq.s32.totalorder %s112, 0
    %s115 = sadd.s32 %s114, 1
    %s116 = scalar_select %p113, %s114, %s115
    %p119 = pneg %p113
    %p120 = scmp.eq.s32.totalorder %s10, 1
    %p121 = por %p119, %p120
    %p122 = scmp.ne.s32.totalorder %s114, %s117
    %p123 = scmp.eq.s32.totalorder %s10, 0
    %p124 = por %p122, %p123
    %p125 = scmp.ne.s32.totalorder %s114, %s117
    %p126 = scmp.eq.s32.totalorder %s15, 1
    %p127 = por %p125, %p126
    %p128 = scmp.ne.s32.totalorder %s117, %s118
    %p129 = scmp.eq.s32.totalorder %s15, 0
    %p130 = por %p128, %p129
    %p131 = scmp.ne.s32.totalorder %s117, %s118
    %p132 = scmp.eq.s32.totalorder %s16, 1
    %p133 = por %p131, %p132
    %p135 = scmp.ne.s32.totalorder %s118, %s134
    %p136 = scmp.eq.s32.totalorder %s16, 0
    %p137 = por %p135, %p136
    %p138 = scmp.le.s32.totalorder 1, %s10
    %p139 = scmp.lt.s32.totalorder %s10, 3
    %p140 = pnand %p138, %p139
    %p141 = pneg %p140
    // Predicated region
    $region9: #{block_residual_forward.7} parent=5 // pred_check
      _
    $region10: #{block_residual_forward.7} parent=5 // pred_check_branch
      %143 = sbr.rel (%p140) target = $region12
    $region11: #{block_residual_forward.7} parent=5 // pred_region
      %s144 = ssub.s32 %s10, 1
      // Predicated region
      $region13: #{block_residual_forward.7} parent=11 // pred_check
        %p145 = pneg %p57
      $region14: #{block_residual_forward.7} parent=11 // pred_check_branch
        %147 = sbr.rel (%p145) target = $region16
      $region15: #{block_residual_forward.7} parent=11 // pred_region
        _
      $region16: #{block_residual_forward.7} parent=11 // pred_fallthru
        _
      // Predicated region
      $region17: #{block_residual_forward.7} parent=11 // pred_check
        %p148 = pneg %p78
      $region18: #{block_residual_forward.7} parent=11 // pred_check_branch
        %150 = sbr.rel (%p148) target = $region20
      $region19: #{block_residual_forward.7} parent=11 // pred_region
        _
      $region20: #{block_residual_forward.7} parent=11 // pred_fallthru
        _
    $region12: #{block_residual_forward.7} parent=5 // pred_fallthru
      _
    %p151 = scmp.lt.s32.totalorder %s10, 2
    // Predicated region
    $region21: #{block_residual_forward.7} parent=5 // pred_check
      %p152 = pneg %p151
    $region22: #{block_residual_forward.7} parent=5 // pred_check_branch
      %154 = sbr.rel (%p152) target = $region24
    $region23: #{block_residual_forward.7} parent=5 // pred_region
      // Predicated region
      $region25: #{block_residual_forward.7} parent=23 // pred_check
        %p155 = pneg %p30
      $region26: #{block_residual_forward.7} parent=23 // pred_check_branch
        %157 = sbr.rel (%p155) target = $region28
      $region27: #{block_residual_forward.7} parent=23 // pred_region
        %s158 = smul.u32 32, %s10
        %p159 = scmp.lt.s32.totalorder %s158, 63
        %s160 = scalar_select %p159, %s158, 63
        %s161 = smul.addr %s160, 4
        %s162 = scalar_lea.vmem %s0, %s161
        %s163 = smul.u32 32, %s10
      $region28: #{block_residual_forward.7} parent=23 // pred_fallthru
        _
      // Predicated region
      $region29: #{block_residual_forward.7} parent=23 // pred_check
        %p164 = pneg %p98
      $region30: #{block_residual_forward.7} parent=23 // pred_check_branch
        %166 = sbr.rel (%p164) target = $region32
      $region31: #{block_residual_forward.7} parent=23 // pred_region
        %s167 = smul.u32 32, %s10
        %p168 = scmp.lt.s32.totalorder %s167, 63
        %s169 = scalar_select %p168, %s167, 63
        %s170 = smul.addr %s169, 4
        %s171 = scalar_lea.vmem %s3, %s170
        %s172 = smul.u32 32, %s10
      $region32: #{block_residual_forward.7} parent=23 // pred_fallthru
        _
    $region24: #{block_residual_forward.7} parent=5 // pred_fallthru
      _
    %p173 = scmp.le.s32.totalorder 1, %s10
    %p174 = scmp.lt.s32.totalorder %s10, 3
    %p175 = pnand %p173, %p174
    %p176 = pneg %p175
    // Predicated region
    $region33: #{block_residual_forward.7} parent=5 // pred_check
      _
    $region34: #{block_residual_forward.7} parent=5 // pred_check_branch
      %178 = sbr.rel (%p175) target = $region36
    $region35: #{block_residual_forward.7} parent=5 // pred_region
      %s179 = ssub.s32 %s10, 1
      %s180 = smul.u32 32, %s15
      %p181 = scmp.lt.s32.totalorder %s180, 63
      %s182 = scalar_select %p181, %s180, 63
      %s183 = smul.addr %s182, 4
      %s184 = scalar_lea.vmem %s0, %s183
      %p185 = pneg %p36
      %p186 = pneg %p33
      %p187 = pneg %p57
      %p188 = pneg %p54
      %p189 = pneg %p78
      %p190 = pneg %p75
      %s191 = smul.u32 32, %s15
      %p192 = scmp.lt.s32.totalorder %s191, 63
      %s193 = scalar_select %p192, %s191, 63
      %s194 = smul.addr %s193, 4
      %s195 = scalar_lea.vmem %s3, %s194
      %p196 = pneg %p104
      %p197 = pneg %p101
      %p198 = pneg %p130
      %p199 = pneg %p127
      %s200 = smul.u32 32, %s15
      %p201 = scmp.lt.s32.totalorder %s200, 63
      %s202 = scalar_select %p201, %s200, 63
      %s203 = smul.addr %s202, 8
      %s204 = scalar_lea.vmem %s4, %s203
      %s205 = smul.u32 32, %s15
      %p206 = scmp.lt.s32.totalorder %s205, 63
      %s207 = scalar_select %p206, %s205, 63
      %s208 = smul.addr %s207, 4
      %s209 = scalar_lea.vmem %s0, %s208
      %s210 = smul.u32 32, %s15
      %s211 = smul.u32 32, %s15
      %p212 = scmp.lt.s32.totalorder %s211, 63
      %s213 = scalar_select %p212, %s211, 63
      %s214 = smul.addr %s213, 4
      %s215 = scalar_lea.vmem %s3, %s214
      %s216 = smul.u32 32, %s15
      %s217 = smul.u32 32, %s15
      %p218 = scmp.lt.s32.totalorder %s217, 63
      %s219 = scalar_select %p218, %s217, 63
      %s220 = smul.addr %s219, 8
      %s221 = scalar_lea.vmem %s4, %s220
      %s222 = smul.u32 32, %s15
      %v223 = vld [vmem:[%s209] sm:$0xf]
      %v224 = vld [vmem:[%s209 + $0x4] sm:$0xf]
      %v225 = vld [vmem:[%s209 + $0x8] sm:$0xf]
      %v226 = vld [vmem:[%s209 + $0xc] sm:$0xf]
      %v227 = vld [vmem:[%s209 + $0x10] sm:$0xf]
      %v228 = vld [vmem:[%s209 + $0x14] sm:$0xf]
      %v229 = vld [vmem:[%s209 + $0x18] sm:$0xf]
      %v230 = vld [vmem:[%s209 + $0x1c] sm:$0xf]
      %v231 = vld [vmem:[%s209 + $0x20] sm:$0xf]
      %v232 = vld [vmem:[%s209 + $0x24] sm:$0xf]
      %v233 = vld [vmem:[%s209 + $0x28] sm:$0xf]
      %v234 = vld [vmem:[%s209 + $0x2c] sm:$0xf]
      %v235 = vld [vmem:[%s209 + $0x30] sm:$0xf]
      %v236 = vld [vmem:[%s209 + $0x34] sm:$0xf]
      %v237 = vld [vmem:[%s209 + $0x38] sm:$0xf]
      %v238 = vld [vmem:[%s209 + $0x3c] sm:$0xf]
      %v239 = vld [vmem:[%s209 + $0x40] sm:$0xf]
      %v240 = vld [vmem:[%s209 + $0x44] sm:$0xf]
      %v241 = vld [vmem:[%s209 + $0x48] sm:$0xf]
      %v242 = vld [vmem:[%s209 + $0x4c] sm:$0xf]
      %v243 = vld [vmem:[%s209 + $0x50] sm:$0xf]
      %v244 = vld [vmem:[%s209 + $0x54] sm:$0xf]
      %v245 = vld [vmem:[%s209 + $0x58] sm:$0xf]
      %v246 = vld [vmem:[%s209 + $0x5c] sm:$0xf]
      %v247 = vld [vmem:[%s209 + $0x60] sm:$0xf]
      %v248 = vld [vmem:[%s209 + $0x64] sm:$0xf]
      %v249 = vld [vmem:[%s209 + $0x68] sm:$0xf]
      %v250 = vld [vmem:[%s209 + $0x6c] sm:$0xf]
      %v251 = vld [vmem:[%s209 + $0x70] sm:$0xf]
      %v252 = vld [vmem:[%s209 + $0x74] sm:$0xf]
      %v253 = vld [vmem:[%s209 + $0x78] sm:$0xf]
      %v254 = vld [vmem:[%s209 + $0x7c] sm:$0xf]
      %v255 = vunpack.c.l.bf16 %v223
      %v256 = vunpack.c.l.bf16 %v224
      %v257 = vunpack.c.l.bf16 %v225
      %v258 = vunpack.c.l.bf16 %v226
      %v259 = vunpack.c.l.bf16 %v227
      %v260 = vunpack.c.l.bf16 %v228
      %v261 = vunpack.c.l.bf16 %v229
      %v262 = vunpack.c.l.bf16 %v230
      %v263 = vunpack.c.l.bf16 %v231
      %v264 = vunpack.c.l.bf16 %v232
      %v265 = vunpack.c.l.bf16 %v233
      %v266 = vunpack.c.l.bf16 %v234
      %v267 = vunpack.c.l.bf16 %v235
      %v268 = vunpack.c.l.bf16 %v236
      %v269 = vunpack.c.l.bf16 %v237
      %v270 = vunpack.c.l.bf16 %v238
      %v271 = vunpack.c.l.bf16 %v239
      %v272 = vunpack.c.l.bf16 %v240
      %v273 = vunpack.c.l.bf16 %v241
      %v274 = vunpack.c.l.bf16 %v242
      %v275 = vunpack.c.l.bf16 %v243
      %v276 = vunpack.c.l.bf16 %v244
      %v277 = vunpack.c.l.bf16 %v245
      %v278 = vunpack.c.l.bf16 %v246
      %v279 = vunpack.c.l.bf16 %v247
      %v280 = vunpack.c.l.bf16 %v248
      %v281 = vunpack.c.l.bf16 %v249
      %v282 = vunpack.c.l.bf16 %v250
      %v283 = vunpack.c.l.bf16 %v251
      %v284 = vunpack.c.l.bf16 %v252
      %v285 = vunpack.c.l.bf16 %v253
      %v286 = vunpack.c.l.bf16 %v254
      %v287 = vld [vmem:[%s1] sm:$0x1]
      %v289 = vlaneseq
      %v290 = vshrl.u32 %v289, 7
      %v291 = vsub.s32 0, %v290
      %v292 = vrot.slane %v287, %v291
      %v294 = vmul.f32 %v255, %v292
      %v295 = vmul.f32 %v256, %v292
      %v296 = vmul.f32 %v257, %v292
      %v297 = vmul.f32 %v258, %v292
      %v298 = vmul.f32 %v259, %v292
      %v299 = vmul.f32 %v260, %v292
      %v300 = vmul.f32 %v261, %v292
      %v301 = vmul.f32 %v262, %v292
      %v302 = vmul.f32 %v263, %v292
      %v303 = vmul.f32 %v264, %v292
      %v304 = vmul.f32 %v265, %v292
      %v305 = vmul.f32 %v266, %v292
      %v306 = vmul.f32 %v267, %v292
      %v307 = vmul.f32 %v268, %v292
      %v308 = vmul.f32 %v269, %v292
      %v309 = vmul.f32 %v270, %v292
      %v310 = vmul.f32 %v271, %v292
      %v311 = vmul.f32 %v272, %v292
      %v312 = vmul.f32 %v273, %v292
      %v313 = vmul.f32 %v274, %v292
      %v314 = vmul.f32 %v275, %v292
      %v315 = vmul.f32 %v276, %v292
      %v316 = vmul.f32 %v277, %v292
      %v317 = vmul.f32 %v278, %v292
      %v318 = vmul.f32 %v279, %v292
      %v319 = vmul.f32 %v280, %v292
      %v320 = vmul.f32 %v281, %v292
      %v321 = vmul.f32 %v282, %v292
      %v322 = vmul.f32 %v283, %v292
      %v323 = vmul.f32 %v284, %v292
      %v324 = vmul.f32 %v285, %v292
      %v325 = vmul.f32 %v286, %v292
      %v326 = vld [vmem:[%s2] sm:$0x1]
      %v328 = vlaneseq
      %v329 = vshrl.u32 %v328, 7
      %v330 = vsub.s32 0, %v329
      %v331 = vrot.slane %v326, %v330
      %v333 = vadd.f32 %v294, %v331
      %v334 = vadd.f32 %v295, %v331
      %v335 = vadd.f32 %v296, %v331
      %v336 = vadd.f32 %v297, %v331
      %v337 = vadd.f32 %v298, %v331
      %v338 = vadd.f32 %v299, %v331
      %v339 = vadd.f32 %v300, %v331
      %v340 = vadd.f32 %v301, %v331
      %v341 = vadd.f32 %v302, %v331
      %v342 = vadd.f32 %v303, %v331
      %v343 = vadd.f32 %v304, %v331
      %v344 = vadd.f32 %v305, %v331
      %v345 = vadd.f32 %v306, %v331
      %v346 = vadd.f32 %v307, %v331
      %v347 = vadd.f32 %v308, %v331
      %v348 = vadd.f32 %v309, %v331
      %v349 = vadd.f32 %v310, %v331
      %v350 = vadd.f32 %v311, %v331
      %v351 = vadd.f32 %v312, %v331
      %v352 = vadd.f32 %v313, %v331
      %v353 = vadd.f32 %v314, %v331
      %v354 = vadd.f32 %v315, %v331
      %v355 = vadd.f32 %v316, %v331
      %v356 = vadd.f32 %v317, %v331
      %v357 = vadd.f32 %v318, %v331
      %v358 = vadd.f32 %v319, %v331
      %v359 = vadd.f32 %v320, %v331
      %v360 = vadd.f32 %v321, %v331
      %v361 = vadd.f32 %v322, %v331
      %v362 = vadd.f32 %v323, %v331
      %v363 = vadd.f32 %v324, %v331
      %v364 = vadd.f32 %v325, %v331
      %v365 = vld [vmem:[%s215] sm:$0xf]
      %v366 = vld [vmem:[%s215 + $0x4] sm:$0xf]
      %v367 = vld [vmem:[%s215 + $0x8] sm:$0xf]
      %v368 = vld [vmem:[%s215 + $0xc] sm:$0xf]
      %v369 = vld [vmem:[%s215 + $0x10] sm:$0xf]
      %v370 = vld [vmem:[%s215 + $0x14] sm:$0xf]
      %v371 = vld [vmem:[%s215 + $0x18] sm:$0xf]
      %v372 = vld [vmem:[%s215 + $0x1c] sm:$0xf]
      %v373 = vld [vmem:[%s215 + $0x20] sm:$0xf]
      %v374 = vld [vmem:[%s215 + $0x24] sm:$0xf]
      %v375 = vld [vmem:[%s215 + $0x28] sm:$0xf]
      %v376 = vld [vmem:[%s215 + $0x2c] sm:$0xf]
      %v377 = vld [vmem:[%s215 + $0x30] sm:$0xf]
      %v378 = vld [vmem:[%s215 + $0x34] sm:$0xf]
      %v379 = vld [vmem:[%s215 + $0x38] sm:$0xf]
      %v380 = vld [vmem:[%s215 + $0x3c] sm:$0xf]
      %v381 = vld [vmem:[%s215 + $0x40] sm:$0xf]
      %v382 = vld [vmem:[%s215 + $0x44] sm:$0xf]
      %v383 = vld [vmem:[%s215 + $0x48] sm:$0xf]
      %v384 = vld [vmem:[%s215 + $0x4c] sm:$0xf]
      %v385 = vld [vmem:[%s215 + $0x50] sm:$0xf]
      %v386 = vld [vmem:[%s215 + $0x54] sm:$0xf]
      %v387 = vld [vmem:[%s215 + $0x58] sm:$0xf]
      %v388 = vld [vmem:[%s215 + $0x5c] sm:$0xf]
      %v389 = vld [vmem:[%s215 + $0x60] sm:$0xf]
      %v390 = vld [vmem:[%s215 + $0x64] sm:$0xf]
      %v391 = vld [vmem:[%s215 + $0x68] sm:$0xf]
      %v392 = vld [vmem:[%s215 + $0x6c] sm:$0xf]
      %v393 = vld [vmem:[%s215 + $0x70] sm:$0xf]
      %v394 = vld [vmem:[%s215 + $0x74] sm:$0xf]
      %v395 = vld [vmem:[%s215 + $0x78] sm:$0xf]
      %v396 = vld [vmem:[%s215 + $0x7c] sm:$0xf]
      %v397 = vunpack.c.l.bf16 %v365
      %v398 = vunpack.c.l.bf16 %v366
      %v399 = vunpack.c.l.bf16 %v367
      %v400 = vunpack.c.l.bf16 %v368
      %v401 = vunpack.c.l.bf16 %v369
      %v402 = vunpack.c.l.bf16 %v370
      %v403 = vunpack.c.l.bf16 %v371
      %v404 = vunpack.c.l.bf16 %v372
      %v405 = vunpack.c.l.bf16 %v373
      %v406 = vunpack.c.l.bf16 %v374
      %v407 = vunpack.c.l.bf16 %v375
      %v408 = vunpack.c.l.bf16 %v376
      %v409 = vunpack.c.l.bf16 %v377
      %v410 = vunpack.c.l.bf16 %v378
      %v411 = vunpack.c.l.bf16 %v379
      %v412 = vunpack.c.l.bf16 %v380
      %v413 = vunpack.c.l.bf16 %v381
      %v414 = vunpack.c.l.bf16 %v382
      %v415 = vunpack.c.l.bf16 %v383
      %v416 = vunpack.c.l.bf16 %v384
      %v417 = vunpack.c.l.bf16 %v385
      %v418 = vunpack.c.l.bf16 %v386
      %v419 = vunpack.c.l.bf16 %v387
      %v420 = vunpack.c.l.bf16 %v388
      %v421 = vunpack.c.l.bf16 %v389
      %v422 = vunpack.c.l.bf16 %v390
      %v423 = vunpack.c.l.bf16 %v391
      %v424 = vunpack.c.l.bf16 %v392
      %v425 = vunpack.c.l.bf16 %v393
      %v426 = vunpack.c.l.bf16 %v394
      %v427 = vunpack.c.l.bf16 %v395
      %v428 = vunpack.c.l.bf16 %v396
      %v429 = vadd.f32 %v333, %v397
      %v430 = vadd.f32 %v334, %v398
      %v431 = vadd.f32 %v335, %v399
      %v432 = vadd.f32 %v336, %v400
      %v433 = vadd.f32 %v337, %v401
      %v434 = vadd.f32 %v338, %v402
      %v435 = vadd.f32 %v339, %v403
      %v436 = vadd.f32 %v340, %v404
      %v437 = vadd.f32 %v341, %v405
      %v438 = vadd.f32 %v342, %v406
      %v439 = vadd.f32 %v343, %v407
      %v440 = vadd.f32 %v344, %v408
      %v441 = vadd.f32 %v345, %v409
      %v442 = vadd.f32 %v346, %v410
      %v443 = vadd.f32 %v347, %v411
      %v444 = vadd.f32 %v348, %v412
      %v445 = vadd.f32 %v349, %v413
      %v446 = vadd.f32 %v350, %v414
      %v447 = vadd.f32 %v351, %v415
      %v448 = vadd.f32 %v352, %v416
      %v449 = vadd.f32 %v353, %v417
      %v450 = vadd.f32 %v354, %v418
      %v451 = vadd.f32 %v355, %v419
      %v452 = vadd.f32 %v356, %v420
      %v453 = vadd.f32 %v357, %v421
      %v454 = vadd.f32 %v358, %v422
      %v455 = vadd.f32 %v359, %v423
      %v456 = vadd.f32 %v360, %v424
      %v457 = vadd.f32 %v361, %v425
      %v458 = vadd.f32 %v362, %v426
      %v459 = vadd.f32 %v363, %v427
      %v460 = vadd.f32 %v364, %v428
      %v461 = vmax.f32 %v429, 0.0
      %v462 = vmax.f32 %v430, 0.0
      %v463 = vmax.f32 %v431, 0.0
      %v464 = vmax.f32 %v432, 0.0
      %v465 = vmax.f32 %v433, 0.0
      %v466 = vmax.f32 %v434, 0.0
      %v467 = vmax.f32 %v435, 0.0
      %v468 = vmax.f32 %v436, 0.0
      %v469 = vmax.f32 %v437, 0.0
      %v470 = vmax.f32 %v438, 0.0
      %v471 = vmax.f32 %v439, 0.0
      %v472 = vmax.f32 %v440, 0.0
      %v473 = vmax.f32 %v441, 0.0
      %v474 = vmax.f32 %v442, 0.0
      %v475 = vmax.f32 %v443, 0.0
      %v476 = vmax.f32 %v444, 0.0
      %v477 = vmax.f32 %v445, 0.0
      %v478 = vmax.f32 %v446, 0.0
      %v479 = vmax.f32 %v447, 0.0
      %v480 = vmax.f32 %v448, 0.0
      %v481 = vmax.f32 %v449, 0.0
      %v482 = vmax.f32 %v450, 0.0
      %v483 = vmax.f32 %v451, 0.0
      %v484 = vmax.f32 %v452, 0.0
      %v485 = vmax.f32 %v453, 0.0
      %v486 = vmax.f32 %v454, 0.0
      %v487 = vmax.f32 %v455, 0.0
      %v488 = vmax.f32 %v456, 0.0
      %v489 = vmax.f32 %v457, 0.0
      %v490 = vmax.f32 %v458, 0.0
      %v491 = vmax.f32 %v459, 0.0
      %v492 = vmax.f32 %v460, 0.0
      %493 = vst [vmem:[%s221] sm:$0xff] %v461
      %494 = vst [vmem:[%s221 + $0x8] sm:$0xff] %v462
      %495 = vst [vmem:[%s221 + $0x10] sm:$0xff] %v463
      %496 = vst [vmem:[%s221 + $0x18] sm:$0xff] %v464
      %497 = vst [vmem:[%s221 + $0x20] sm:$0xff] %v465
      %498 = vst [vmem:[%s221 + $0x28] sm:$0xff] %v466
      %499 = vst [vmem:[%s221 + $0x30] sm:$0xff] %v467
      %500 = vst [vmem:[%s221 + $0x38] sm:$0xff] %v468
      %501 = vst [vmem:[%s221 + $0x40] sm:$0xff] %v469
      %502 = vst [vmem:[%s221 + $0x48] sm:$0xff] %v470
      %503 = vst [vmem:[%s221 + $0x50] sm:$0xff] %v471
      %504 = vst [vmem:[%s221 + $0x58] sm:$0xff] %v472
      %505 = vst [vmem:[%s221 + $0x60] sm:$0xff] %v473
      %506 = vst [vmem:[%s221 + $0x68] sm:$0xff] %v474
      %507 = vst [vmem:[%s221 + $0x70] sm:$0xff] %v475
      %508 = vst [vmem:[%s221 + $0x78] sm:$0xff] %v476
      %509 = vst [vmem:[%s221 + $0x80] sm:$0xff] %v477
      %510 = vst [vmem:[%s221 + $0x88] sm:$0xff] %v478
      %511 = vst [vmem:[%s221 + $0x90] sm:$0xff] %v479
      %512 = vst [vmem:[%s221 + $0x98] sm:$0xff] %v480
      %513 = vst [vmem:[%s221 + $0xa0] sm:$0xff] %v481
      %514 = vst [vmem:[%s221 + $0xa8] sm:$0xff] %v482
      %515 = vst [vmem:[%s221 + $0xb0] sm:$0xff] %v483
      %516 = vst [vmem:[%s221 + $0xb8] sm:$0xff] %v484
      %517 = vst [vmem:[%s221 + $0xc0] sm:$0xff] %v485
      %518 = vst [vmem:[%s221 + $0xc8] sm:$0xff] %v486
      %519 = vst [vmem:[%s221 + $0xd0] sm:$0xff] %v487
      %520 = vst [vmem:[%s221 + $0xd8] sm:$0xff] %v488
      %521 = vst [vmem:[%s221 + $0xe0] sm:$0xff] %v489
      %522 = vst [vmem:[%s221 + $0xe8] sm:$0xff] %v490
      %523 = vst [vmem:[%s221 + $0xf0] sm:$0xff] %v491
      %524 = vst [vmem:[%s221 + $0xf8] sm:$0xff] %v492
      %s525 = smul.u32 32, %s15
      %p526 = scmp.lt.s32.totalorder %s525, 63
      %s527 = scalar_select %p526, %s525, 63
      %s528 = smul.addr %s527, 8
      %s529 = scalar_lea.vmem %s4, %s528
      // Predicated region
      $region37: #{block_residual_forward.7} parent=35 // pred_check
        %p530 = pneg %p127
      $region38: #{block_residual_forward.7} parent=35 // pred_check_branch
        %532 = sbr.rel (%p530) target = $region40
      $region39: #{block_residual_forward.7} parent=35 // pred_region
        %s533 = smul.u32 32, %s15
      $region40: #{block_residual_forward.7} parent=35 // pred_fallthru
        _
    $region36: #{block_residual_forward.7} parent=5 // pred_fallthru
      _
    %p534 = scmp.le.s32.totalorder 2, %s10
    // Predicated region
    $region41: #{block_residual_forward.7} parent=5 // pred_check
      %p535 = pneg %p534
    $region42: #{block_residual_forward.7} parent=5 // pred_check_branch
      %537 = sbr.rel (%p535) target = $region44
    $region43: #{block_residual_forward.7} parent=5 // pred_region
      %s538 = ssub.s32 %s10, 2
      // Predicated region
      $region45: #{block_residual_forward.7} parent=43 // pred_check
        %p539 = pneg %p133
      $region46: #{block_residual_forward.7} parent=43 // pred_check_branch
        %541 = sbr.rel (%p539) target = $region48
      $region47: #{block_residual_forward.7} parent=43 // pred_region
        %s542 = smul.u32 32, %s16
        %p543 = scmp.lt.s32.totalorder %s542, 63
        %s544 = scalar_select %p543, %s542, 63
        %s545 = smul.addr %s544, 8
        %s546 = scalar_lea.vmem %s4, %s545
      $region48: #{block_residual_forward.7} parent=43 // pred_fallthru
        _
    $region44: #{block_residual_forward.7} parent=5 // pred_fallthru
      _
  $region6: #{block_residual_forward.7} parent=0 // loop_footer
    %s14 = sadd.s32 1, %s10
  $region7: #{block_residual_forward.7} parent=0 // loop_footer_branch
    %9 = sbr.rel target = $region3
  $region8: #{block_residual_forward.7} parent=0 // loop_exit
    _

// kernel: block_residual_forward.6
$region0: #{block_residual_forward.6}
  #allocation0 [shape = 'u32[]', space=smem, size = 0x4, offset = 0x4, fixed_abs, tag = 'smem constant byte address 0x4 - core index']
  #allocation1 [shape = 'u32[144,128]{1,0:T(1,128)}', space=vmem, size = 0x12000, scoped, tag = 'internal scratch']
  #allocation2 [shape = 'f32[256,128]{1,0:T(8,128)}', space=vmem, size = 0x20000, scoped, tag = 'scratch operand']
  %s0 = inlined_call_operand.vmem [shape: bf16[512,1152], index: 0, kind: input, shape index: {}]
  %s1 = inlined_call_operand.vmem [shape: bf16[1152,128], index: 1, kind: input, shape index: {}]
  %s2 = inlined_call_operand.vmem [shape: bf16[512,128], index: 2, kind: output, shape index: {0}]
  %s3 = inlined_call_operand.vmem [shape: f32[16,128], index: 3, kind: output, shape index: {1}]
  %s4 = inlined_call_operand.vmem [shape: f32[16,128], index: 4, kind: output, shape index: {2}]
  %5 = xla_tuple %s2, %s3, %s4
  %s6 = sld [smem:[#allocation0]]
  $region91: #{block_residual_forward.6} parent=0
    _
  %s8 = ssub.s32 1, %s6
  %s9 = scalar_select 0, %s8, %s6
  $region1: #{block_residual_forward.6} parent=0
    #allocation3 [shape = 'u8[393216]{0}', space=vmem, size = 0x60000, scoped, tag = 'input window, operand 0']
    loop: start=0, step=1, limit=8
    $region2: #{block_residual_forward.6} parent=1 // loop_pre_header
      _
    $region3: #{block_residual_forward.6} parent=1 // loop_header
      %s11 = sphi 0, %s15
      %p12 = scmp.ge.s32.totalorder %s11, 8
      %s18 = sphi 0, %s37
      %s19 = sphi 0, %s33
      %s20 = sphi 0, %s29
      %s21 = sphi 0, %s18
      %s22 = sphi 0, %s19
      %s23 = sphi 0, %s20
      %s24 = sphi 0, %s21
      %s25 = sphi 0, %s22
      %s26 = sphi 0, %s23
      %s42 = sphi 0, %s44
      %s45 = sphi 0, %s42
      %s46 = sphi 0, %s45
      %s62 = sphi 0, %s46
      %s70 = sphi 0, %s72
      %s73 = sphi 0, %s70
      %s74 = sphi 0, %s73
      %s90 = sphi 0, %s74
      %s98 = sphi 0, %s100
      %s101 = sphi 0, %s98
      %s102 = sphi 0, %s101
      %s118 = sphi 0, %s102
      %s126 = sphi 0, %s128
      %s129 = sphi 0, %s126
      %s130 = sphi 0, %s129
      %s146 = sphi 0, %s130
      %s154 = sphi 0, %s156
      %s157 = sphi 0, %s154
      %s158 = sphi 0, %s157
      %s174 = sphi 0, %s158
    $region4: #{block_residual_forward.6} parent=1 // loop_header_branch
      %14 = sbr.rel (%p12) target = $region8
    $region5: #{block_residual_forward.6} parent=1 // loop_body
      %s16 = ssub.s32 %s11, 1
      %s17 = ssub.s32 %s11, 2
      %s27 = sadd.s32 1, %s20
      %p28 = scmp.ge.s32.totalorder %s27, 3
      %s29 = scalar_select %p28, 0, %s27
      %s30 = sadd.s32 1, %s19
      %s31 = scalar_select %p28, %s30, %s19
      %p32 = scmp.ge.s32.totalorder %s31, 1
      %s33 = scalar_select %p32, 0, %s31
      %s34 = sadd.s32 1, %s18
      %s35 = scalar_select %p32, %s34, %s18
      %p36 = scmp.ge.s32.totalorder %s35, 2
      %s37 = scalar_select %p36, 0, %s35
      %s38 = ssub.s32 %s18, %s37
      %s39 = ssub.s32 %s20, %s29
      %s40 = sor.u32 %s38, %s39
      %p41 = scmp.eq.s32.totalorder %s40, 0
      %s43 = sadd.s32 %s42, 1
      %s44 = scalar_select %p41, %s42, %s43
      %p47 = pneg %p41
      %p48 = scmp.eq.s32.totalorder %s11, 5
      %p49 = por %p47, %p48
      %p50 = scmp.ne.s32.totalorder %s42, %s45
      %p51 = scmp.eq.s32.totalorder %s11, 0
      %p52 = por %p50, %p51
      %p53 = scmp.ne.s32.totalorder %s42, %s45
      %p54 = scmp.eq.s32.totalorder %s16, 5
      %p55 = por %p53, %p54
      %p56 = scmp.ne.s32.totalorder %s45, %s46
      %p57 = scmp.eq.s32.totalorder %s16, 0
      %p58 = por %p56, %p57
      %p59 = scmp.ne.s32.totalorder %s45, %s46
      %p60 = scmp.eq.s32.totalorder %s17, 5
      %p61 = por %p59, %p60
      %p63 = scmp.ne.s32.totalorder %s46, %s62
      %p64 = scmp.eq.s32.totalorder %s17, 0
      %p65 = por %p63, %p64
      %s66 = ssub.s32 %s20, %s29
      %s67 = ssub.s32 %s19, %s33
      %s68 = sor.u32 %s66, %s67
      %p69 = scmp.eq.s32.totalorder %s68, 0
      %s71 = sadd.s32 %s70, 1
      %s72 = scalar_select %p69, %s70, %s71
      %p75 = pneg %p69
      %p76 = scmp.eq.s32.totalorder %s11, 5
      %p77 = por %p75, %p76
      %p78 = scmp.ne.s32.totalorder %s70, %s73
      %p79 = scmp.eq.s32.totalorder %s11, 0
      %p80 = por %p78, %p79
      %p81 = scmp.ne.s32.totalorder %s70, %s73
      %p82 = scmp.eq.s32.totalorder %s16, 5
      %p83 = por %p81, %p82
      %p84 = scmp.ne.s32.totalorder %s73, %s74
      %p85 = scmp.eq.s32.totalorder %s16, 0
      %p86 = por %p84, %p85
      %p87 = scmp.ne.s32.totalorder %s73, %s74
      %p88 = scmp.eq.s32.totalorder %s17, 5
      %p89 = por %p87, %p88
      %p91 = scmp.ne.s32.totalorder %s74, %s90
      %p92 = scmp.eq.s32.totalorder %s17, 0
      %p93 = por %p91, %p92
      %s94 = ssub.s32 %s18, %s37
      %s95 = ssub.s32 %s19, %s33
      %s96 = sor.u32 %s94, %s95
      %p97 = scmp.eq.s32.totalorder %s96, 0
      %s99 = sadd.s32 %s98, 1
      %s100 = scalar_select %p97, %s98, %s99
      %p103 = pneg %p97
      %p104 = scmp.eq.s32.totalorder %s11, 5
      %p105 = por %p103, %p104
      %p106 = scmp.ne.s32.totalorder %s98, %s101
      %p107 = scmp.eq.s32.totalorder %s11, 0
      %p108 = por %p106, %p107
      %p109 = scmp.ne.s32.totalorder %s98, %s101
      %p110 = scmp.eq.s32.totalorder %s16, 5
      %p111 = por %p109, %p110
      %p112 = scmp.ne.s32.totalorder %s101, %s102
      %p113 = scmp.eq.s32.totalorder %s16, 0
      %p114 = por %p112, %p113
      %p115 = scmp.ne.s32.totalorder %s101, %s102
      %p116 = scmp.eq.s32.totalorder %s17, 5
      %p117 = por %p115, %p116
      %p119 = scmp.ne.s32.totalorder %s102, %s118
      %p120 = scmp.eq.s32.totalorder %s17, 0
      %p121 = por %p119, %p120
      %s122 = ssub.s32 %s18, %s37
      %s123 = ssub.s32 %s19, %s33
      %s124 = sor.u32 %s122, %s123
      %p125 = scmp.eq.s32.totalorder %s124, 0
      %s127 = sadd.s32 %s126, 1
      %s128 = scalar_select %p125, %s126, %s127
      %p131 = pneg %p125
      %p132 = scmp.eq.s32.totalorder %s11, 5
      %p133 = por %p131, %p132
      %p134 = scmp.ne.s32.totalorder %s126, %s129
      %p135 = scmp.eq.s32.totalorder %s11, 0
      %p136 = por %p134, %p135
      %p137 = scmp.ne.s32.totalorder %s126, %s129
      %p138 = scmp.eq.s32.totalorder %s16, 5
      %p139 = por %p137, %p138
      %p140 = scmp.ne.s32.totalorder %s129, %s130
      %p141 = scmp.eq.s32.totalorder %s16, 0
      %p142 = por %p140, %p141
      %p143 = scmp.ne.s32.totalorder %s129, %s130
      %p144 = scmp.eq.s32.totalorder %s17, 5
      %p145 = por %p143, %p144
      %p147 = scmp.ne.s32.totalorder %s130, %s146
      %p148 = scmp.eq.s32.totalorder %s17, 0
      %p149 = por %p147, %p148
      %s150 = ssub.s32 %s18, %s37
      %s151 = ssub.s32 %s19, %s33
      %s152 = sor.u32 %s150, %s151
      %p153 = scmp.eq.s32.totalorder %s152, 0
      %s155 = sadd.s32 %s154, 1
      %s156 = scalar_select %p153, %s154, %s155
      %p159 = pneg %p153
      %p160 = scmp.eq.s32.totalorder %s11, 5
      %p161 = por %p159, %p160
      %p162 = scmp.ne.s32.totalorder %s154, %s157
      %p163 = scmp.eq.s32.totalorder %s11, 0
      %p164 = por %p162, %p163
      %p165 = scmp.ne.s32.totalorder %s154, %s157
      %p166 = scmp.eq.s32.totalorder %s16, 5
      %p167 = por %p165, %p166
      %p168 = scmp.ne.s32.totalorder %s157, %s158
      %p169 = scmp.eq.s32.totalorder %s16, 0
      %p170 = por %p168, %p169
      %p171 = scmp.ne.s32.totalorder %s157, %s158
      %p172 = scmp.eq.s32.totalorder %s17, 5
      %p173 = por %p171, %p172
      %p175 = scmp.ne.s32.totalorder %s158, %s174
      %p176 = scmp.eq.s32.totalorder %s17, 0
      %p177 = por %p175, %p176
      %p178 = scmp.le.s32.totalorder 1, %s11
      %p179 = scmp.lt.s32.totalorder %s11, 7
      %p180 = pnand %p178, %p179
      %p181 = pneg %p180
      // Predicated region
      $region9: #{block_residual_forward.6} parent=5 // pred_check
        _
      $region10: #{block_residual_forward.6} parent=5 // pred_check_branch
        %183 = sbr.rel (%p180) target = $region12
      $region11: #{block_residual_forward.6} parent=5 // pred_region
        %s184 = ssub.s32 %s11, 1
      $region12: #{block_residual_forward.6} parent=5 // pred_fallthru
        _
      %p185 = scmp.lt.s32.totalorder %s11, 6
      // Predicated region
      $region13: #{block_residual_forward.6} parent=5 // pred_check
        %p186 = pneg %p185
      $region14: #{block_residual_forward.6} parent=5 // pred_check_branch
        %188 = sbr.rel (%p186) target = $region16
      $region15: #{block_residual_forward.6} parent=5 // pred_region
        // Predicated region
        $region17: #{block_residual_forward.6} parent=15 // pred_check
          %p189 = pneg %p52
        $region18: #{block_residual_forward.6} parent=15 // pred_check_branch
          %191 = sbr.rel (%p189) target = $region20
        $region19: #{block_residual_forward.6} parent=15 // pred_region
          %s192 = sand.u32 %s42, 1
          %s193 = sand.u32 %s42, 1
          %s194 = smul.addr %s193, 384
          %s195 = scalar_lea.vmem [#allocation3], %s194
          %s196 = smul.u32 32, %s18
          %s197 = smul.u32 3, %s20
          %s198 = smul.addr %s196, 9
          %s199 = sadd.s32 %s197, %s198
          %s200 = smul.addr %s199, 4
          %s201 = scalar_lea.vmem %s0, %s200
          // Predicated region
          $region21: #{block_residual_forward.6} parent=19 // pred_check
            _
          $region22: #{block_residual_forward.6} parent=19 // pred_check_branch
            %203 = sbr.rel (0) target = $region24
          $region23: #{block_residual_forward.6} parent=19 // pred_region
            // Predicated region
            $region25: #{block_residual_forward.6} parent=23 // pred_check
              _
            $region26: #{block_residual_forward.6} parent=23 // pred_check_branch
              %205 = sbr.rel (0) target = $region28
            $region27: #{block_residual_forward.6} parent=23 // pred_region
              %s206 = scalar_lea.vmem %s201, 8
              %s207 = scalar_lea.vmem %s195, 8 [#allocation3]
              loop: start=0, step=1, limit=1
              $region29: #{block_residual_forward.6} parent=27 // loop_pre_header
                _
              $region30: #{block_residual_forward.6} parent=27 // loop_header
                %s209 = sphi 0, %s213
                %p210 = scmp.ge.s32.totalorder %s209, 1
                %s214 = sphi %s201, %s201
                %s215 = sphi %s195, %s195
              $region31: #{block_residual_forward.6} parent=27 // loop_header_branch
                %212 = sbr.rel (%p210) target = $region35
              $region32: #{block_residual_forward.6} parent=27 // loop_body
                %v216 = vld [vmem:[%s214] sm:$0xff]
                %217 = vst [vmem:[%s215] sm:$0xff] %v216
                %v218 = vld [vmem:[%s214 + $0x24] sm:$0xff]
                %219 = vst [vmem:[%s215 + $0xc] sm:$0xff] %v218
                %v220 = vld [vmem:[%s214 + $0x48] sm:$0xff]
                %221 = vst [vmem:[%s215 + $0x18] sm:$0xff] %v220
                %v222 = vld [vmem:[%s214 + $0x6c] sm:$0xff]
                %223 = vst [vmem:[%s215 + $0x24] sm:$0xff] %v222
                %v224 = vld [vmem:[%s214 + $0x90] sm:$0xff]
                %225 = vst [vmem:[%s215 + $0x30] sm:$0xff] %v224
                %v226 = vld [vmem:[%s214 + $0xb4] sm:$0xff]
                %227 = vst [vmem:[%s215 + $0x3c] sm:$0xff] %v226
                %v228 = vld [vmem:[%s214 + $0xd8] sm:$0xff]
                %229 = vst [vmem:[%s215 + $0x48] sm:$0xff] %v228
                %v230 = vld [vmem:[%s214 + $0xfc] sm:$0xff]
                %231 = vst [vmem:[%s215 + $0x54] sm:$0xff] %v230
                %v232 = vld [vmem:[%s214 + $0x120] sm:$0xff]
                %233 = vst [vmem:[%s215 + $0x60] sm:$0xff] %v232
                %v234 = vld [vmem:[%s214 + $0x144] sm:$0xff]
                %235 = vst [vmem:[%s215 + $0x6c] sm:$0xff] %v234
                %v236 = vld [vmem:[%s214 + $0x168] sm:$0xff]
                %237 = vst [vmem:[%s215 + $0x78] sm:$0xff] %v236
                %v238 = vld [vmem:[%s214 + $0x18c] sm:$0xff]
                %239 = vst [vmem:[%s215 + $0x84] sm:$0xff] %v238
                %v240 = vld [vmem:[%s214 + $0x1b0] sm:$0xff]
                %241 = vst [vmem:[%s215 + $0x90] sm:$0xff] %v240
                %v242 = vld [vmem:[%s214 + $0x1d4] sm:$0xff]
                %243 = vst [vmem:[%s215 + $0x9c] sm:$0xff] %v242
                %v244 = vld [vmem:[%s214 + $0x1f8] sm:$0xff]
                %245 = vst [vmem:[%s215 + $0xa8] sm:$0xff] %v244
                %v246 = vld [vmem:[%s214 + $0x21c] sm:$0xff]
                %247 = vst [vmem:[%s215 + $0xb4] sm:$0xff] %v246
                %v248 = vld [vmem:[%s214 + $0x240] sm:$0xff]
                %249 = vst [vmem:[%s215 + $0xc0] sm:$0xff] %v248
                %v250 = vld [vmem:[%s214 + $0x264] sm:$0xff]
                %251 = vst [vmem:[%s215 + $0xcc] sm:$0xff] %v250
                %v252 = vld [vmem:[%s214 + $0x288] sm:$0xff]
                %253 = vst [vmem:[%s215 + $0xd8] sm:$0xff] %v252
                %v254 = vld [vmem:[%s214 + $0x2ac] sm:$0xff]
                %255 = vst [vmem:[%s215 + $0xe4] sm:$0xff] %v254
                %v256 = vld [vmem:[%s214 + $0x2d0] sm:$0xff]
                %257 = vst [vmem:[%s215 + $0xf0] sm:$0xff] %v256
                %v258 = vld [vmem:[%s214 + $0x2f4] sm:$0xff]
                %259 = vst [vmem:[%s215 + $0xfc] sm:$0xff] %v258
                %v260 = vld [vmem:[%s214 + $0x318] sm:$0xff]
                %261 = vst [vmem:[%s215 + $0x108] sm:$0xff] %v260
                %v262 = vld [vmem:[%s214 + $0x33c] sm:$0xff]
                %263 = vst [vmem:[%s215 + $0x114] sm:$0xff] %v262
                %v264 = vld [vmem:[%s214 + $0x360] sm:$0xff]
                %265 = vst [vmem:[%s215 + $0x120] sm:$0xff] %v264
                %v266 = vld [vmem:[%s214 + $0x384] sm:$0xff]
                %267 = vst [vmem:[%s215 + $0x12c] sm:$0xff] %v266
                %v268 = vld [vmem:[%s214 + $0x3a8] sm:$0xff]
                %269 = vst [vmem:[%s215 + $0x138] sm:$0xff] %v268
                %v270 = vld [vmem:[%s214 + $0x3cc] sm:$0xff]
                %271 = vst [vmem:[%s215 + $0x144] sm:$0xff] %v270
                %v272 = vld [vmem:[%s214 + $0x3f0] sm:$0xff]
                %273 = vst [vmem:[%s215 + $0x150] sm:$0xff] %v272
                %v274 = vld [vmem:[%s214 + $0x414] sm:$0xff]
                %275 = vst [vmem:[%s215 + $0x15c] sm:$0xff] %v274
                %v276 = vld [vmem:[%s214 + $0x438] sm:$0xff]
                %277 = vst [vmem:[%s215 + $0x168] sm:$0xff] %v276
                %v278 = vld [vmem:[%s214 + $0x45c] sm:$0xff]
                %279 = vst [vmem:[%s215 + $0x174] sm:$0xff] %v278
              $region33: #{block_residual_forward.6} parent=27 // loop_footer
                %s213 = sadd.s32 1, %s209
              $region34: #{block_residual_forward.6} parent=27 // loop_footer_branch
                %208 = sbr.rel target = $region30
              $region35: #{block_residual_forward.6} parent=27 // loop_exit
                _
              %s281 = ssub.s32 16, 1
              loop: start=0, step=1, limit=1
              $region36: #{block_residual_forward.6} parent=27 // loop_pre_header
                _
              $region37: #{block_residual_forward.6} parent=27 // loop_header
                %s283 = sphi 0, %s287
                %p284 = scmp.ge.s32.totalorder %s283, 1
                %s288 = sphi %s206, %s206
                %s289 = sphi %s207, %s207
              $region38: #{block_residual_forward.6} parent=27 // loop_header_branch
                %286 = sbr.rel (%p284) target = $region42
              $region39: #{block_residual_forward.6} parent=27 // loop_body
                %v290 = vld [vmem:[%s288] sm:%s281]
                %291 = vst [vmem:[%s289] sm:%s281] %v290
                %v292 = vld [vmem:[%s288 + $0x24] sm:%s281]
                %293 = vst [vmem:[%s289 + $0xc] sm:%s281] %v292
                %v294 = vld [vmem:[%s288 + $0x48] sm:%s281]
                %295 = vst [vmem:[%s289 + $0x18] sm:%s281] %v294
                %v296 = vld [vmem:[%s288 + $0x6c] sm:%s281]
                %297 = vst [vmem:[%s289 + $0x24] sm:%s281] %v296
                %v298 = vld [vmem:[%s288 + $0x90] sm:%s281]
                %299 = vst [vmem:[%s289 + $0x30] sm:%s281] %v298
                %v300 = vld [vmem:[%s288 + $0xb4] sm:%s281]
                %301 = vst [vmem:[%s289 + $0x3c] sm:%s281] %v300
                %v302 = vld [vmem:[%s288 + $0xd8] sm:%s281]
                %303 = vst [vmem:[%s289 + $0x48] sm:%s281] %v302
                %v304 = vld [vmem:[%s288 + $0xfc] sm:%s281]
                %305 = vst [vmem:[%s289 + $0x54] sm:%s281] %v304
                %v306 = vld [vmem:[%s288 + $0x120] sm:%s281]
                %307 = vst [vmem:[%s289 + $0x60] sm:%s281] %v306
                %v308 = vld [vmem:[%s288 + $0x144] sm:%s281]
                %309 = vst [vmem:[%s289 + $0x6c] sm:%s281] %v308
                %v310 = vld [vmem:[%s288 + $0x168] sm:%s281]
                %311 = vst [vmem:[%s289 + $0x78] sm:%s281] %v310
                %v312 = vld [vmem:[%s288 + $0x18c] sm:%s281]
                %313 = vst [vmem:[%s289 + $0x84] sm:%s281] %v312
                %v314 = vld [vmem:[%s288 + $0x1b0] sm:%s281]
                %315 = vst [vmem:[%s289 + $0x90] sm:%s281] %v314
                %v316 = vld [vmem:[%s288 + $0x1d4] sm:%s281]
                %317 = vst [vmem:[%s289 + $0x9c] sm:%s281] %v316
                %v318 = vld [vmem:[%s288 + $0x1f8] sm:%s281]
                %319 = vst [vmem:[%s289 + $0xa8] sm:%s281] %v318
                %v320 = vld [vmem:[%s288 + $0x21c] sm:%s281]
                %321 = vst [vmem:[%s289 + $0xb4] sm:%s281] %v320
                %v322 = vld [vmem:[%s288 + $0x240] sm:%s281]
                %323 = vst [vmem:[%s289 + $0xc0] sm:%s281] %v322
                %v324 = vld [vmem:[%s288 + $0x264] sm:%s281]
                %325 = vst [vmem:[%s289 + $0xcc] sm:%s281] %v324
                %v326 = vld [vmem:[%s288 + $0x288] sm:%s281]
                %327 = vst [vmem:[%s289 + $0xd8] sm:%s281] %v326
                %v328 = vld [vmem:[%s288 + $0x2ac] sm:%s281]
                %329 = vst [vmem:[%s289 + $0xe4] sm:%s281] %v328
                %v330 = vld [vmem:[%s288 + $0x2d0] sm:%s281]
                %331 = vst [vmem:[%s289 + $0xf0] sm:%s281] %v330
                %v332 = vld [vmem:[%s288 + $0x2f4] sm:%s281]
                %333 = vst [vmem:[%s289 + $0xfc] sm:%s281] %v332
                %v334 = vld [vmem:[%s288 + $0x318] sm:%s281]
                %335 = vst [vmem:[%s289 + $0x108] sm:%s281] %v334
                %v336 = vld [vmem:[%s288 + $0x33c] sm:%s281]
                %337 = vst [vmem:[%s289 + $0x114] sm:%s281] %v336
                %v338 = vld [vmem:[%s288 + $0x360] sm:%s281]
                %339 = vst [vmem:[%s289 + $0x120] sm:%s281] %v338
                %v340 = vld [vmem:[%s288 + $0x384] sm:%s281]
                %341 = vst [vmem:[%s289 + $0x12c] sm:%s281] %v340
                %v342 = vld [vmem:[%s288 + $0x3a8] sm:%s281]
                %343 = vst [vmem:[%s289 + $0x138] sm:%s281] %v342
                %v344 = vld [vmem:[%s288 + $0x3cc] sm:%s281]
                %345 = vst [vmem:[%s289 + $0x144] sm:%s281] %v344
                %v346 = vld [vmem:[%s288 + $0x3f0] sm:%s281]
                %347 = vst [vmem:[%s289 + $0x150] sm:%s281] %v346
                %v348 = vld [vmem:[%s288 + $0x414] sm:%s281]
                %349 = vst [vmem:[%s289 + $0x15c] sm:%s281] %v348
                %v350 = vld [vmem:[%s288 + $0x438] sm:%s281]
                %351 = vst [vmem:[%s289 + $0x168] sm:%s281] %v350
                %v352 = vld [vmem:[%s288 + $0x45c] sm:%s281]
                %353 = vst [vmem:[%s289 + $0x174] sm:%s281] %v352
              $region40: #{block_residual_forward.6} parent=27 // loop_footer
                %s287 = sadd.s32 1, %s283
              $region41: #{block_residual_forward.6} parent=27 // loop_footer_branch
                %282 = sbr.rel target = $region37
              $region42: #{block_residual_forward.6} parent=27 // loop_exit
                _
            $region28: #{block_residual_forward.6} parent=23 // pred_fallthru
              _
          $region24: #{block_residual_forward.6} parent=19 // pred_fallthru
            _
          %354 = vnop
        $region20: #{block_residual_forward.6} parent=15 // pred_fallthru
          _
        // Predicated region
        $region43: #{block_residual_forward.6} parent=15 // pred_check
          %p355 = pneg %p80
        $region44: #{block_residual_forward.6} parent=15 // pred_check_branch
          %357 = sbr.rel (%p355) target = $region46
        $region45: #{block_residual_forward.6} parent=15 // pred_region
          %s358 = smul.u32 48, %s20
          %p359 = scmp.lt.s32.totalorder %s358, 143
          %s360 = scalar_select %p359, %s358, 143
          %p361 = scmp.lt.s32.totalorder %s19, 0
          %s362 = scalar_select %p361, %s19, 0
          %s363 = sadd.s32 %s362, %s360
          %s364 = smul.addr %s363, 4
          %s365 = scalar_lea.vmem %s1, %s364
          %s366 = smul.u32 48, %s20
        $region46: #{block_residual_forward.6} parent=15 // pred_fallthru
          _
      $region16: #{block_residual_forward.6} parent=5 // pred_fallthru
        _
      %p367 = scmp.le.s32.totalorder 1, %s11
      %p368 = scmp.lt.s32.totalorder %s11, 7
      %p369 = pnand %p367, %p368
      %p370 = pneg %p369
      // Predicated region
      $region47: #{block_residual_forward.6} parent=5 // pred_check
        _
      $region48: #{block_residual_forward.6} parent=5 // pred_check_branch
        %372 = sbr.rel (%p369) target = $region50
      $region49: #{block_residual_forward.6} parent=5 // pred_region
        %s373 = ssub.s32 %s11, 1
        %s374 = sand.u32 %s45, 1
        %s375 = sand.u32 %s45, 1
        %s376 = smul.addr %s375, 384
        %s377 = scalar_lea.vmem [#allocation3], %s376
        // Predicated region
        $region51: #{block_residual_forward.6} parent=49 // pred_check
          %p378 = pneg %p58
        $region52: #{block_residual_forward.6} parent=49 // pred_check_branch
          %380 = sbr.rel (%p378) target = $region54
        $region53: #{block_residual_forward.6} parent=49 // pred_region
          _
        $region54: #{block_residual_forward.6} parent=49 // pred_fallthru
          _
        %s381 = sand.u32 %s45, 1
        %s382 = sand.u32 %s45, 1
        %s383 = smul.addr %s382, 384
        %s384 = scalar_lea.vmem [#allocation3], %s383
        %p385 = pneg %p58
        %p386 = pneg %p55
        %s387 = smul.u32 48, %s23
        %p388 = scmp.lt.s32.totalorder %s387, 143
        %s389 = scalar_select %p388, %s387, 143
        %p390 = scmp.lt.s32.totalorder %s22, 0
        %s391 = scalar_select %p390, %s22, 0
        %s392 = sadd.s32 %s391, %s389
        %s393 = smul.addr %s392, 4
        %s394 = scalar_lea.vmem %s1, %s393
        %p395 = pneg %p86
        %p396 = pneg %p83
        %p397 = pneg %p114
        %p398 = pneg %p111
        %s399 = smul.u32 32, %s21
        %p400 = scmp.lt.s32.totalorder %s399, 63
        %s401 = scalar_select %p400, %s399, 63
        %p402 = scmp.lt.s32.totalorder %s22, 0
        %s403 = scalar_select %p402, %s22, 0
        %s404 = sadd.s32 %s403, %s401
        %s405 = smul.addr %s404, 4
        %s406 = scalar_lea.vmem %s2, %s405
        %p407 = pneg %p142
        %p408 = pneg %p139
        %p409 = scmp.lt.s32.totalorder %s21, 1
        %s410 = scalar_select %p409, %s21, 1
        %p411 = scmp.lt.s32.totalorder %s22, 0
        %s412 = scalar_select %p411, %s22, 0
        %s413 = sadd.s32 %s412, %s410
        %s414 = smul.addr %s413, 8
        %s415 = scalar_lea.vmem %s3, %s414
        %p416 = pneg %p170
        %p417 = pneg %p167
        %p418 = scmp.lt.s32.totalorder %s21, 1
        %s419 = scalar_select %p418, %s21, 1
        %p420 = scmp.lt.s32.totalorder %s22, 0
        %s421 = scalar_select %p420, %s22, 0
        %s422 = sadd.s32 %s421, %s419
        %s423 = smul.addr %s422, 8
        %s424 = scalar_lea.vmem %s4, %s423
        %s425 = smul.u32 32, %s21
        %s426 = smul.u32 3, %s23
        %s427 = smul.u32 48, %s23
        %p428 = scmp.lt.s32.totalorder %s427, 143
        %s429 = scalar_select %p428, %s427, 143
        %p430 = scmp.lt.s32.totalorder %s22, 0
        %s431 = scalar_select %p430, %s22, 0
        %s432 = sadd.s32 %s431, %s429
        %s433 = smul.addr %s432, 4
        %s434 = scalar_lea.vmem %s1, %s433
        %s435 = smul.u32 48, %s23
        %s436 = smul.u32 32, %s21
        %p437 = scmp.lt.s32.totalorder %s436, 63
        %s438 = scalar_select %p437, %s436, 63
        %p439 = scmp.lt.s32.totalorder %s22, 0
        %s440 = scalar_select %p439, %s22, 0
        %s441 = sadd.s32 %s440, %s438
        %s442 = smul.addr %s441, 4
        %s443 = scalar_lea.vmem %s2, %s442
        %s444 = smul.u32 32, %s21
        %p445 = scmp.lt.s32.totalorder %s21, 1
        %s446 = scalar_select %p445, %s21, 1
        %p447 = scmp.lt.s32.totalorder %s22, 0
        %s448 = scalar_select %p447, %s22, 0
        %s449 = sadd.s32 %s448, %s446
        %s450 = smul.addr %s449, 8
        %s451 = scalar_lea.vmem %s3, %s450
        %p452 = scmp.lt.s32.totalorder %s21, 1
        %s453 = scalar_select %p452, %s21, 1
        %p454 = scmp.lt.s32.totalorder %s22, 0
        %s455 = scalar_select %p454, %s22, 0
        %s456 = sadd.s32 %s455, %s453
        %s457 = smul.addr %s456, 8
        %s458 = scalar_lea.vmem %s4, %s457
        %p460 = scmp.eq.s32.totalorder %s23, 0
        // Predicated region
        $region55: #{block_residual_forward.6} parent=49 // pred_check
          %p461 = pneg %p460
        $region56: #{block_residual_forward.6} parent=49 // pred_check_branch
          %463 = sbr.rel (%p461) target = $region58
        $region57: #{block_residual_forward.6} parent=49 // pred_region
          %464 = vst [vmem:[#allocation2] sm:$0xff] 0.0
          %465 = vst [vmem:[#allocation2 + $0x8] sm:$0xff] 0.0
          %466 = vst [vmem:[#allocation2 + $0x10] sm:$0xff] 0.0
          %467 = vst [vmem:[#allocation2 + $0x18] sm:$0xff] 0.0
          %468 = vst [vmem:[#allocation2 + $0x20] sm:$0xff] 0.0
          %469 = vst [vmem:[#allocation2 + $0x28] sm:$0xff] 0.0
          %470 = vst [vmem:[#allocation2 + $0x30] sm:$0xff] 0.0
          %471 = vst [vmem:[#allocation2 + $0x38] sm:$0xff] 0.0
          %472 = vst [vmem:[#allocation2 + $0x40] sm:$0xff] 0.0
          %473 = vst [vmem:[#allocation2 + $0x48] sm:$0xff] 0.0
          %474 = vst [vmem:[#allocation2 + $0x50] sm:$0xff] 0.0
          %475 = vst [vmem:[#allocation2 + $0x58] sm:$0xff] 0.0
          %476 = vst [vmem:[#allocation2 + $0x60] sm:$0xff] 0.0
          %477 = vst [vmem:[#allocation2 + $0x68] sm:$0xff] 0.0
          %478 = vst [vmem:[#allocation2 + $0x70] sm:$0xff] 0.0
          %479 = vst [vmem:[#allocation2 + $0x78] sm:$0xff] 0.0
          %480 = vst [vmem:[#allocation2 + $0x80] sm:$0xff] 0.0
          %481 = vst [vmem:[#allocation2 + $0x88] sm:$0xff] 0.0
          %482 = vst [vmem:[#allocation2 + $0x90] sm:$0xff] 0.0
          %483 = vst [vmem:[#allocation2 + $0x98] sm:$0xff] 0.0
          %484 = vst [vmem:[#allocation2 + $0xa0] sm:$0xff] 0.0
          %485 = vst [vmem:[#allocation2 + $0xa8] sm:$0xff] 0.0
          %486 = vst [vmem:[#allocation2 + $0xb0] sm:$0xff] 0.0
          %487 = vst [vmem:[#allocation2 + $0xb8] sm:$0xff] 0.0
          %488 = vst [vmem:[#allocation2 + $0xc0] sm:$0xff] 0.0
          %489 = vst [vmem:[#allocation2 + $0xc8] sm:$0xff] 0.0
          %490 = vst [vmem:[#allocation2 + $0xd0] sm:$0xff] 0.0
          %491 = vst [vmem:[#allocation2 + $0xd8] sm:$0xff] 0.0
          %492 = vst [vmem:[#allocation2 + $0xe0] sm:$0xff] 0.0
          %493 = vst [vmem:[#allocation2 + $0xe8] sm:$0xff] 0.0
          %494 = vst [vmem:[#allocation2 + $0xf0] sm:$0xff] 0.0
          %495 = vst [vmem:[#allocation2 + $0xf8] sm:$0xff] 0.0
        $region58: #{block_residual_forward.6} parent=49 // pred_fallthru
          _
        %v496 = vld [vmem:[#allocation2] sm:$0xff]
        %v497 = vld [vmem:[#allocation2 + $0x8] sm:$0xff]
        %v498 = vld [vmem:[#allocation2 + $0x10] sm:$0xff]
        %v499 = vld [vmem:[#allocation2 + $0x18] sm:$0xff]
        %v500 = vld [vmem:[#allocation2 + $0x20] sm:$0xff]
        %v501 = vld [vmem:[#allocation2 + $0x28] sm:$0xff]
        %v502 = vld [vmem:[#allocation2 + $0x30] sm:$0xff]
        %v503 = vld [vmem:[#allocation2 + $0x38] sm:$0xff]
        %v504 = vld [vmem:[#allocation2 + $0x40] sm:$0xff]
        %v505 = vld [vmem:[#allocation2 + $0x48] sm:$0xff]
        %v506 = vld [vmem:[#allocation2 + $0x50] sm:$0xff]
        %v507 = vld [vmem:[#allocation2 + $0x58] sm:$0xff]
        %v508 = vld [vmem:[#allocation2 + $0x60] sm:$0xff]
        %v509 = vld [vmem:[#allocation2 + $0x68] sm:$0xff]
        %v510 = vld [vmem:[#allocation2 + $0x70] sm:$0xff]
        %v511 = vld [vmem:[#allocation2 + $0x78] sm:$0xff]
        %v512 = vld [vmem:[#allocation2 + $0x80] sm:$0xff]
        %v513 = vld [vmem:[#allocation2 + $0x88] sm:$0xff]
        %v514 = vld [vmem:[#allocation2 + $0x90] sm:$0xff]
        %v515 = vld [vmem:[#allocation2 + $0x98] sm:$0xff]
        %v516 = vld [vmem:[#allocation2 + $0xa0] sm:$0xff]
        %v517 = vld [vmem:[#allocation2 + $0xa8] sm:$0xff]
        %v518 = vld [vmem:[#allocation2 + $0xb0] sm:$0xff]
        %v519 = vld [vmem:[#allocation2 + $0xb8] sm:$0xff]
        %v520 = vld [vmem:[#allocation2 + $0xc0] sm:$0xff]
        %v521 = vld [vmem:[#allocation2 + $0xc8] sm:$0xff]
        %v522 = vld [vmem:[#allocation2 + $0xd0] sm:$0xff]
        %v523 = vld [vmem:[#allocation2 + $0xd8] sm:$0xff]
        %v524 = vld [vmem:[#allocation2 + $0xe0] sm:$0xff]
        %v525 = vld [vmem:[#allocation2 + $0xe8] sm:$0xff]
        %v526 = vld [vmem:[#allocation2 + $0xf0] sm:$0xff]
        %v527 = vld [vmem:[#allocation2 + $0xf8] sm:$0xff]
        %v528 = vld [vmem:[%s377] sm:$0xff]
        %v529 = vld [vmem:[%s377 + $0x8] sm:$0xf]
        %v530 = vld [vmem:[%s377 + $0xc] sm:$0xff]
        %v531 = vld [vmem:[%s377 + $0x14] sm:$0xf]
        %v532 = vld [vmem:[%s377 + $0x18] sm:$0xff]
        %v533 = vld [vmem:[%s377 + $0x20] sm:$0xf]
        %v534 = vld [vmem:[%s377 + $0x24] sm:$0xff]
        %v535 = vld [vmem:[%s377 + $0x2c] sm:$0xf]
        %v536 = vld [vmem:[%s377 + $0x30] sm:$0xff]
        %v537 = vld [vmem:[%s377 + $0x38] sm:$0xf]
        %v538 = vld [vmem:[%s377 + $0x3c] sm:$0xff]
        %v539 = vld [vmem:[%s377 + $0x44] sm:$0xf]
        %v540 = vld [vmem:[%s377 + $0x48] sm:$0xff]
        %v541 = vld [vmem:[%s377 + $0x50] sm:$0xf]
        %v542 = vld [vmem:[%s377 + $0x54] sm:$0xff]
        %v543 = vld [vmem:[%s377 + $0x5c] sm:$0xf]
        %v544 = vld [vmem:[%s377 + $0x60] sm:$0xff]
        %v545 = vld [vmem:[%s377 + $0x68] sm:$0xf]
        %v546 = vld [vmem:[%s377 + $0x6c] sm:$0xff]
        %v547 = vld [vmem:[%s377 + $0x74] sm:$0xf]
        %v548 = vld [vmem:[%s377 + $0x78] sm:$0xff]
        %v549 = vld [vmem:[%s377 + $0x80] sm:$0xf]
        %v550 = vld [vmem:[%s377 + $0x84] sm:$0xff]
        %v551 = vld [vmem:[%s377 + $0x8c] sm:$0xf]
        %v552 = vld [vmem:[%s377 + $0x90] sm:$0xff]
        %v553 = vld [vmem:[%s377 + $0x98] sm:$0xf]
        %v554 = vld [vmem:[%s377 + $0x9c] sm:$0xff]
        %v555 = vld [vmem:[%s377 + $0xa4] sm:$0xf]
        %v556 = vld [vmem:[%s377 + $0xa8] sm:$0xff]
        %v557 = vld [vmem:[%s377 + $0xb0] sm:$0xf]
        %v558 = vld [vmem:[%s377 + $0xb4] sm:$0xff]
        %v559 = vld [vmem:[%s377 + $0xbc] sm:$0xf]
        %v560 = vld [vmem:[%s377 + $0xc0] sm:$0xff]
        %v561 = vld [vmem:[%s377 + $0xc8] sm:$0xf]
        %v562 = vld [vmem:[%s377 + $0xcc] sm:$0xff]
        %v563 = vld [vmem:[%s377 + $0xd4] sm:$0xf]
        %v564 = vld [vmem:[%s377 + $0xd8] sm:$0xff]
        %v565 = vld [vmem:[%s377 + $0xe0] sm:$0xf]
        %v566 = vld [vmem:[%s377 + $0xe4] sm:$0xff]
        %v567 = vld [vmem:[%s377 + $0xec] sm:$0xf]
        %v568 = vld [vmem:[%s377 + $0xf0] sm:$0xff]
        %v569 = vld [vmem:[%s377 + $0xf8] sm:$0xf]
        %v570 = vld [vmem:[%s377 + $0xfc] sm:$0xff]
        %v571 = vld [vmem:[%s377 + $0x104] sm:$0xf]
        %v572 = vld [vmem:[%s377 + $0x108] sm:$0xff]
        %v573 = vld [vmem:[%s377 + $0x110] sm:$0xf]
        %v574 = vld [vmem:[%s377 + $0x114] sm:$0xff]
        %v575 = vld [vmem:[%s377 + $0x11c] sm:$0xf]
        %v576 = vld [vmem:[%s377 + $0x120] sm:$0xff]
        %v577 = vld [vmem:[%s377 + $0x128] sm:$0xf]
        %v578 = vld [vmem:[%s377 + $0x12c] sm:$0xff]
        %v579 = vld [vmem:[%s377 + $0x134] sm:$0xf]
        %v580 = vld [vmem:[%s377 + $0x138] sm:$0xff]
        %v581 = vld [vmem:[%s377 + $0x140] sm:$0xf]
        %v582 = vld [vmem:[%s377 + $0x144] sm:$0xff]
        %v583 = vld [vmem:[%s377 + $0x14c] sm:$0xf]
        %v584 = vld [vmem:[%s377 + $0x150] sm:$0xff]
        %v585 = vld [vmem:[%s377 + $0x158] sm:$0xf]
        %v586 = vld [vmem:[%s377 + $0x15c] sm:$0xff]
        %v587 = vld [vmem:[%s377 + $0x164] sm:$0xf]
        %v588 = vld [vmem:[%s377 + $0x168] sm:$0xff]
        %v589 = vld [vmem:[%s377 + $0x170] sm:$0xf]
        %v590 = vld [vmem:[%s377 + $0x174] sm:$0xff]
        %v591 = vld [vmem:[%s377 + $0x17c] sm:$0xf]
        %v592 = vld [vmem:[%s434] sm:$0xf]
        %v593 = vld [vmem:[%s434 + $0x4] sm:$0xf]
        %v594 = vld [vmem:[%s434 + $0x8] sm:$0xf]
        %v595 = vld [vmem:[%s434 + $0xc] sm:$0xf]
        %v596 = vld [vmem:[%s434 + $0x10] sm:$0xf]
        %v597 = vld [vmem:[%s434 + $0x14] sm:$0xf]
        %v598 = vld [vmem:[%s434 + $0x18] sm:$0xf]
        %v599 = vld [vmem:[%s434 + $0x1c] sm:$0xf]
        %v600 = vld [vmem:[%s434 + $0x20] sm:$0xf]
        %v601 = vld [vmem:[%s434 + $0x24] sm:$0xf]
        %v602 = vld [vmem:[%s434 + $0x28] sm:$0xf]
        %v603 = vld [vmem:[%s434 + $0x2c] sm:$0xf]
        %v604 = vld [vmem:[%s434 + $0x30] sm:$0xf]
        %v605 = vld [vmem:[%s434 + $0x34] sm:$0xf]
        %v606 = vld [vmem:[%s434 + $0x38] sm:$0xf]
        %v607 = vld [vmem:[%s434 + $0x3c] sm:$0xf]
        %v608 = vld [vmem:[%s434 + $0x40] sm:$0xf]
        %v609 = vld [vmem:[%s434 + $0x44] sm:$0xf]
        %v610 = vld [vmem:[%s434 + $0x48] sm:$0xf]
        %v611 = vld [vmem:[%s434 + $0x4c] sm:$0xf]
        %v612 = vld [vmem:[%s434 + $0x50] sm:$0xf]
        %v613 = vld [vmem:[%s434 + $0x54] sm:$0xf]
        %v614 = vld [vmem:[%s434 + $0x58] sm:$0xf]
        %v615 = vld [vmem:[%s434 + $0x5c] sm:$0xf]
        %v616 = vld [vmem:[%s434 + $0x60] sm:$0xf]
        %v617 = vld [vmem:[%s434 + $0x64] sm:$0xf]
        %v618 = vld [vmem:[%s434 + $0x68] sm:$0xf]
        %v619 = vld [vmem:[%s434 + $0x6c] sm:$0xf]
        %v620 = vld [vmem:[%s434 + $0x70] sm:$0xf]
        %v621 = vld [vmem:[%s434 + $0x74] sm:$0xf]
        %v622 = vld [vmem:[%s434 + $0x78] sm:$0xf]
        %v623 = vld [vmem:[%s434 + $0x7c] sm:$0xf]
        %v624 = vld [vmem:[%s434 + $0x80] sm:$0xf]
        %v625 = vld [vmem:[%s434 + $0x84] sm:$0xf]
        %v626 = vld [vmem:[%s434 + $0x88] sm:$0xf]
        %v627 = vld [vmem:[%s434 + $0x8c] sm:$0xf]
        %v628 = vld [vmem:[%s434 + $0x90] sm:$0xf]
        %v629 = vld [vmem:[%s434 + $0x94] sm:$0xf]
        %v630 = vld [vmem:[%s434 + $0x98] sm:$0xf]
        %v631 = vld [vmem:[%s434 + $0x9c] sm:$0xf]
        %v632 = vld [vmem:[%s434 + $0xa0] sm:$0xf]
        %v633 = vld [vmem:[%s434 + $0xa4] sm:$0xf]
        %v634 = vld [vmem:[%s434 + $0xa8] sm:$0xf]
        %v635 = vld [vmem:[%s434 + $0xac] sm:$0xf]
        %v636 = vld [vmem:[%s434 + $0xb0] sm:$0xf]
        %v637 = vld [vmem:[%s434 + $0xb4] sm:$0xf]
        %v638 = vld [vmem:[%s434 + $0xb8] sm:$0xf]
        %v639 = vld [vmem:[%s434 + $0xbc] sm:$0xf]
        %v704 = vunpack.c.l.b16 %v528
        %v705 = vunpack.c.h.b16 %v528
        %v706 = vunpack.c.l.b16 %v529
        %v707 = vunpack.c.l.b16 %v530
        %v708 = vunpack.c.h.b16 %v530
        %v709 = vunpack.c.l.b16 %v531
        %v710 = vunpack.c.l.b16 %v532
        %v711 = vunpack.c.h.b16 %v532
        %v712 = vunpack.c.l.b16 %v533
        %v713 = vunpack.c.l.b16 %v534
        %v714 = vunpack.c.h.b16 %v534
        %v715 = vunpack.c.l.b16 %v535
        %v716 = vunpack.c.l.b16 %v536
        %v717 = vunpack.c.h.b16 %v536
        %v718 = vunpack.c.l.b16 %v537
        %v719 = vunpack.c.l.b16 %v538
        %v720 = vunpack.c.h.b16 %v538
        %v721 = vunpack.c.l.b16 %v539
        %v722 = vunpack.c.l.b16 %v540
        %v723 = vunpack.c.h.b16 %v540
        %v724 = vunpack.c.l.b16 %v541
        %v725 = vunpack.c.l.b16 %v542
        %v726 = vunpack.c.h.b16 %v542
        %v727 = vunpack.c.l.b16 %v543
        %v728 = vunpack.c.l.b16 %v544
        %v729 = vunpack.c.h.b16 %v544
        %v730 = vunpack.c.l.b16 %v545
        %v731 = vunpack.c.l.b16 %v546
        %v732 = vunpack.c.h.b16 %v546
        %v733 = vunpack.c.l.b16 %v547
        %v734 = vunpack.c.l.b16 %v548
        %v735 = vunpack.c.h.b16 %v548
        %v736 = vunpack.c.l.b16 %v549
        %v737 = vunpack.c.l.b16 %v550
        %v738 = vunpack.c.h.b16 %v550
        %v739 = vunpack.c.l.b16 %v551
        %v740 = vunpack.c.l.b16 %v552
        %v741 = vunpack.c.h.b16 %v552
        %v742 = vunpack.c.l.b16 %v553
        %v743 = vunpack.c.l.b16 %v554
        %v744 = vunpack.c.h.b16 %v554
        %v745 = vunpack.c.l.b16 %v555
        %v746 = vunpack.c.l.b16 %v556
        %v747 = vunpack.c.h.b16 %v556
        %v748 = vunpack.c.l.b16 %v557
        %v749 = vunpack.c.l.b16 %v558
        %v750 = vunpack.c.h.b16 %v558
        %v751 = vunpack.c.l.b16 %v559
        %v752 = vunpack.c.l.b16 %v560
        %v753 = vunpack.c.h.b16 %v560
        %v754 = vunpack.c.l.b16 %v561
        %v755 = vunpack.c.l.b16 %v562
        %v756 = vunpack.c.h.b16 %v562
        %v757 = vunpack.c.l.b16 %v563
        %v758 = vunpack.c.l.b16 %v564
        %v759 = vunpack.c.h.b16 %v564
        %v760 = vunpack.c.l.b16 %v565
        %v761 = vunpack.c.l.b16 %v566
        %v762 = vunpack.c.h.b16 %v566
        %v763 = vunpack.c.l.b16 %v567
        %v764 = vunpack.c.l.b16 %v568
        %v765 = vunpack.c.h.b16 %v568
        %v766 = vunpack.c.l.b16 %v569
        %v767 = vunpack.c.l.b16 %v570
        %v768 = vunpack.c.h.b16 %v570
        %v769 = vunpack.c.l.b16 %v571
        %v770 = vunpack.c.l.b16 %v572
        %v771 = vunpack.c.h.b16 %v572
        %v772 = vunpack.c.l.b16 %v573
        %v773 = vunpack.c.l.b16 %v574
        %v774 = vunpack.c.h.b16 %v574
        %v775 = vunpack.c.l.b16 %v575
        %v776 = vunpack.c.l.b16 %v576
        %v777 = vunpack.c.h.b16 %v576
        %v778 = vunpack.c.l.b16 %v577
        %v779 = vunpack.c.l.b16 %v578
        %v780 = vunpack.c.h.b16 %v578
        %v781 = vunpack.c.l.b16 %v579
        %v782 = vunpack.c.l.b16 %v580
        %v783 = vunpack.c.h.b16 %v580
        %v784 = vunpack.c.l.b16 %v581
        %v785 = vunpack.c.l.b16 %v582
        %v786 = vunpack.c.h.b16 %v582
        %v787 = vunpack.c.l.b16 %v583
        %v788 = vunpack.c.l.b16 %v584
        %v789 = vunpack.c.h.b16 %v584
        %v790 = vunpack.c.l.b16 %v585
        %v791 = vunpack.c.l.b16 %v586
        %v792 = vunpack.c.h.b16 %v586
        %v793 = vunpack.c.l.b16 %v587
        %v794 = vunpack.c.l.b16 %v588
        %v795 = vunpack.c.h.b16 %v588
        %v796 = vunpack.c.l.b16 %v589
        %v797 = vunpack.c.l.b16 %v590
        %v798 = vunpack.c.h.b16 %v590
        %v799 = vunpack.c.l.b16 %v591
        %v800 = vpack.c.b16 %v707, %v704
        %v801 = vpack.c.b16 %v708, %v705
        %v802 = vpack.c.b16 %v709, %v706
        %v803 = vpack.c.b16 %v713, %v710
        %v804 = vpack.c.b16 %v714, %v711
        %v805 = vpack.c.b16 %v715, %v712
        %v806 = vpack.c.b16 %v719, %v716
        %v807 = vpack.c.b16 %v720, %v717
        %v808 = vpack.c.b16 %v721, %v718
        %v809 = vpack.c.b16 %v725, %v722
        %v810 = vpack.c.b16 %v726, %v723
        %v811 = vpack.c.b16 %v727, %v724
        %v812 = vpack.c.b16 %v731, %v728
        %v813 = vpack.c.b16 %v732, %v729
        %v814 = vpack.c.b16 %v733, %v730
        %v815 = vpack.c.b16 %v737, %v734
        %v816 = vpack.c.b16 %v738, %v735
        %v817 = vpack.c.b16 %v739, %v736
        %v818 = vpack.c.b16 %v743, %v740
        %v819 = vpack.c.b16 %v744, %v741
        %v820 = vpack.c.b16 %v745, %v742
        %v821 = vpack.c.b16 %v749, %v746
        %v822 = vpack.c.b16 %v750, %v747
        %v823 = vpack.c.b16 %v751, %v748
        %v824 = vpack.c.b16 %v755, %v752
        %v825 = vpack.c.b16 %v756, %v753
        %v826 = vpack.c.b16 %v757, %v754
        %v827 = vpack.c.b16 %v761, %v758
        %v828 = vpack.c.b16 %v762, %v759
        %v829 = vpack.c.b16 %v763, %v760
        %v830 = vpack.c.b16 %v767, %v764
        %v831 = vpack.c.b16 %v768, %v765
        %v832 = vpack.c.b16 %v769, %v766
        %v833 = vpack.c.b16 %v773, %v770
        %v834 = vpack.c.b16 %v774, %v771
        %v835 = vpack.c.b16 %v775, %v772
        %v836 = vpack.c.b16 %v779, %v776
        %v837 = vpack.c.b16 %v780, %v777
        %v838 = vpack.c.b16 %v781, %v778
        %v839 = vpack.c.b16 %v785, %v782
        %v840 = vpack.c.b16 %v786, %v783
        %v841 = vpack.c.b16 %v787, %v784
        %v842 = vpack.c.b16 %v791, %v788
        %v843 = vpack.c.b16 %v792, %v789
        %v844 = vpack.c.b16 %v793, %v790
        %v845 = vpack.c.b16 %v797, %v794
        %v846 = vpack.c.b16 %v798, %v795
        %v847 = vpack.c.b16 %v799, %v796
        %v944 = vunpack.c.l.b16 %v592
        %v945 = vunpack.c.l.b16 %v593
        %v946 = vunpack.c.l.b16 %v594
        %v947 = vunpack.c.l.b16 %v595
        %v948 = vunpack.c.l.b16 %v596
        %v949 = vunpack.c.l.b16 %v597
        %v950 = vunpack.c.l.b16 %v598
        %v951 = vunpack.c.l.b16 %v599
        %v952 = vunpack.c.l.b16 %v600
        %v953 = vunpack.c.l.b16 %v601
        %v954 = vunpack.c.l.b16 %v602
        %v955 = vunpack.c.l.b16 %v603
        %v956 = vunpack.c.l.b16 %v604
        %v957 = vunpack.c.l.b16 %v605
        %v958 = vunpack.c.l.b16 %v606
        %v959 = vunpack.c.l.b16 %v607
        %v960 = vunpack.c.l.b16 %v608
        %v961 = vunpack.c.l.b16 %v609
        %v962 = vunpack.c.l.b16 %v610
        %v963 = vunpack.c.l.b16 %v611
        %v964 = vunpack.c.l.b16 %v612
        %v965 = vunpack.c.l.b16 %v613
        %v966 = vunpack.c.l.b16 %v614
        %v967 = vunpack.c.l.b16 %v615
        %v968 = vunpack.c.l.b16 %v616
        %v969 = vunpack.c.l.b16 %v617
        %v970 = vunpack.c.l.b16 %v618
        %v971 = vunpack.c.l.b16 %v619
        %v972 = vunpack.c.l.b16 %v620
        %v973 = vunpack.c.l.b16 %v621
        %v974 = vunpack.c.l.b16 %v622
        %v975 = vunpack.c.l.b16 %v623
        %v976 = vunpack.c.l.b16 %v624
        %v977 = vunpack.c.l.b16 %v625
        %v978 = vunpack.c.l.b16 %v626
        %v979 = vunpack.c.l.b16 %v627
        %v980 = vunpack.c.l.b16 %v628
        %v981 = vunpack.c.l.b16 %v629
        %v982 = vunpack.c.l.b16 %v630
        %v983 = vunpack.c.l.b16 %v631
        %v984 = vunpack.c.l.b16 %v632
        %v985 = vunpack.c.l.b16 %v633
        %v986 = vunpack.c.l.b16 %v634
        %v987 = vunpack.c.l.b16 %v635
        %v988 = vunpack.c.l.b16 %v636
        %v989 = vunpack.c.l.b16 %v637
        %v990 = vunpack.c.l.b16 %v638
        %v991 = vunpack.c.l.b16 %v639
        %v992 = vpack.c.b16 %v945, %v944
        %v993 = vpack.c.b16 %v947, %v946
        %v994 = vpack.c.b16 %v949, %v948
        %v995 = vpack.c.b16 %v951, %v950
        %v996 = vpack.c.b16 %v953, %v952
        %v997 = vpack.c.b16 %v955, %v954
        %v998 = vpack.c.b16 %v957, %v956
        %v999 = vpack.c.b16 %v959, %v958
        %v1000 = vpack.c.b16 %v961, %v960
        %v1001 = vpack.c.b16 %v963, %v962
        %v1002 = vpack.c.b16 %v965, %v964
        %v1003 = vpack.c.b16 %v967, %v966
        %v1004 = vpack.c.b16 %v969, %v968
        %v1005 = vpack.c.b16 %v971, %v970
        %v1006 = vpack.c.b16 %v973, %v972
        %v1007 = vpack.c.b16 %v975, %v974
        %v1008 = vpack.c.b16 %v977, %v976
        %v1009 = vpack.c.b16 %v979, %v978
        %v1010 = vpack.c.b16 %v981, %v980
        %v1011 = vpack.c.b16 %v983, %v982
        %v1012 = vpack.c.b16 %v985, %v984
        %v1013 = vpack.c.b16 %v987, %v986
        %v1014 = vpack.c.b16 %v989, %v988
        %v1015 = vpack.c.b16 %v991, %v990
        %1040 = vmatprep.subr.bf16.mxu0 0
        %1041 = vmatpush1.bf16.msra.mxu0 %v999
        %1042 = vmatprep.subr.bf16.mxu0 0
        %1043 = vmatpush1.bf16.msra.mxu0 %v998
        %1044 = vmatprep.subr.bf16.mxu0 0
        %1045 = vmatpush1.bf16.msra.mxu0 %v997
        %1046 = vmatprep.subr.bf16.mxu0 0
        %1047 = vmatpush1.bf16.msra.mxu0 %v996
        %1048 = vmatprep.subr.bf16.mxu0 0
        %1049 = vmatpush1.bf16.msra.mxu0 %v995
        %1050 = vmatprep.subr.bf16.mxu0 0
        %1051 = vmatpush1.bf16.msra.mxu0 %v994
        %1052 = vmatprep.subr.bf16.mxu0 0
        %1053 = vmatpush1.bf16.msra.mxu0 %v993
        %1054 = vmatprep.subr.bf16.mxu0 0
        %1055 = vmatpush1.bf16.msra.mxu0 %v992
        %1056 = vmatprep.subr.bf16.mxu0 0
        %1057 = vmatpush2.bf16.msra.mxu0 %v1007
        %1058 = vmatprep.subr.bf16.mxu0 0
        %1059 = vmatpush2.bf16.msra.mxu0 %v1006
        %1060 = vmatprep.subr.bf16.mxu0 0
        %1061 = vmatpush2.bf16.msra.mxu0 %v1005
        %1062 = vmatprep.subr.bf16.mxu0 0
        %1063 = vmatpush2.bf16.msra.mxu0 %v1004
        %1064 = vmatprep.subr.bf16.mxu0 0
        %1065 = vmatpush2.bf16.msra.mxu0 %v1003
        %1066 = vmatprep.subr.bf16.mxu0 0
        %1067 = vmatpush2.bf16.msra.mxu0 %v1002
        %1068 = vmatprep.subr.bf16.mxu0 0
        %1069 = vmatpush2.bf16.msra.mxu0 %v1001
        %1070 = vmatprep.subr.bf16.mxu0 0
        %1071 = vmatpush2.bf16.msra.mxu0 %v1000
        %1072 = vmatprep.mubr.bf16.mxu0 %v801
        %1073 = vmatmul.mubr.bf16.gmra.mxu0 %v800
        %v1074 = vpop.f32.mrf.mxu0
        %v1075 = vadd.f32 0.0, %v1074
        %v1076 = vpop.f32.mrf.mxu0
        %v1077 = vpop.f32.mrf.mxu0
        %v1078 = vadd.f32 0.0, %v1077
        %v1079 = vpop.f32.mrf.mxu0
        %1080 = vmatprep.mubr.bf16.mxu0 %v804
        %1081 = vmatmul.mubr.bf16.gmra.mxu0 %v803
        %v1082 = vpop.f32.mrf.mxu0
        %v1083 = vadd.f32 0.0, %v1082
        %v1084 = vpop.f32.mrf.mxu0
        %v1085 = vpop.f32.mrf.mxu0
        %v1086 = vadd.f32 0.0, %v1085
        %v1087 = vpop.f32.mrf.mxu0
        %1088 = vmatprep.mubr.bf16.mxu0 %v807
        %1089 = vmatmul.mubr.bf16.gmra.mxu0 %v806
        %v1090 = vpop.f32.mrf.mxu0
        %v1091 = vadd.f32 0.0, %v1090
        %v1092 = vpop.f32.mrf.mxu0
        %v1093 = vpop.f32.mrf.mxu0
        %v1094 = vadd.f32 0.0, %v1093
        %v1095 = vpop.f32.mrf.mxu0
        %1096 = vmatprep.mubr.bf16.mxu0 %v810
        %1097 = vmatmul.mubr.bf16.gmra.mxu0 %v809
        %v1098 = vpop.f32.mrf.mxu0
        %v1099 = vadd.f32 0.0, %v1098
        %v1100 = vpop.f32.mrf.mxu0
        %v1101 = vpop.f32.mrf.mxu0
        %v1102 = vadd.f32 0.0, %v1101
        %v1103 = vpop.f32.mrf.mxu0
        %1104 = vmatprep.mubr.bf16.mxu0 %v813
        %1105 = vmatmul.mubr.bf16.gmra.mxu0 %v812
        %v1106 = vpop.f32.mrf.mxu0
        %v1107 = vadd.f32 0.0, %v1106
        %v1108 = vpop.f32.mrf.mxu0
        %v1109 = vpop.f32.mrf.mxu0
        %v1110 = vadd.f32 0.0, %v1109
        %v1111 = vpop.f32.mrf.mxu0
        %1112 = vmatprep.mubr.bf16.mxu0 %v816
        %1113 = vmatmul.mubr.bf16.gmra.mxu0 %v815
        %v1114 = vpop.f32.mrf.mxu0
        %v1115 = vadd.f32 0.0, %v1114
        %v1116 = vpop.f32.mrf.mxu0
        %v1117 = vpop.f32.mrf.mxu0
        %v1118 = vadd.f32 0.0, %v1117
        %v1119 = vpop.f32.mrf.mxu0
        %1120 = vmatprep.mubr.bf16.mxu0 %v819
        %1121 = vmatmul.mubr.bf16.gmra.mxu0 %v818
        %v1122 = vpop.f32.mrf.mxu0
        %v1123 = vadd.f32 0.0, %v1122
        %v1124 = vpop.f32.mrf.mxu0
        %v1125 = vpop.f32.mrf.mxu0
        %v1126 = vadd.f32 0.0, %v1125
        %v1127 = vpop.f32.mrf.mxu0
        %1128 = vmatprep.mubr.bf16.mxu0 %v822
        %1129 = vmatmul.mubr.bf16.gmra.mxu0 %v821
        %v1130 = vpop.f32.mrf.mxu0
        %v1131 = vadd.f32 0.0, %v1130
        %v1132 = vpop.f32.mrf.mxu0
        %v1133 = vpop.f32.mrf.mxu0
        %v1134 = vadd.f32 0.0, %v1133
        %v1135 = vpop.f32.mrf.mxu0
        %1136 = vmatprep.mubr.bf16.mxu0 %v825
        %1137 = vmatmul.mubr.bf16.gmra.mxu0 %v824
        %v1138 = vpop.f32.mrf.mxu0
        %v1139 = vadd.f32 0.0, %v1138
        %v1140 = vpop.f32.mrf.mxu0
        %v1141 = vpop.f32.mrf.mxu0
        %v1142 = vadd.f32 0.0, %v1141
        %v1143 = vpop.f32.mrf.mxu0
        %1144 = vmatprep.mubr.bf16.mxu0 %v828
        %1145 = vmatmul.mubr.bf16.gmra.mxu0 %v827
        %v1146 = vpop.f32.mrf.mxu0
        %v1147 = vadd.f32 0.0, %v1146
        %v1148 = vpop.f32.mrf.mxu0
        %v1149 = vpop.f32.mrf.mxu0
        %v1150 = vadd.f32 0.0, %v1149
        %v1151 = vpop.f32.mrf.mxu0
        %1152 = vmatprep.mubr.bf16.mxu0 %v831
        %1153 = vmatmul.mubr.bf16.gmra.mxu0 %v830
        %v1154 = vpop.f32.mrf.mxu0
        %v1155 = vadd.f32 0.0, %v1154
        %v1156 = vpop.f32.mrf.mxu0
        %v1157 = vpop.f32.mrf.mxu0
        %v1158 = vadd.f32 0.0, %v1157
        %v1159 = vpop.f32.mrf.mxu0
        %1160 = vmatprep.mubr.bf16.mxu0 %v834
        %1161 = vmatmul.mubr.bf16.gmra.mxu0 %v833
        %v1162 = vpop.f32.mrf.mxu0
        %v1163 = vadd.f32 0.0, %v1162
        %v1164 = vpop.f32.mrf.mxu0
        %v1165 = vpop.f32.mrf.mxu0
        %v1166 = vadd.f32 0.0, %v1165
        %v1167 = vpop.f32.mrf.mxu0
        %1168 = vmatprep.mubr.bf16.mxu0 %v837
        %1169 = vmatmul.mubr.bf16.gmra.mxu0 %v836
        %v1170 = vpop.f32.mrf.mxu0
        %v1171 = vadd.f32 0.0, %v1170
        %v1172 = vpop.f32.mrf.mxu0
        %v1173 = vpop.f32.mrf.mxu0
        %v1174 = vadd.f32 0.0, %v1173
        %v1175 = vpop.f32.mrf.mxu0
        %1176 = vmatprep.mubr.bf16.mxu0 %v840
        %1177 = vmatmul.mubr.bf16.gmra.mxu0 %v839
        %v1178 = vpop.f32.mrf.mxu0
        %v1179 = vadd.f32 0.0, %v1178
        %v1180 = vpop.f32.mrf.mxu0
        %v1181 = vpop.f32.mrf.mxu0
        %v1182 = vadd.f32 0.0, %v1181
        %v1183 = vpop.f32.mrf.mxu0
        %1184 = vmatprep.mubr.bf16.mxu0 %v843
        %1185 = vmatmul.mubr.bf16.gmra.mxu0 %v842
        %v1186 = vpop.f32.mrf.mxu0
        %v1187 = vadd.f32 0.0, %v1186
        %v1188 = vpop.f32.mrf.mxu0
        %v1189 = vpop.f32.mrf.mxu0
        %v1190 = vadd.f32 0.0, %v1189
        %v1191 = vpop.f32.mrf.mxu0
        %1192 = vmatprep.mubr.bf16.mxu0 %v846
        %1193 = vmatmul.mubr.bf16.gmra.mxu0 %v845
        %v1194 = vpop.f32.mrf.mxu0
        %v1195 = vadd.f32 0.0, %v1194
        %v1196 = vpop.f32.mrf.mxu0
        %v1197 = vpop.f32.mrf.mxu0
        %v1198 = vadd.f32 0.0, %v1197
        %v1199 = vpop.f32.mrf.mxu0
        %1200 = vdwg.mxu0
        %1201 = vmatprep.subr.bf16.mxu0 0
        %1202 = vmatpush1.bf16.msra.mxu0 %v1015
        %1203 = vmatprep.subr.bf16.mxu0 0
        %1204 = vmatpush1.bf16.msra.mxu0 %v1014
        %1205 = vmatprep.subr.bf16.mxu0 0
        %1206 = vmatpush1.bf16.msra.mxu0 %v1013
        %1207 = vmatprep.subr.bf16.mxu0 0
        %1208 = vmatpush1.bf16.msra.mxu0 %v1012
        %1209 = vmatprep.subr.bf16.mxu0 0
        %1210 = vmatpush1.bf16.msra.mxu0 %v1011
        %1211 = vmatprep.subr.bf16.mxu0 0
        %1212 = vmatpush1.bf16.msra.mxu0 %v1010
        %1213 = vmatprep.subr.bf16.mxu0 0
        %1214 = vmatpush1.bf16.msra.mxu0 %v1009
        %1215 = vmatprep.subr.bf16.mxu0 0
        %1216 = vmatpush1.bf16.msra.mxu0 %v1008
        %1217 = vmatprep.subr.bf16.mxu0 0
        %1218 = vmatpush2.bf16.msra.mxu0 0
        %1219 = vmatprep.subr.bf16.mxu0 0
        %1220 = vmatpush2.bf16.msra.mxu0 0
        %1221 = vmatprep.subr.bf16.mxu0 0
        %1222 = vmatpush2.bf16.msra.mxu0 0
        %1223 = vmatprep.subr.bf16.mxu0 0
        %1224 = vmatpush2.bf16.msra.mxu0 0
        %1225 = vmatprep.subr.bf16.mxu0 0
        %1226 = vmatpush2.bf16.msra.mxu0 0
        %1227 = vmatprep.subr.bf16.mxu0 0
        %1228 = vmatpush2.bf16.msra.mxu0 0
        %1229 = vmatprep.subr.bf16.mxu0 0
        %1230 = vmatpush2.bf16.msra.mxu0 0
        %1231 = vmatprep.subr.bf16.mxu0 0
        %1232 = vmatpush2.bf16.msra.mxu0 0
        %1233 = vmatprep.mubr.bf16.mxu0 0
        %1234 = vmatmul.mubr.bf16.gmra.mxu0 %v802
        %v1235 = vpop.f32.mrf.mxu0
        %v1236 = vadd.f32 %v1075, %v1235
        %v1237 = vpop.f32.mrf.mxu0
        %v1238 = vpop.f32.mrf.mxu0
        %v1239 = vadd.f32 %v1078, %v1238
        %v1240 = vpop.f32.mrf.mxu0
        %1241 = vmatprep.mubr.bf16.mxu0 0
        %1242 = vmatmul.mubr.bf16.gmra.mxu0 %v805
        %v1243 = vpop.f32.mrf.mxu0
        %v1244 = vadd.f32 %v1083, %v1243
        %v1245 = vpop.f32.mrf.mxu0
        %v1246 = vpop.f32.mrf.mxu0
        %v1247 = vadd.f32 %v1086, %v1246
        %v1248 = vpop.f32.mrf.mxu0
        %1249 = vmatprep.mubr.bf16.mxu0 0
        %1250 = vmatmul.mubr.bf16.gmra.mxu0 %v808
        %v1251 = vpop.f32.mrf.mxu0
        %v1252 = vadd.f32 %v1091, %v1251
        %v1253 = vpop.f32.mrf.mxu0
        %v1254 = vpop.f32.mrf.mxu0
        %v1255 = vadd.f32 %v1094, %v1254
        %v1256 = vpop.f32.mrf.mxu0
        %1257 = vmatprep.mubr.bf16.mxu0 0
        %1258 = vmatmul.mubr.bf16.gmra.mxu0 %v811
        %v1259 = vpop.f32.mrf.mxu0
        %v1260 = vadd.f32 %v1099, %v1259
        %v1261 = vpop.f32.mrf.mxu0
        %v1262 = vpop.f32.mrf.mxu0
        %v1263 = vadd.f32 %v1102, %v1262
        %v1264 = vpop.f32.mrf.mxu0
        %1265 = vmatprep.mubr.bf16.mxu0 0
        %1266 = vmatmul.mubr.bf16.gmra.mxu0 %v814
        %v1267 = vpop.f32.mrf.mxu0
        %v1268 = vadd.f32 %v1107, %v1267
        %v1269 = vpop.f32.mrf.mxu0
        %v1270 = vpop.f32.mrf.mxu0
        %v1271 = vadd.f32 %v1110, %v1270
        %v1272 = vpop.f32.mrf.mxu0
        %1273 = vmatprep.mubr.bf16.mxu0 0
        %1274 = vmatmul.mubr.bf16.gmra.mxu0 %v817
        %v1275 = vpop.f32.mrf.mxu0
        %v1276 = vadd.f32 %v1115, %v1275
        %v1277 = vpop.f32.mrf.mxu0
        %v1278 = vpop.f32.mrf.mxu0
        %v1279 = vadd.f32 %v1118, %v1278
        %v1280 = vpop.f32.mrf.mxu0
        %1281 = vmatprep.mubr.bf16.mxu0 0
        %1282 = vmatmul.mubr.bf16.gmra.mxu0 %v820
        %v1283 = vpop.f32.mrf.mxu0
        %v1284 = vadd.f32 %v1123, %v1283
        %v1285 = vpop.f32.mrf.mxu0
        %v1286 = vpop.f32.mrf.mxu0
        %v1287 = vadd.f32 %v1126, %v1286
        %v1288 = vpop.f32.mrf.mxu0
        %1289 = vmatprep.mubr.bf16.mxu0 0
        %1290 = vmatmul.mubr.bf16.gmra.mxu0 %v823
        %v1291 = vpop.f32.mrf.mxu0
        %v1292 = vadd.f32 %v1131, %v1291
        %v1293 = vpop.f32.mrf.mxu0
        %v1294 = vpop.f32.mrf.mxu0
        %v1295 = vadd.f32 %v1134, %v1294
        %v1296 = vpop.f32.mrf.mxu0
        %1297 = vmatprep.mubr.bf16.mxu0 0
        %1298 = vmatmul.mubr.bf16.gmra.mxu0 %v826
        %v1299 = vpop.f32.mrf.mxu0
        %v1300 = vadd.f32 %v1139, %v1299
        %v1301 = vpop.f32.mrf.mxu0
        %v1302 = vpop.f32.mrf.mxu0
        %v1303 = vadd.f32 %v1142, %v1302
        %v1304 = vpop.f32.mrf.mxu0
        %1305 = vmatprep.mubr.bf16.mxu0 0
        %1306 = vmatmul.mubr.bf16.gmra.mxu0 %v829
        %v1307 = vpop.f32.mrf.mxu0
        %v1308 = vadd.f32 %v1147, %v1307
        %v1309 = vpop.f32.mrf.mxu0
        %v1310 = vpop.f32.mrf.mxu0
        %v1311 = vadd.f32 %v1150, %v1310
        %v1312 = vpop.f32.mrf.mxu0
        %1313 = vmatprep.mubr.bf16.mxu0 0
        %1314 = vmatmul.mubr.bf16.gmra.mxu0 %v832
        %v1315 = vpop.f32.mrf.mxu0
        %v1316 = vadd.f32 %v1155, %v1315
        %v1317 = vpop.f32.mrf.mxu0
        %v1318 = vpop.f32.mrf.mxu0
        %v1319 = vadd.f32 %v1158, %v1318
        %v1320 = vpop.f32.mrf.mxu0
        %1321 = vmatprep.mubr.bf16.mxu0 0
        %1322 = vmatmul.mubr.bf16.gmra.mxu0 %v835
        %v1323 = vpop.f32.mrf.mxu0
        %v1324 = vadd.f32 %v1163, %v1323
        %v1325 = vpop.f32.mrf.mxu0
        %v1326 = vpop.f32.mrf.mxu0
        %v1327 = vadd.f32 %v1166, %v1326
        %v1328 = vpop.f32.mrf.mxu0
        %1329 = vmatprep.mubr.bf16.mxu0 0
        %1330 = vmatmul.mubr.bf16.gmra.mxu0 %v838
        %v1331 = vpop.f32.mrf.mxu0
        %v1332 = vadd.f32 %v1171, %v1331
        %v1333 = vpop.f32.mrf.mxu0
        %v1334 = vpop.f32.mrf.mxu0
        %v1335 = vadd.f32 %v1174, %v1334
        %v1336 = vpop.f32.mrf.mxu0
        %1337 = vmatprep.mubr.bf16.mxu0 0
        %1338 = vmatmul.mubr.bf16.gmra.mxu0 %v841
        %v1339 = vpop.f32.mrf.mxu0
        %v1340 = vadd.f32 %v1179, %v1339
        %v1341 = vpop.f32.mrf.mxu0
        %v1342 = vpop.f32.mrf.mxu0
        %v1343 = vadd.f32 %v1182, %v1342
        %v1344 = vpop.f32.mrf.mxu0
        %1345 = vmatprep.mubr.bf16.mxu0 0
        %1346 = vmatmul.mubr.bf16.gmra.mxu0 %v844
        %v1347 = vpop.f32.mrf.mxu0
        %v1348 = vadd.f32 %v1187, %v1347
        %v1349 = vpop.f32.mrf.mxu0
        %v1350 = vpop.f32.mrf.mxu0
        %v1351 = vadd.f32 %v1190, %v1350
        %v1352 = vpop.f32.mrf.mxu0
        %1353 = vmatprep.mubr.bf16.mxu0 0
        %1354 = vmatmul.mubr.bf16.gmra.mxu0 %v847
        %v1355 = vpop.f32.mrf.mxu0
        %v1356 = vadd.f32 %v1195, %v1355
        %v1357 = vpop.f32.mrf.mxu0
        %v1358 = vpop.f32.mrf.mxu0
        %v1359 = vadd.f32 %v1198, %v1358
        %v1360 = vpop.f32.mrf.mxu0
        %1361 = vdwg.mxu0
        %v1362 = vadd.f32 %v496, %v1236
        %v1363 = vadd.f32 %v497, %v1239
        %v1364 = vadd.f32 %v498, %v1244
        %v1365 = vadd.f32 %v499, %v1247
        %v1366 = vadd.f32 %v500, %v1252
        %v1367 = vadd.f32 %v501, %v1255
        %v1368 = vadd.f32 %v502, %v1260
        %v1369 = vadd.f32 %v503, %v1263
        %v1370 = vadd.f32 %v504, %v1268
        %v1371 = vadd.f32 %v505, %v1271
        %v1372 = vadd.f32 %v506, %v1276
        %v1373 = vadd.f32 %v507, %v1279
        %v1374 = vadd.f32 %v508, %v1284
        %v1375 = vadd.f32 %v509, %v1287
        %v1376 = vadd.f32 %v510, %v1292
        %v1377 = vadd.f32 %v511, %v1295
        %v1378 = vadd.f32 %v512, %v1300
        %v1379 = vadd.f32 %v513, %v1303
        %v1380 = vadd.f32 %v514, %v1308
        %v1381 = vadd.f32 %v515, %v1311
        %v1382 = vadd.f32 %v516, %v1316
        %v1383 = vadd.f32 %v517, %v1319
        %v1384 = vadd.f32 %v518, %v1324
        %v1385 = vadd.f32 %v519, %v1327
        %v1386 = vadd.f32 %v520, %v1332
        %v1387 = vadd.f32 %v521, %v1335
        %v1388 = vadd.f32 %v522, %v1340
        %v1389 = vadd.f32 %v523, %v1343
        %v1390 = vadd.f32 %v524, %v1348
        %v1391 = vadd.f32 %v525, %v1351
        %v1392 = vadd.f32 %v526, %v1356
        %v1393 = vadd.f32 %v527, %v1359
        %1394 = vst [vmem:[#allocation2] sm:$0xff] %v1362
        %1395 = vst [vmem:[#allocation2 + $0x8] sm:$0xff] %v1363
        %1396 = vst [vmem:[#allocation2 + $0x10] sm:$0xff] %v1364
        %1397 = vst [vmem:[#allocation2 + $0x18] sm:$0xff] %v1365
        %1398 = vst [vmem:[#allocation2 + $0x20] sm:$0xff] %v1366
        %1399 = vst [vmem:[#allocation2 + $0x28] sm:$0xff] %v1367
        %1400 = vst [vmem:[#allocation2 + $0x30] sm:$0xff] %v1368
        %1401 = vst [vmem:[#allocation2 + $0x38] sm:$0xff] %v1369
        %1402 = vst [vmem:[#allocation2 + $0x40] sm:$0xff] %v1370
        %1403 = vst [vmem:[#allocation2 + $0x48] sm:$0xff] %v1371
        %1404 = vst [vmem:[#allocation2 + $0x50] sm:$0xff] %v1372
        %1405 = vst [vmem:[#allocation2 + $0x58] sm:$0xff] %v1373
        %1406 = vst [vmem:[#allocation2 + $0x60] sm:$0xff] %v1374
        %1407 = vst [vmem:[#allocation2 + $0x68] sm:$0xff] %v1375
        %1408 = vst [vmem:[#allocation2 + $0x70] sm:$0xff] %v1376
        %1409 = vst [vmem:[#allocation2 + $0x78] sm:$0xff] %v1377
        %1410 = vst [vmem:[#allocation2 + $0x80] sm:$0xff] %v1378
        %1411 = vst [vmem:[#allocation2 + $0x88] sm:$0xff] %v1379
        %1412 = vst [vmem:[#allocation2 + $0x90] sm:$0xff] %v1380
        %1413 = vst [vmem:[#allocation2 + $0x98] sm:$0xff] %v1381
        %1414 = vst [vmem:[#allocation2 + $0xa0] sm:$0xff] %v1382
        %1415 = vst [vmem:[#allocation2 + $0xa8] sm:$0xff] %v1383
        %1416 = vst [vmem:[#allocation2 + $0xb0] sm:$0xff] %v1384
        %1417 = vst [vmem:[#allocation2 + $0xb8] sm:$0xff] %v1385
        %1418 = vst [vmem:[#allocation2 + $0xc0] sm:$0xff] %v1386
        %1419 = vst [vmem:[#allocation2 + $0xc8] sm:$0xff] %v1387
        %1420 = vst [vmem:[#allocation2 + $0xd0] sm:$0xff] %v1388
        %1421 = vst [vmem:[#allocation2 + $0xd8] sm:$0xff] %v1389
        %1422 = vst [vmem:[#allocation2 + $0xe0] sm:$0xff] %v1390
        %1423 = vst [vmem:[#allocation2 + $0xe8] sm:$0xff] %v1391
        %1424 = vst [vmem:[#allocation2 + $0xf0] sm:$0xff] %v1392
        %1425 = vst [vmem:[#allocation2 + $0xf8] sm:$0xff] %v1393
        %p1426 = scmp.eq.s32.totalorder %s23, 2
        // Predicated region
        $region59: #{block_residual_forward.6} parent=49 // pred_check
          %p1427 = pneg %p1426
        $region60: #{block_residual_forward.6} parent=49 // pred_check_branch
          %1429 = sbr.rel (%p1427) target = $region62
        $region61: #{block_residual_forward.6} parent=49 // pred_region
          %v1430 = vld [vmem:[#allocation2] sm:$0xff]
          %v1431 = vld [vmem:[#allocation2 + $0x8] sm:$0xff]
          %v1432 = vld [vmem:[#allocation2 + $0x10] sm:$0xff]
          %v1433 = vld [vmem:[#allocation2 + $0x18] sm:$0xff]
          %v1434 = vld [vmem:[#allocation2 + $0x20] sm:$0xff]
          %v1435 = vld [vmem:[#allocation2 + $0x28] sm:$0xff]
          %v1436 = vld [vmem:[#allocation2 + $0x30] sm:$0xff]
          %v1437 = vld [vmem:[#allocation2 + $0x38] sm:$0xff]
          %v1438 = vld [vmem:[#allocation2 + $0x40] sm:$0xff]
          %v1439 = vld [vmem:[#allocation2 + $0x48] sm:$0xff]
          %v1440 = vld [vmem:[#allocation2 + $0x50] sm:$0xff]
          %v1441 = vld [vmem:[#allocation2 + $0x58] sm:$0xff]
          %v1442 = vld [vmem:[#allocation2 + $0x60] sm:$0xff]
          %v1443 = vld [vmem:[#allocation2 + $0x68] sm:$0xff]
          %v1444 = vld [vmem:[#allocation2 + $0x70] sm:$0xff]
          %v1445 = vld [vmem:[#allocation2 + $0x78] sm:$0xff]
          %v1446 = vld [vmem:[#allocation2 + $0x80] sm:$0xff]
          %v1447 = vld [vmem:[#allocation2 + $0x88] sm:$0xff]
          %v1448 = vld [vmem:[#allocation2 + $0x90] sm:$0xff]
          %v1449 = vld [vmem:[#allocation2 + $0x98] sm:$0xff]
          %v1450 = vld [vmem:[#allocation2 + $0xa0] sm:$0xff]
          %v1451 = vld [vmem:[#allocation2 + $0xa8] sm:$0xff]
          %v1452 = vld [vmem:[#allocation2 + $0xb0] sm:$0xff]
          %v1453 = vld [vmem:[#allocation2 + $0xb8] sm:$0xff]
          %v1454 = vld [vmem:[#allocation2 + $0xc0] sm:$0xff]
          %v1455 = vld [vmem:[#allocation2 + $0xc8] sm:$0xff]
          %v1456 = vld [vmem:[#allocation2 + $0xd0] sm:$0xff]
          %v1457 = vld [vmem:[#allocation2 + $0xd8] sm:$0xff]
          %v1458 = vld [vmem:[#allocation2 + $0xe0] sm:$0xff]
          %v1459 = vld [vmem:[#allocation2 + $0xe8] sm:$0xff]
          %v1460 = vld [vmem:[#allocation2 + $0xf0] sm:$0xff]
          %v1461 = vld [vmem:[#allocation2 + $0xf8] sm:$0xff]
          %v1462 = vpack.c.bf16 %v1431, %v1430
          %v1463 = vpack.c.bf16 %v1433, %v1432
          %v1464 = vpack.c.bf16 %v1435, %v1434
          %v1465 = vpack.c.bf16 %v1437, %v1436
          %v1466 = vpack.c.bf16 %v1439, %v1438
          %v1467 = vpack.c.bf16 %v1441, %v1440
          %v1468 = vpack.c.bf16 %v1443, %v1442
          %v1469 = vpack.c.bf16 %v1445, %v1444
          %v1470 = vpack.c.bf16 %v1447, %v1446
          %v1471 = vpack.c.bf16 %v1449, %v1448
          %v1472 = vpack.c.bf16 %v1451, %v1450
          %v1473 = vpack.c.bf16 %v1453, %v1452
          %v1474 = vpack.c.bf16 %v1455, %v1454
          %v1475 = vpack.c.bf16 %v1457, %v1456
          %v1476 = vpack.c.bf16 %v1459, %v1458
          %v1477 = vpack.c.bf16 %v1461, %v1460
          %v1494 = vunpack.c.l.b16 %v1462
          %v1495 = vunpack.c.h.b16 %v1462
          %v1496 = vunpack.c.l.b16 %v1463
          %v1497 = vunpack.c.h.b16 %v1463
          %v1498 = vunpack.c.l.b16 %v1464
          %v1499 = vunpack.c.h.b16 %v1464
          %v1500 = vunpack.c.l.b16 %v1465
          %v1501 = vunpack.c.h.b16 %v1465
          %v1502 = vunpack.c.l.b16 %v1466
          %v1503 = vunpack.c.h.b16 %v1466
          %v1504 = vunpack.c.l.b16 %v1467
          %v1505 = vunpack.c.h.b16 %v1467
          %v1506 = vunpack.c.l.b16 %v1468
          %v1507 = vunpack.c.h.b16 %v1468
          %v1508 = vunpack.c.l.b16 %v1469
          %v1509 = vunpack.c.h.b16 %v1469
          %v1510 = vunpack.c.l.b16 %v1470
          %v1511 = vunpack.c.h.b16 %v1470
          %v1512 = vunpack.c.l.b16 %v1471
          %v1513 = vunpack.c.h.b16 %v1471
          %v1514 = vunpack.c.l.b16 %v1472
          %v1515 = vunpack.c.h.b16 %v1472
          %v1516 = vunpack.c.l.b16 %v1473
          %v1517 = vunpack.c.h.b16 %v1473
          %v1518 = vunpack.c.l.b16 %v1474
          %v1519 = vunpack.c.h.b16 %v1474
          %v1520 = vunpack.c.l.b16 %v1475
          %v1521 = vunpack.c.h.b16 %v1475
          %v1522 = vunpack.c.l.b16 %v1476
          %v1523 = vunpack.c.h.b16 %v1476
          %v1524 = vunpack.c.l.b16 %v1477
          %v1525 = vunpack.c.h.b16 %v1477
          %v1526 = vpack.c.b16 %v1494, %v1494
          %v1527 = vpack.c.b16 %v1495, %v1495
          %v1528 = vpack.c.b16 %v1496, %v1496
          %v1529 = vpack.c.b16 %v1497, %v1497
          %v1530 = vpack.c.b16 %v1498, %v1498
          %v1531 = vpack.c.b16 %v1499, %v1499
          %v1532 = vpack.c.b16 %v1500, %v1500
          %v1533 = vpack.c.b16 %v1501, %v1501
          %v1534 = vpack.c.b16 %v1502, %v1502
          %v1535 = vpack.c.b16 %v1503, %v1503
          %v1536 = vpack.c.b16 %v1504, %v1504
          %v1537 = vpack.c.b16 %v1505, %v1505
          %v1538 = vpack.c.b16 %v1506, %v1506
          %v1539 = vpack.c.b16 %v1507, %v1507
          %v1540 = vpack.c.b16 %v1508, %v1508
          %v1541 = vpack.c.b16 %v1509, %v1509
          %v1542 = vpack.c.b16 %v1510, %v1510
          %v1543 = vpack.c.b16 %v1511, %v1511
          %v1544 = vpack.c.b16 %v1512, %v1512
          %v1545 = vpack.c.b16 %v1513, %v1513
          %v1546 = vpack.c.b16 %v1514, %v1514
          %v1547 = vpack.c.b16 %v1515, %v1515
          %v1548 = vpack.c.b16 %v1516, %v1516
          %v1549 = vpack.c.b16 %v1517, %v1517
          %v1550 = vpack.c.b16 %v1518, %v1518
          %v1551 = vpack.c.b16 %v1519, %v1519
          %v1552 = vpack.c.b16 %v1520, %v1520
          %v1553 = vpack.c.b16 %v1521, %v1521
          %v1554 = vpack.c.b16 %v1522, %v1522
          %v1555 = vpack.c.b16 %v1523, %v1523
          %v1556 = vpack.c.b16 %v1524, %v1524
          %v1557 = vpack.c.b16 %v1525, %v1525
          %1590 = vst [vmem:[%s443] sm:$0xf] %v1526
          %1591 = vst [vmem:[%s443 + $0x4] sm:$0xf] %v1527
          %1592 = vst [vmem:[%s443 + $0x8] sm:$0xf] %v1528
          %1593 = vst [vmem:[%s443 + $0xc] sm:$0xf] %v1529
          %1594 = vst [vmem:[%s443 + $0x10] sm:$0xf] %v1530
          %1595 = vst [vmem:[%s443 + $0x14] sm:$0xf] %v1531
          %1596 = vst [vmem:[%s443 + $0x18] sm:$0xf] %v1532
          %1597 = vst [vmem:[%s443 + $0x1c] sm:$0xf] %v1533
          %1598 = vst [vmem:[%s443 + $0x20] sm:$0xf] %v1534
          %1599 = vst [vmem:[%s443 + $0x24] sm:$0xf] %v1535
          %1600 = vst [vmem:[%s443 + $0x28] sm:$0xf] %v1536
          %1601 = vst [vmem:[%s443 + $0x2c] sm:$0xf] %v1537
          %1602 = vst [vmem:[%s443 + $0x30] sm:$0xf] %v1538
          %1603 = vst [vmem:[%s443 + $0x34] sm:$0xf] %v1539
          %1604 = vst [vmem:[%s443 + $0x38] sm:$0xf] %v1540
          %1605 = vst [vmem:[%s443 + $0x3c] sm:$0xf] %v1541
          %1606 = vst [vmem:[%s443 + $0x40] sm:$0xf] %v1542
          %1607 = vst [vmem:[%s443 + $0x44] sm:$0xf] %v1543
          %1608 = vst [vmem:[%s443 + $0x48] sm:$0xf] %v1544
          %1609 = vst [vmem:[%s443 + $0x4c] sm:$0xf] %v1545
          %1610 = vst [vmem:[%s443 + $0x50] sm:$0xf] %v1546
          %1611 = vst [vmem:[%s443 + $0x54] sm:$0xf] %v1547
          %1612 = vst [vmem:[%s443 + $0x58] sm:$0xf] %v1548
          %1613 = vst [vmem:[%s443 + $0x5c] sm:$0xf] %v1549
          %1614 = vst [vmem:[%s443 + $0x60] sm:$0xf] %v1550
          %1615 = vst [vmem:[%s443 + $0x64] sm:$0xf] %v1551
          %1616 = vst [vmem:[%s443 + $0x68] sm:$0xf] %v1552
          %1617 = vst [vmem:[%s443 + $0x6c] sm:$0xf] %v1553
          %1618 = vst [vmem:[%s443 + $0x70] sm:$0xf] %v1554
          %1619 = vst [vmem:[%s443 + $0x74] sm:$0xf] %v1555
          %1620 = vst [vmem:[%s443 + $0x78] sm:$0xf] %v1556
          %1621 = vst [vmem:[%s443 + $0x7c] sm:$0xf] %v1557
          %v1622 = vadd.f32 %v1430, %v1431
          %v1623 = vadd.f32 %v1622, %v1432
          %v1624 = vadd.f32 %v1623, %v1433
          %v1625 = vadd.f32 %v1624, %v1434
          %v1626 = vadd.f32 %v1625, %v1435
          %v1627 = vadd.f32 %v1626, %v1436
          %v1628 = vadd.f32 %v1627, %v1437
          %v1629 = vadd.f32 %v1628, %v1438
          %v1630 = vadd.f32 %v1629, %v1439
          %v1631 = vadd.f32 %v1630, %v1440
          %v1632 = vadd.f32 %v1631, %v1441
          %v1633 = vadd.f32 %v1632, %v1442
          %v1634 = vadd.f32 %v1633, %v1443
          %v1635 = vadd.f32 %v1634, %v1444
          %v1636 = vadd.f32 %v1635, %v1445
          %v1637 = vadd.f32 %v1636, %v1446
          %v1638 = vadd.f32 %v1637, %v1447
          %v1639 = vadd.f32 %v1638, %v1448
          %v1640 = vadd.f32 %v1639, %v1449
          %v1641 = vadd.f32 %v1640, %v1450
          %v1642 = vadd.f32 %v1641, %v1451
          %v1643 = vadd.f32 %v1642, %v1452
          %v1644 = vadd.f32 %v1643, %v1453
          %v1645 = vadd.f32 %v1644, %v1454
          %v1646 = vadd.f32 %v1645, %v1455
          %v1647 = vadd.f32 %v1646, %v1456
          %v1648 = vadd.f32 %v1647, %v1457
          %v1649 = vadd.f32 %v1648, %v1458
          %v1650 = vadd.f32 %v1649, %v1459
          %v1651 = vadd.f32 %v1650, %v1460
          %v1652 = vadd.f32 %v1651, %v1461
          %v1653 = vrot.slane %v1652, 4
          %v1654 = vadd.f32 %v1652, %v1653
          %v1655 = vrot.slane %v1654, 2
          %v1656 = vadd.f32 %v1654, %v1655
          %v1657 = vrot.slane %v1656, 1
          %v1658 = vadd.f32 %v1656, %v1657
          %v1659 = vmul.f32 %v1430, %v1430
          %v1660 = vmul.f32 %v1431, %v1431
          %v1661 = vmul.f32 %v1432, %v1432
          %v1662 = vmul.f32 %v1433, %v1433
          %v1663 = vmul.f32 %v1434, %v1434
          %v1664 = vmul.f32 %v1435, %v1435
          %v1665 = vmul.f32 %v1436, %v1436
          %v1666 = vmul.f32 %v1437, %v1437
          %v1667 = vmul.f32 %v1438, %v1438
          %v1668 = vmul.f32 %v1439, %v1439
          %v1669 = vmul.f32 %v1440, %v1440
          %v1670 = vmul.f32 %v1441, %v1441
          %v1671 = vmul.f32 %v1442, %v1442
          %v1672 = vmul.f32 %v1443, %v1443
          %v1673 = vmul.f32 %v1444, %v1444
          %v1674 = vmul.f32 %v1445, %v1445
          %v1675 = vmul.f32 %v1446, %v1446
          %v1676 = vmul.f32 %v1447, %v1447
          %v1677 = vmul.f32 %v1448, %v1448
          %v1678 = vmul.f32 %v1449, %v1449
          %v1679 = vmul.f32 %v1450, %v1450
          %v1680 = vmul.f32 %v1451, %v1451
          %v1681 = vmul.f32 %v1452, %v1452
          %v1682 = vmul.f32 %v1453, %v1453
          %v1683 = vmul.f32 %v1454, %v1454
          %v1684 = vmul.f32 %v1455, %v1455
          %v1685 = vmul.f32 %v1456, %v1456
          %v1686 = vmul.f32 %v1457, %v1457
          %v1687 = vmul.f32 %v1458, %v1458
          %v1688 = vmul.f32 %v1459, %v1459
          %v1689 = vmul.f32 %v1460, %v1460
          %v1690 = vmul.f32 %v1461, %v1461
          %v1691 = vadd.f32 %v1659, %v1660
          %v1692 = vadd.f32 %v1691, %v1661
          %v1693 = vadd.f32 %v1692, %v1662
          %v1694 = vadd.f32 %v1693, %v1663
          %v1695 = vadd.f32 %v1694, %v1664
          %v1696 = vadd.f32 %v1695, %v1665
          %v1697 = vadd.f32 %v1696, %v1666
          %v1698 = vadd.f32 %v1697, %v1667
          %v1699 = vadd.f32 %v1698, %v1668
          %v1700 = vadd.f32 %v1699, %v1669
          %v1701 = vadd.f32 %v1700, %v1670
          %v1702 = vadd.f32 %v1701, %v1671
          %v1703 = vadd.f32 %v1702, %v1672
          %v1704 = vadd.f32 %v1703, %v1673
          %v1705 = vadd.f32 %v1704, %v1674
          %v1706 = vadd.f32 %v1705, %v1675
          %v1707 = vadd.f32 %v1706, %v1676
          %v1708 = vadd.f32 %v1707, %v1677
          %v1709 = vadd.f32 %v1708, %v1678
          %v1710 = vadd.f32 %v1709, %v1679
          %v1711 = vadd.f32 %v1710, %v1680
          %v1712 = vadd.f32 %v1711, %v1681
          %v1713 = vadd.f32 %v1712, %v1682
          %v1714 = vadd.f32 %v1713, %v1683
          %v1715 = vadd.f32 %v1714, %v1684
          %v1716 = vadd.f32 %v1715, %v1685
          %v1717 = vadd.f32 %v1716, %v1686
          %v1718 = vadd.f32 %v1717, %v1687
          %v1719 = vadd.f32 %v1718, %v1688
          %v1720 = vadd.f32 %v1719, %v1689
          %v1721 = vadd.f32 %v1720, %v1690
          %v1722 = vrot.slane %v1721, 4
          %v1723 = vadd.f32 %v1721, %v1722
          %v1724 = vrot.slane %v1723, 2
          %v1725 = vadd.f32 %v1723, %v1724
          %v1726 = vrot.slane %v1725, 1
          %v1727 = vadd.f32 %v1725, %v1726
          %1728 = vst [vmem:[%s451] sm:$0xff] %v1658
          %1729 = vst [vmem:[%s458] sm:$0xff] %v1727
        $region62: #{block_residual_forward.6} parent=49 // pred_fallthru
          _
        %s1730 = smul.u32 32, %s21
        %p1731 = scmp.lt.s32.totalorder %s1730, 63
        %s1732 = scalar_select %p1731, %s1730, 63
        %p1733 = scmp.lt.s32.totalorder %s22, 0
        %s1734 = scalar_select %p1733, %s22, 0
        %s1735 = sadd.s32 %s1734, %s1732
        %s1736 = smul.addr %s1735, 4
        %s1737 = scalar_lea.vmem %s2, %s1736
        %p1738 = scmp.lt.s32.totalorder %s21, 1
        %s1739 = scalar_select %p1738, %s21, 1
        %p1740 = scmp.lt.s32.totalorder %s22, 0
        %s1741 = scalar_select %p1740, %s22, 0
        %s1742 = sadd.s32 %s1741, %s1739
        %s1743 = smul.addr %s1742, 8
        %s1744 = scalar_lea.vmem %s3, %s1743
        %p1745 = scmp.lt.s32.totalorder %s21, 1
        %s1746 = scalar_select %p1745, %s21, 1
        %p1747 = scmp.lt.s32.totalorder %s22, 0
        %s1748 = scalar_select %p1747, %s22, 0
        %s1749 = sadd.s32 %s1748, %s1746
        %s1750 = smul.addr %s1749, 8
        %s1751 = scalar_lea.vmem %s4, %s1750
        // Predicated region
        $region63: #{block_residual_forward.6} parent=49 // pred_check
          %p1752 = pneg %p111
        $region64: #{block_residual_forward.6} parent=49 // pred_check_branch
          %1754 = sbr.rel (%p1752) target = $region66
        $region65: #{block_residual_forward.6} parent=49 // pred_region
          %s1755 = smul.u32 32, %s21
        $region66: #{block_residual_forward.6} parent=49 // pred_fallthru
          _
        // Predicated region
        $region67: #{block_residual_forward.6} parent=49 // pred_check
          %p1756 = pneg %p139
        $region68: #{block_residual_forward.6} parent=49 // pred_check_branch
          %1758 = sbr.rel (%p1756) target = $region70
        $region69: #{block_residual_forward.6} parent=49 // pred_region
          _
        $region70: #{block_residual_forward.6} parent=49 // pred_fallthru
          _
        // Predicated region
        $region71: #{block_residual_forward.6} parent=49 // pred_check
          %p1759 = pneg %p167
        $region72: #{block_residual_forward.6} parent=49 // pred_check_branch
          %1761 = sbr.rel (%p1759) target = $region74
        $region73: #{block_residual_forward.6} parent=49 // pred_region
          _
        $region74: #{block_residual_forward.6} parent=49 // pred_fallthru
          _
      $region50: #{block_residual_forward.6} parent=5 // pred_fallthru
        _
      %p1762 = scmp.le.s32.totalorder 2, %s11
      // Predicated region
      $region75: #{block_residual_forward.6} parent=5 // pred_check
        %p1763 = pneg %p1762
      $region76: #{block_residual_forward.6} parent=5 // pred_check_branch
        %1765 = sbr.rel (%p1763) target = $region78
      $region77: #{block_residual_forward.6} parent=5 // pred_region
        %s1766 = ssub.s32 %s11, 2
        // Predicated region
        $region79: #{block_residual_forward.6} parent=77 // pred_check
          %p1767 = pneg %p117
        $region80: #{block_residual_forward.6} parent=77 // pred_check_branch
          %1769 = sbr.rel (%p1767) target = $region82
        $region81: #{block_residual_forward.6} parent=77 // pred_region
          %s1770 = smul.u32 32, %s24
          %p1771 = scmp.lt.s32.totalorder %s1770, 63
          %s1772 = scalar_select %p1771, %s1770, 63
          %p1773 = scmp.lt.s32.totalorder %s25, 0
          %s1774 = scalar_select %p1773, %s25, 0
          %s1775 = sadd.s32 %s1774, %s1772
          %s1776 = smul.addr %s1775, 4
          %s1777 = scalar_lea.vmem %s2, %s1776
        $region82: #{block_residual_forward.6} parent=77 // pred_fallthru
          _
        // Predicated region
        $region83: #{block_residual_forward.6} parent=77 // pred_check
          %p1778 = pneg %p145
        $region84: #{block_residual_forward.6} parent=77 // pred_check_branch
          %1780 = sbr.rel (%p1778) target = $region86
        $region85: #{block_residual_forward.6} parent=77 // pred_region
          %p1781 = scmp.lt.s32.totalorder %s24, 1
          %s1782 = scalar_select %p1781, %s24, 1
          %p1783 = scmp.lt.s32.totalorder %s25, 0
          %s1784 = scalar_select %p1783, %s25, 0
          %s1785 = sadd.s32 %s1784, %s1782
          %s1786 = smul.addr %s1785, 8
          %s1787 = scalar_lea.vmem %s3, %s1786
        $region86: #{block_residual_forward.6} parent=77 // pred_fallthru
          _
        // Predicated region
        $region87: #{block_residual_forward.6} parent=77 // pred_check
          %p1788 = pneg %p173
        $region88: #{block_residual_forward.6} parent=77 // pred_check_branch
          %1790 = sbr.rel (%p1788) target = $region90
        $region89: #{block_residual_forward.6} parent=77 // pred_region
          %p1791 = scmp.lt.s32.totalorder %s24, 1
          %s1792 = scalar_select %p1791, %s24, 1
          %p1793 = scmp.lt.s32.totalorder %s25, 0
          %s1794 = scalar_select %p1793, %s25, 0
          %s1795 = sadd.s32 %s1794, %s1792
          %s1796 = smul.addr %s1795, 8
          %s1797 = scalar_lea.vmem %s4, %s1796
        $region90: #{block_residual_forward.6} parent=77 // pred_fallthru
          _
      $region78: #{block_residual_forward.6} parent=5 // pred_fallthru
        _
    $region6: #{block_residual_forward.6} parent=1 // loop_footer
      %s15 = sadd.s32 1, %s11
    $region7: #{block_residual_forward.6} parent=1 // loop_footer_branch
      %10 = sbr.rel target = $region3
    $region8: #{block_residual_forward.6} parent=1 // loop_exit
      _

</llo_original>
